<compile_context>
chip_gen: v6e
topology: v6e:2x2x1
jax: 0.10.0
libtpu: 0.0.40
codegen_flags: <defaults>
</compile_context>

<pallas_src>
import functools

import jax
import jax.numpy as jnp
from jax import lax
from jax.experimental import pallas as pl
from jax.experimental.pallas import tpu as pltpu

_MXU_DTYPE = jnp.bfloat16
_VMEM_LIMIT = 32 * 1024 * 1024
_TILE_ROW_CAP = 512  # ~512-row tiles measured near HBM roofline


def _pick_tile(m, multiple=8, cap=_TILE_ROW_CAP):
    """Largest row-tile <= cap that divides m and is a multiple of `multiple`."""
    if m <= multiple:
        return m
    cap = min(cap, m)
    best = None
    t = multiple
    while t <= cap:
        if m % t == 0:
            best = t
        t += multiple
    return best if best is not None else m


# --------------------- generic tiled matmul + bias + act ---------------------
def _matmul_bias_act_kernel(x_ref, w_ref, b_ref, o_ref, *, act):
    y = jnp.dot(x_ref[...], w_ref[...], preferred_element_type=jnp.float32)
    y = y + b_ref[...]
    if act == "relu":
        y = jnp.maximum(y, 0.0)
    elif act == "sigmoid":
        y = jax.nn.sigmoid(y)
    o_ref[...] = y.astype(o_ref.dtype)


def _tiled_matmul_bias_act(x2d, w_mat, bias, *, act, out_dtype):
    M, K = x2d.shape
    _, N = w_mat.shape
    tm = _pick_tile(M)
    b2 = bias.astype(jnp.float32).reshape(1, N)
    return pl.pallas_call(
        functools.partial(_matmul_bias_act_kernel, act=act),
        out_shape=jax.ShapeDtypeStruct((M, N), out_dtype),
        grid_spec=pltpu.PrefetchScalarGridSpec(
            num_scalar_prefetch=0,
            grid=(M // tm,),
            in_specs=[
                pl.BlockSpec((tm, K), lambda i: (i, 0)),
                pl.BlockSpec((K, N), lambda i: (0, 0)),   # resident weights
                pl.BlockSpec((1, N), lambda i: (0, 0)),   # resident bias
            ],
            out_specs=pl.BlockSpec((tm, N), lambda i: (i, 0)),
        ),
        compiler_params=pltpu.CompilerParams(
            dimension_semantics=("parallel",),
            vmem_limit_bytes=_VMEM_LIMIT,
        ),
    )(x2d.astype(_MXU_DTYPE), w_mat.astype(_MXU_DTYPE), b2)


# ----------------------------- 3x3 conv (K-fused) ----------------------------
def _im2col_3x3(x_nhwc):
    """(B,H,W,C) -> (B,H,W,9*C) 'SAME' 3x3 patches, tap-major then channel."""
    # TODO(synk): form the shifted patches in-kernel (halo BlockSpec / manual
    # DMA) to avoid materializing the 9x-duplicated im2col buffer in HBM.
    B, H, W, C = x_nhwc.shape
    xp = jnp.pad(x_nhwc, ((0, 0), (1, 1), (1, 1), (0, 0)))
    return jnp.concatenate(
        [xp[:, ky:ky + H, kx:kx + W, :] for ky in range(3) for kx in range(3)],
        axis=-1)


def _conv_weight_matrix(w_oihw):
    """(Cout,Cin,3,3) -> (9*Cin, Cout), matching _im2col_3x3 ordering."""
    return jnp.transpose(w_oihw, (2, 3, 1, 0)).reshape(-1, w_oihw.shape[0])


def conv3x3(x_nhwc, w_oihw, bias, *, act, cout_pad=None, out_dtype=_MXU_DTYPE):
    """3x3, stride 1, padding 1 conv + activation. One matmul per M-tile."""
    x_nhwc = x_nhwc.astype(_MXU_DTYPE)
    B, H, W, Cin = x_nhwc.shape
    Cout = w_oihw.shape[0]
    if cout_pad is not None and cout_pad > Cout:
        w_oihw = jnp.pad(w_oihw, ((0, cout_pad - Cout), (0, 0), (0, 0), (0, 0)))
        bias = jnp.pad(bias, (0, cout_pad - Cout))
        Cout = cout_pad
    patches = _im2col_3x3(x_nhwc).reshape(B * H * W, 9 * Cin)
    w_mat = _conv_weight_matrix(w_oihw)
    out = _tiled_matmul_bias_act(patches, w_mat, bias, act=act, out_dtype=out_dtype)
    return out.reshape(B, H, W, Cout)


# ------------------- 3x3 conv + ReLU + 2x2 MaxPool (fused) -------------------
def _matmul_relu_maxpool_kernel(x_ref, w_ref, b_ref, o_ref, acc_ref):
    t = pl.program_id(1)  # 2x2 pooling offset (py*2 + px), reduction axis

    @pl.when(t == 0)
    def _():
        acc_ref[...] = jnp.zeros_like(acc_ref)   # ReLU output >= 0

    y = jnp.dot(x_ref[0], w_ref[...], preferred_element_type=jnp.float32)
    y = jnp.maximum(y + b_ref[...], 0.0)
    acc_ref[...] = jnp.maximum(acc_ref[...], y)

    @pl.when(t == pl.num_programs(1) - 1)
    def _():
        o_ref[...] = acc_ref[...].astype(o_ref.dtype)


def conv3x3_relu_maxpool2(x_nhwc, w_oihw, bias):
    """ReLU(Conv3x3(x)) followed by MaxPool2d(2), fused in one kernel.

    The im2col rows are regrouped by pooling offset: patches[t, mp, :] is the
    3x3 patch for output pixel (b, 2*yp+py, 2*xp+px), t = py*2+px. The kernel
    max-accumulates the four ReLU'd conv results per pooled pixel, so the
    full-resolution conv output never touches HBM.
    """
    x_nhwc = x_nhwc.astype(_MXU_DTYPE)
    B, H, W, Cin = x_nhwc.shape
    assert H % 2 == 0 and W % 2 == 0
    Cout = w_oihw.shape[0]
    K = 9 * Cin
    Mp = B * (H // 2) * (W // 2)

    patches = _im2col_3x3(x_nhwc)                                    # (B,H,W,K)
    patches = patches.reshape(B, H // 2, 2, W // 2, 2, K)
    patches = patches.transpose(2, 4, 0, 1, 3, 5).reshape(4, Mp, K)  # (4,Mp,K)
    w_mat = _conv_weight_matrix(w_oihw)
    b2 = bias.astype(jnp.float32).reshape(1, Cout)

    tm = _pick_tile(Mp)
    out = pl.pallas_call(
        _matmul_relu_maxpool_kernel,
        out_shape=jax.ShapeDtypeStruct((Mp, Cout), _MXU_DTYPE),
        grid_spec=pltpu.PrefetchScalarGridSpec(
            num_scalar_prefetch=0,
            grid=(Mp // tm, 4),
            in_specs=[
                pl.BlockSpec((1, tm, K), lambda i, t: (t, i, 0)),
                pl.BlockSpec((K, Cout), lambda i, t: (0, 0)),
                pl.BlockSpec((1, Cout), lambda i, t: (0, 0)),
            ],
            out_specs=pl.BlockSpec((tm, Cout), lambda i, t: (i, 0)),
            scratch_shapes=[pltpu.VMEM((tm, Cout), jnp.float32)],
        ),
        compiler_params=pltpu.CompilerParams(
            dimension_semantics=("parallel", "arbitrary"),
            vmem_limit_bytes=_VMEM_LIMIT,
        ),
    )(patches.astype(_MXU_DTYPE), w_mat.astype(_MXU_DTYPE), b2)
    return out.reshape(B, H // 2, W // 2, Cout)


# ------------------- ConvTranspose2d(k=2, s=2) + ReLU (N-fused) --------------
def deconv2x2_relu(x_nhwc, w_iohw, bias):
    """kernel=2, stride=2 transposed conv: 4 taps folded into the N dimension."""
    x_nhwc = x_nhwc.astype(_MXU_DTYPE)
    B, h, w, Ci = x_nhwc.shape
    Co = w_iohw.shape[1]
    M = B * h * w
    # (Ci, Co, 2, 2) -> (Ci, 4*Co) with column = (ky*2+kx)*Co + co
    w_mat = jnp.transpose(w_iohw, (0, 2, 3, 1)).reshape(Ci, 4 * Co)
    b4 = jnp.tile(bias, 4)
    out = _tiled_matmul_bias_act(x_nhwc.reshape(M, Ci), w_mat, b4,
                                 act="relu", out_dtype=_MXU_DTYPE)
    # interleave taps -> (B, 2h, 2w, Co)
    out = out.reshape(B, h, w, 2, 2, Co).transpose(0, 1, 3, 2, 4, 5)
    return out.reshape(B, 2 * h, 2 * w, Co)


# --------------------------------- full model --------------------------------
def init_params(key):
    ks = jax.random.split(key, 8)
    s = 0.05
    return dict(
        w1=jax.random.normal(ks[0], (64, 3, 3, 3), jnp.float32) * s,
        b1=jax.random.normal(ks[1], (64,), jnp.float32) * s,
        w2=jax.random.normal(ks[2], (128, 64, 3, 3), jnp.float32) * s,
        b2=jax.random.normal(ks[3], (128,), jnp.float32) * s,
        wd=jax.random.normal(ks[4], (128, 64, 2, 2), jnp.float32) * s,  # (in, out, kH, kW)
        bd=jax.random.normal(ks[5], (64,), jnp.float32) * s,
        w3=jax.random.normal(ks[6], (3, 64, 3, 3), jnp.float32) * s,
        b3=jax.random.normal(ks[7], (3,), jnp.float32) * s,
    )


@jax.jit
def video_frame_transformer(x_nchw, params):
    x = jnp.transpose(x_nchw, (0, 2, 3, 1))                         # NCHW -> NHWC
    y = conv3x3(x, params["w1"], params["b1"], act="relu")          # (B,H,W,64)  bf16
    y = conv3x3_relu_maxpool2(y, params["w2"], params["b2"])        # (B,H/2,W/2,128) bf16
    y = deconv2x2_relu(y, params["wd"], params["bd"])               # (B,H,W,64)  bf16
    y = conv3x3(y, params["w3"], params["b3"], act="sigmoid",
                cout_pad=128, out_dtype=jnp.float32)                # (B,H,W,128) f32
    y = y[..., :3]                                                  # drop lane padding
    return jnp.transpose(y, (0, 3, 1, 2))                           # NHWC -> NCHW


# --------------------------- plain-JAX reference check -----------------------
def reference_forward(x_nchw, p):
    """Reference mirroring the kernel's bf16-operand / f32-accumulate numerics."""
    bf, f32 = jnp.bfloat16, jnp.float32

    def q(a):  # round like the kernel's MXU operands
        return a.astype(bf).astype(f32)

    def conv(x, w, b):
        y = lax.conv_general_dilated(
            q(x), q(w), window_strides=(1, 1), padding="SAME",
            dimension_numbers=("NCHW", "OIHW", "NCHW"))
        return y + b[None, :, None, None]

    y = jnp.maximum(conv(x_nchw, p["w1"], p["b1"]), 0.0)
    y = jnp.maximum(conv(y, p["w2"], p["b2"]), 0.0)
    B, C, H, W = y.shape
    y = y.reshape(B, C, H // 2, 2, W // 2, 2).max(axis=(3, 5))
    t = jnp.einsum("bchw,cdkl->bdhkwl", q(y), q(p["wd"])).reshape(B, 64, H, W)
    z = jnp.maximum(t + p["bd"][None, :, None, None], 0.0)
    return jax.nn.sigmoid(conv(z, p["w3"], p["b3"]))


if __name__ == "__main__":
    key = jax.random.PRNGKey(0)
    pkey, xkey = jax.random.split(key)
    params = init_params(pkey)
    x = jax.random.normal(xkey, (2, 3, 16, 16), jnp.float32)   # (B, C=3, H, W)

    out = jax.block_until_ready(video_frame_transformer(x, params))
    ref = jax.block_until_ready(reference_forward(x, params))

    assert out.shape == (2, 3, 16, 16), out.shape
    assert out.dtype == jnp.float32
    max_err = float(jnp.max(jnp.abs(out - ref)))
    assert max_err < 2e-3, f"max abs error {max_err}"
    print("KERNEL_OK")
</pallas_src>

<mosaic_0001>
module attributes {stable_mosaic.version = 11 : i64} {
  func.func @_matmul_bias_act_kernel(%arg0: i32, %arg1: memref<512x27xbf16, #tpu.memory_space<vmem>>, %arg2: memref<27x64xbf16, #tpu.memory_space<vmem>>, %arg3: memref<1x64xf32, #tpu.memory_space<vmem>>, %arg4: memref<512x64xbf16, #tpu.memory_space<vmem>>) attributes {dimension_semantics = [#tpu.dimension_semantics<parallel>], iteration_bounds = array<i64: 1>, scalar_prefetch = 0 : i64, scratch_operands = 0 : i64, tpu.core_type = #tpu.core_type<tc>, window_params = [{transform_indices = @transform_0, window_bounds = array<i64: 512, 27>}, {pipeline_mode = #tpu.pipeline_mode<synchronous>, transform_indices = @transform_1, window_bounds = array<i64: 27, 64>}, {pipeline_mode = #tpu.pipeline_mode<synchronous>, transform_indices = @transform_2, window_bounds = array<i64: 1, 64>}, {transform_indices = @transform_3, window_bounds = array<i64: 512, 64>}]} {
    %c0 = arith.constant 0 : index
    %c0_0 = arith.constant 0 : index
    %0 = vector.load %arg1[%c0, %c0_0] : memref<512x27xbf16, #tpu.memory_space<vmem>>, vector<512x27xbf16>
    %c0_1 = arith.constant 0 : index
    %c0_2 = arith.constant 0 : index
    %1 = vector.load %arg2[%c0_1, %c0_2] : memref<27x64xbf16, #tpu.memory_space<vmem>>, vector<27x64xbf16>
    %cst = arith.constant dense<0.000000e+00> : vector<512x64xf32>
    %2 = tpu.matmul %0, %1, %cst {dimension_numbers = #tpu.dot_dimension_numbers<[1], [0], [0], [1], [0, 0, 1, 1], [], []>} : vector<512x27xbf16>, vector<27x64xbf16>, vector<512x64xf32> -> vector<512x64xf32>
    %c0_3 = arith.constant 0 : index
    %c0_4 = arith.constant 0 : index
    %3 = vector.load %arg3[%c0_3, %c0_4] : memref<1x64xf32, #tpu.memory_space<vmem>>, vector<1x64xf32>
    %4 = vector.broadcast %3 : vector<1x64xf32> to vector<512x64xf32>
    %5 = arith.addf %2, %4 : vector<512x64xf32>
    %cst_5 = arith.constant 0.000000e+00 : f32
    %6 = vector.broadcast %cst_5 : f32 to vector<512x64xf32>
    %7 = arith.maximumf %5, %6 : vector<512x64xf32>
    %8 = arith.truncf %7 : vector<512x64xf32> to vector<512x64xbf16>
    %c0_6 = arith.constant 0 : index
    %c0_7 = arith.constant 0 : index
    %9 = vector.load %arg4[%c0_6, %c0_7] : memref<512x64xbf16, #tpu.memory_space<vmem>>, vector<512x64xbf16>
    tpu.vector_store %arg4[%c0_6, %c0_7], %8 {strides = array<i32>} : memref<512x64xbf16, #tpu.memory_space<vmem>>, vector<512x64xbf16>,
    return
  }
  func.func @transform_0(%arg0: i32) -> (i32, i32) {
    %c0_i32 = arith.constant 0 : i32
    %c0_i32_0 = arith.constant 0 : i32
    return %arg0, %c0_i32 : i32, i32
  }
  func.func @transform_1(%arg0: i32) -> (i32, i32) {
    %c0_i32 = arith.constant 0 : i32
    %c0_i32_0 = arith.constant 0 : i32
    %c0_i32_1 = arith.constant 0 : i32
    return %c0_i32, %c0_i32_0 : i32, i32
  }
  func.func @transform_2(%arg0: i32) -> (i32, i32) {
    %c0_i32 = arith.constant 0 : i32
    %c0_i32_0 = arith.constant 0 : i32
    %c0_i32_1 = arith.constant 0 : i32
    return %c0_i32, %c0_i32_0 : i32, i32
  }
  func.func @transform_3(%arg0: i32) -> (i32, i32) {
    %c0_i32 = arith.constant 0 : i32
    %c0_i32_0 = arith.constant 0 : i32
    return %arg0, %c0_i32 : i32, i32
  }
}

module attributes {stable_mosaic.version = 11 : i64} {
  func.func @_matmul_relu_maxpool_kernel(%arg0: i32, %arg1: i32, %arg2: memref<1x128x576xbf16, #tpu.memory_space<vmem>>, %arg3: memref<576x128xbf16, #tpu.memory_space<vmem>>, %arg4: memref<1x128xf32, #tpu.memory_space<vmem>>, %arg5: memref<128x128xbf16, #tpu.memory_space<vmem>>, %arg6: memref<128x128xf32, #tpu.memory_space<vmem>>) attributes {dimension_semantics = [#tpu.dimension_semantics<parallel>, #tpu.dimension_semantics<arbitrary>], iteration_bounds = array<i64: 1, 4>, scalar_prefetch = 0 : i64, scratch_operands = 1 : i64, tpu.core_type = #tpu.core_type<tc>, window_params = [{transform_indices = @transform_0, window_bounds = array<i64: 1, 128, 576>}, {pipeline_mode = #tpu.pipeline_mode<synchronous>, transform_indices = @transform_1, window_bounds = array<i64: 576, 128>}, {pipeline_mode = #tpu.pipeline_mode<synchronous>, transform_indices = @transform_2, window_bounds = array<i64: 1, 128>}, {transform_indices = @transform_3, window_bounds = array<i64: 128, 128>}]} {
    %c0_i32 = arith.constant 0 : i32
    %0 = arith.cmpi eq, %arg1, %c0_i32 : i32
    %1 = arith.extui %0 : i1 to i32
    %c0_i32_0 = arith.constant 0 : i32
    %2 = arith.cmpi ne, %1, %c0_i32_0 : i32
    scf.if %2 {
      %cst_13 = arith.constant 0.000000e+00 : f32
      %18 = vector.broadcast %cst_13 : f32 to vector<128x128xf32>
      %c0_14 = arith.constant 0 : index
      %c0_15 = arith.constant 0 : index
      %19 = vector.load %arg6[%c0_14, %c0_15] : memref<128x128xf32, #tpu.memory_space<vmem>>, vector<128x128xf32>
      tpu.vector_store %arg6[%c0_14, %c0_15], %18 {strides = array<i32>} : memref<128x128xf32, #tpu.memory_space<vmem>>, vector<128x128xf32>,
    } else {
    }
    %c0 = arith.constant 0 : index
    %c0_1 = arith.constant 0 : index
    %c0_2 = arith.constant 0 : index
    %3 = vector.load %arg2[%c0, %c0_1, %c0_2] : memref<1x128x576xbf16, #tpu.memory_space<vmem>>, vector<1x128x576xbf16>
    %4 = vector.shape_cast %3 : vector<1x128x576xbf16> to vector<128x576xbf16>
    %c0_3 = arith.constant 0 : index
    %c0_4 = arith.constant 0 : index
    %5 = vector.load %arg3[%c0_3, %c0_4] : memref<576x128xbf16, #tpu.memory_space<vmem>>, vector<576x128xbf16>
    %cst = arith.constant dense<0.000000e+00> : vector<128x128xf32>
    %6 = tpu.matmul %4, %5, %cst {dimension_numbers = #tpu.dot_dimension_numbers<[1], [0], [0], [1], [0, 0, 1, 1], [], []>} : vector<128x576xbf16>, vector<576x128xbf16>, vector<128x128xf32> -> vector<128x128xf32>
    %c0_5 = arith.constant 0 : index
    %c0_6 = arith.constant 0 : index
    %7 = vector.load %arg4[%c0_5, %c0_6] : memref<1x128xf32, #tpu.memory_space<vmem>>, vector<1x128xf32>
    %8 = vector.broadcast %7 : vector<1x128xf32> to vector<128x128xf32>
    %9 = arith.addf %6, %8 : vector<128x128xf32>
    %cst_7 = arith.constant 0.000000e+00 : f32
    %10 = vector.broadcast %cst_7 : f32 to vector<128x128xf32>
    %11 = arith.maximumf %9, %10 : vector<128x128xf32>
    %c0_8 = arith.constant 0 : index
    %c0_9 = arith.constant 0 : index
    %12 = vector.load %arg6[%c0_8, %c0_9] : memref<128x128xf32, #tpu.memory_space<vmem>>, vector<128x128xf32>
    %13 = arith.maximumf %12, %11 : vector<128x128xf32>
    %c0_10 = arith.constant 0 : index
    %c0_11 = arith.constant 0 : index
    %14 = vector.load %arg6[%c0_10, %c0_11] : memref<128x128xf32, #tpu.memory_space<vmem>>, vector<128x128xf32>
    tpu.vector_store %arg6[%c0_10, %c0_11], %13 {strides = array<i32>} : memref<128x128xf32, #tpu.memory_space<vmem>>, vector<128x128xf32>,
    %c3_i32 = arith.constant 3 : i32
    %15 = arith.cmpi eq, %arg1, %c3_i32 : i32
    %16 = arith.extui %15 : i1 to i32
    %c0_i32_12 = arith.constant 0 : i32
    %17 = arith.cmpi ne, %16, %c0_i32_12 : i32
    scf.if %17 {
      %c0_13 = arith.constant 0 : index
      %c0_14 = arith.constant 0 : index
      %18 = vector.load %arg6[%c0_13, %c0_14] : memref<128x128xf32, #tpu.memory_space<vmem>>, vector<128x128xf32>
      %19 = arith.truncf %18 : vector<128x128xf32> to vector<128x128xbf16>
      %c0_15 = arith.constant 0 : index
      %c0_16 = arith.constant 0 : index
      %20 = vector.load %arg5[%c0_15, %c0_16] : memref<128x128xbf16, #tpu.memory_space<vmem>>, vector<128x128xbf16>
      tpu.vector_store %arg5[%c0_15, %c0_16], %19 {strides = array<i32>} : memref<128x128xbf16, #tpu.memory_space<vmem>>, vector<128x128xbf16>,
    } else {
    }
    return
  }
  func.func @transform_0(%arg0: i32, %arg1: i32) -> (i32, i32, i32) {
    %c0_i32 = arith.constant 0 : i32
    %c0_i32_0 = arith.constant 0 : i32
    return %arg1, %arg0, %c0_i32 : i32, i32, i32
  }
  func.func @transform_1(%arg0: i32, %arg1: i32) -> (i32, i32) {
    %c0_i32 = arith.constant 0 : i32
    %c0_i32_0 = arith.constant 0 : i32
    %c0_i32_1 = arith.constant 0 : i32
    return %c0_i32, %c0_i32_0 : i32, i32
  }
  func.func @transform_2(%arg0: i32, %arg1: i32) -> (i32, i32) {
    %c0_i32 = arith.constant 0 : i32
    %c0_i32_0 = arith.constant 0 : i32
    %c0_i32_1 = arith.constant 0 : i32
    return %c0_i32, %c0_i32_0 : i32, i32
  }
  func.func @transform_3(%arg0: i32, %arg1: i32) -> (i32, i32) {
    %c0_i32 = arith.constant 0 : i32
    %c0_i32_0 = arith.constant 0 : i32
    return %arg0, %c0_i32 : i32, i32
  }
}

module attributes {stable_mosaic.version = 11 : i64} {
  func.func @_matmul_bias_act_kernel(%arg0: i32, %arg1: memref<128x128xbf16, #tpu.memory_space<vmem>>, %arg2: memref<128x256xbf16, #tpu.memory_space<vmem>>, %arg3: memref<1x256xf32, #tpu.memory_space<vmem>>, %arg4: memref<128x256xbf16, #tpu.memory_space<vmem>>) attributes {dimension_semantics = [#tpu.dimension_semantics<parallel>], iteration_bounds = array<i64: 1>, scalar_prefetch = 0 : i64, scratch_operands = 0 : i64, tpu.core_type = #tpu.core_type<tc>, window_params = [{transform_indices = @transform_0, window_bounds = array<i64: 128, 128>}, {pipeline_mode = #tpu.pipeline_mode<synchronous>, transform_indices = @transform_1, window_bounds = array<i64: 128, 256>}, {pipeline_mode = #tpu.pipeline_mode<synchronous>, transform_indices = @transform_2, window_bounds = array<i64: 1, 256>}, {transform_indices = @transform_3, window_bounds = array<i64: 128, 256>}]} {
    %c0 = arith.constant 0 : index
    %c0_0 = arith.constant 0 : index
    %0 = vector.load %arg1[%c0, %c0_0] : memref<128x128xbf16, #tpu.memory_space<vmem>>, vector<128x128xbf16>
    %c0_1 = arith.constant 0 : index
    %c0_2 = arith.constant 0 : index
    %1 = vector.load %arg2[%c0_1, %c0_2] : memref<128x256xbf16, #tpu.memory_space<vmem>>, vector<128x256xbf16>
    %cst = arith.constant dense<0.000000e+00> : vector<128x256xf32>
    %2 = tpu.matmul %0, %1, %cst {dimension_numbers = #tpu.dot_dimension_numbers<[1], [0], [0], [1], [0, 0, 1, 1], [], []>} : vector<128x128xbf16>, vector<128x256xbf16>, vector<128x256xf32> -> vector<128x256xf32>
    %c0_3 = arith.constant 0 : index
    %c0_4 = arith.constant 0 : index
    %3 = vector.load %arg3[%c0_3, %c0_4] : memref<1x256xf32, #tpu.memory_space<vmem>>, vector<1x256xf32>
    %4 = vector.broadcast %3 : vector<1x256xf32> to vector<128x256xf32>
    %5 = arith.addf %2, %4 : vector<128x256xf32>
    %cst_5 = arith.constant 0.000000e+00 : f32
    %6 = vector.broadcast %cst_5 : f32 to vector<128x256xf32>
    %7 = arith.maximumf %5, %6 : vector<128x256xf32>
    %8 = arith.truncf %7 : vector<128x256xf32> to vector<128x256xbf16>
    %c0_6 = arith.constant 0 : index
    %c0_7 = arith.constant 0 : index
    %9 = vector.load %arg4[%c0_6, %c0_7] : memref<128x256xbf16, #tpu.memory_space<vmem>>, vector<128x256xbf16>
    tpu.vector_store %arg4[%c0_6, %c0_7], %8 {strides = array<i32>} : memref<128x256xbf16, #tpu.memory_space<vmem>>, vector<128x256xbf16>,
    return
  }
  func.func @transform_0(%arg0: i32) -> (i32, i32) {
    %c0_i32 = arith.constant 0 : i32
    %c0_i32_0 = arith.constant 0 : i32
    return %arg0, %c0_i32 : i32, i32
  }
  func.func @transform_1(%arg0: i32) -> (i32, i32) {
    %c0_i32 = arith.constant 0 : i32
    %c0_i32_0 = arith.constant 0 : i32
    %c0_i32_1 = arith.constant 0 : i32
    return %c0_i32, %c0_i32_0 : i32, i32
  }
  func.func @transform_2(%arg0: i32) -> (i32, i32) {
    %c0_i32 = arith.constant 0 : i32
    %c0_i32_0 = arith.constant 0 : i32
    %c0_i32_1 = arith.constant 0 : i32
    return %c0_i32, %c0_i32_0 : i32, i32
  }
  func.func @transform_3(%arg0: i32) -> (i32, i32) {
    %c0_i32 = arith.constant 0 : i32
    %c0_i32_0 = arith.constant 0 : i32
    return %arg0, %c0_i32 : i32, i32
  }
}

module attributes {stable_mosaic.version = 11 : i64} {
  func.func @_matmul_bias_act_kernel(%arg0: i32, %arg1: memref<512x576xbf16, #tpu.memory_space<vmem>>, %arg2: memref<576x128xbf16, #tpu.memory_space<vmem>>, %arg3: memref<1x128xf32, #tpu.memory_space<vmem>>, %arg4: memref<512x128xf32, #tpu.memory_space<vmem>>) attributes {dimension_semantics = [#tpu.dimension_semantics<parallel>], iteration_bounds = array<i64: 1>, scalar_prefetch = 0 : i64, scratch_operands = 0 : i64, tpu.core_type = #tpu.core_type<tc>, window_params = [{transform_indices = @transform_0, window_bounds = array<i64: 512, 576>}, {pipeline_mode = #tpu.pipeline_mode<synchronous>, transform_indices = @transform_1, window_bounds = array<i64: 576, 128>}, {pipeline_mode = #tpu.pipeline_mode<synchronous>, transform_indices = @transform_2, window_bounds = array<i64: 1, 128>}, {transform_indices = @transform_3, window_bounds = array<i64: 512, 128>}]} {
    %c0 = arith.constant 0 : index
    %c0_0 = arith.constant 0 : index
    %0 = vector.load %arg1[%c0, %c0_0] : memref<512x576xbf16, #tpu.memory_space<vmem>>, vector<512x576xbf16>
    %c0_1 = arith.constant 0 : index
    %c0_2 = arith.constant 0 : index
    %1 = vector.load %arg2[%c0_1, %c0_2] : memref<576x128xbf16, #tpu.memory_space<vmem>>, vector<576x128xbf16>
    %cst = arith.constant dense<0.000000e+00> : vector<512x128xf32>
    %2 = tpu.matmul %0, %1, %cst {dimension_numbers = #tpu.dot_dimension_numbers<[1], [0], [0], [1], [0, 0, 1, 1], [], []>} : vector<512x576xbf16>, vector<576x128xbf16>, vector<512x128xf32> -> vector<512x128xf32>
    %c0_3 = arith.constant 0 : index
    %c0_4 = arith.constant 0 : index
    %3 = vector.load %arg3[%c0_3, %c0_4] : memref<1x128xf32, #tpu.memory_space<vmem>>, vector<1x128xf32>
    %4 = vector.broadcast %3 : vector<1x128xf32> to vector<512x128xf32>
    %5 = arith.addf %2, %4 : vector<512x128xf32>
    %6 = arith.negf %5 : vector<512x128xf32>
    %7 = math.exp %6 : vector<512x128xf32>
    %cst_5 = arith.constant 1.000000e+00 : f32
    %8 = vector.broadcast %cst_5 : f32 to vector<512x128xf32>
    %9 = arith.addf %8, %7 : vector<512x128xf32>
    %10 = arith.divf %8, %9 : vector<512x128xf32>
    %c0_6 = arith.constant 0 : index
    %c0_7 = arith.constant 0 : index
    %11 = vector.load %arg4[%c0_6, %c0_7] : memref<512x128xf32, #tpu.memory_space<vmem>>, vector<512x128xf32>
    tpu.vector_store %arg4[%c0_6, %c0_7], %10 {strides = array<i32>} : memref<512x128xf32, #tpu.memory_space<vmem>>, vector<512x128xf32>,
    return
  }
  func.func @transform_0(%arg0: i32) -> (i32, i32) {
    %c0_i32 = arith.constant 0 : i32
    %c0_i32_0 = arith.constant 0 : i32
    return %arg0, %c0_i32 : i32, i32
  }
  func.func @transform_1(%arg0: i32) -> (i32, i32) {
    %c0_i32 = arith.constant 0 : i32
    %c0_i32_0 = arith.constant 0 : i32
    %c0_i32_1 = arith.constant 0 : i32
    return %c0_i32, %c0_i32_0 : i32, i32
  }
  func.func @transform_2(%arg0: i32) -> (i32, i32) {
    %c0_i32 = arith.constant 0 : i32
    %c0_i32_0 = arith.constant 0 : i32
    %c0_i32_1 = arith.constant 0 : i32
    return %c0_i32, %c0_i32_0 : i32, i32
  }
  func.func @transform_3(%arg0: i32) -> (i32, i32) {
    %c0_i32 = arith.constant 0 : i32
    %c0_i32_0 = arith.constant 0 : i32
    return %arg0, %c0_i32 : i32, i32
  }
}

</mosaic_0001>

<llo_original>
// kernel: video_frame_transformer.4
$region0: #{video_frame_transformer.4}
  #allocation0 [shape = 'u32[]', space=smem, size = 0x4, offset = 0x4, fixed_abs, tag = 'smem constant byte address 0x4 - core index']
  #allocation1 [shape = 'u32[144,128]{1,0:T(1,128)}', space=vmem, size = 0x12000, scoped, tag = 'internal scratch']
  %s0 = inlined_call_operand.vmem [shape: bf16[512,27], index: 0, kind: input, shape index: {}]
  %s1 = inlined_call_operand.vmem [shape: bf16[27,64], index: 1, kind: input, shape index: {}]
  %s2 = inlined_call_operand.vmem [shape: f32[1,64], index: 2, kind: input, shape index: {}]
  %s3 = inlined_call_operand.vmem [shape: bf16[512,64], index: 3, kind: output, shape index: {}]
  %s4 = sld [smem:[#allocation0]]
  $region22: #{video_frame_transformer.4} parent=0
    _
  %s6 = ssub.s32 1, %s4
  %s7 = scalar_select 0, %s6, %s4
  // Predicated region
  $region2: #{video_frame_transformer.4} parent=0 // pred_check
    _
  $region3: #{video_frame_transformer.4} parent=0 // pred_check_branch
    %9 = sbr.rel (0) target = $region5
  $region4: #{video_frame_transformer.4} parent=0 // pred_region
    _
  $region5: #{video_frame_transformer.4} parent=0 // pred_fallthru
    _
  // Predicated region
  $region6: #{video_frame_transformer.4} parent=0 // pred_check
    _
  $region7: #{video_frame_transformer.4} parent=0 // pred_check_branch
    %11 = sbr.rel (0) target = $region9
  $region8: #{video_frame_transformer.4} parent=0 // pred_region
    _
  $region9: #{video_frame_transformer.4} parent=0 // pred_fallthru
    _
  // Predicated region
  $region10: #{video_frame_transformer.4} parent=0 // pred_check
    _
  $region11: #{video_frame_transformer.4} parent=0 // pred_check_branch
    %13 = sbr.rel (0) target = $region13
  $region12: #{video_frame_transformer.4} parent=0 // pred_region
    _
  $region13: #{video_frame_transformer.4} parent=0 // pred_fallthru
    _
  %v15 = vld [vmem:[%s0] sm:$0xf]
  %v16 = vld [vmem:[%s0 + $0x4] sm:$0xf]
  %v17 = vld [vmem:[%s0 + $0x8] sm:$0xf]
  %v18 = vld [vmem:[%s0 + $0xc] sm:$0xf]
  %v19 = vld [vmem:[%s0 + $0x10] sm:$0xf]
  %v20 = vld [vmem:[%s0 + $0x14] sm:$0xf]
  %v21 = vld [vmem:[%s0 + $0x18] sm:$0xf]
  %v22 = vld [vmem:[%s0 + $0x1c] sm:$0xf]
  %v23 = vld [vmem:[%s0 + $0x20] sm:$0xf]
  %v24 = vld [vmem:[%s0 + $0x24] sm:$0xf]
  %v25 = vld [vmem:[%s0 + $0x28] sm:$0xf]
  %v26 = vld [vmem:[%s0 + $0x2c] sm:$0xf]
  %v27 = vld [vmem:[%s0 + $0x30] sm:$0xf]
  %v28 = vld [vmem:[%s0 + $0x34] sm:$0xf]
  %v29 = vld [vmem:[%s0 + $0x38] sm:$0xf]
  %v30 = vld [vmem:[%s0 + $0x3c] sm:$0xf]
  %v31 = vld [vmem:[%s0 + $0x40] sm:$0xf]
  %v32 = vld [vmem:[%s0 + $0x44] sm:$0xf]
  %v33 = vld [vmem:[%s0 + $0x48] sm:$0xf]
  %v34 = vld [vmem:[%s0 + $0x4c] sm:$0xf]
  %v35 = vld [vmem:[%s0 + $0x50] sm:$0xf]
  %v36 = vld [vmem:[%s0 + $0x54] sm:$0xf]
  %v37 = vld [vmem:[%s0 + $0x58] sm:$0xf]
  %v38 = vld [vmem:[%s0 + $0x5c] sm:$0xf]
  %v39 = vld [vmem:[%s0 + $0x60] sm:$0xf]
  %v40 = vld [vmem:[%s0 + $0x64] sm:$0xf]
  %v41 = vld [vmem:[%s0 + $0x68] sm:$0xf]
  %v42 = vld [vmem:[%s0 + $0x6c] sm:$0xf]
  %v43 = vld [vmem:[%s0 + $0x70] sm:$0xf]
  %v44 = vld [vmem:[%s0 + $0x74] sm:$0xf]
  %v45 = vld [vmem:[%s0 + $0x78] sm:$0xf]
  %v46 = vld [vmem:[%s0 + $0x7c] sm:$0xf]
  %v47 = vld [vmem:[%s0 + $0x80] sm:$0xf]
  %v48 = vld [vmem:[%s0 + $0x84] sm:$0xf]
  %v49 = vld [vmem:[%s0 + $0x88] sm:$0xf]
  %v50 = vld [vmem:[%s0 + $0x8c] sm:$0xf]
  %v51 = vld [vmem:[%s0 + $0x90] sm:$0xf]
  %v52 = vld [vmem:[%s0 + $0x94] sm:$0xf]
  %v53 = vld [vmem:[%s0 + $0x98] sm:$0xf]
  %v54 = vld [vmem:[%s0 + $0x9c] sm:$0xf]
  %v55 = vld [vmem:[%s0 + $0xa0] sm:$0xf]
  %v56 = vld [vmem:[%s0 + $0xa4] sm:$0xf]
  %v57 = vld [vmem:[%s0 + $0xa8] sm:$0xf]
  %v58 = vld [vmem:[%s0 + $0xac] sm:$0xf]
  %v59 = vld [vmem:[%s0 + $0xb0] sm:$0xf]
  %v60 = vld [vmem:[%s0 + $0xb4] sm:$0xf]
  %v61 = vld [vmem:[%s0 + $0xb8] sm:$0xf]
  %v62 = vld [vmem:[%s0 + $0xbc] sm:$0xf]
  %v63 = vld [vmem:[%s0 + $0xc0] sm:$0xf]
  %v64 = vld [vmem:[%s0 + $0xc4] sm:$0xf]
  %v65 = vld [vmem:[%s0 + $0xc8] sm:$0xf]
  %v66 = vld [vmem:[%s0 + $0xcc] sm:$0xf]
  %v67 = vld [vmem:[%s0 + $0xd0] sm:$0xf]
  %v68 = vld [vmem:[%s0 + $0xd4] sm:$0xf]
  %v69 = vld [vmem:[%s0 + $0xd8] sm:$0xf]
  %v70 = vld [vmem:[%s0 + $0xdc] sm:$0xf]
  %v71 = vld [vmem:[%s0 + $0xe0] sm:$0xf]
  %v72 = vld [vmem:[%s0 + $0xe4] sm:$0xf]
  %v73 = vld [vmem:[%s0 + $0xe8] sm:$0xf]
  %v74 = vld [vmem:[%s0 + $0xec] sm:$0xf]
  %v75 = vld [vmem:[%s0 + $0xf0] sm:$0xf]
  %v76 = vld [vmem:[%s0 + $0xf4] sm:$0xf]
  %v77 = vld [vmem:[%s0 + $0xf8] sm:$0xf]
  %v78 = vld [vmem:[%s0 + $0xfc] sm:$0xf]
  %v79 = vld [vmem:[%s1] sm:$0xf]
  %v80 = vld [vmem:[%s1 + $0x4] sm:$0xf]
  %v81 = vld [vmem:[%s1 + $0x8] sm:$0xf]
  %v82 = vld [vmem:[%s1 + $0xc] sm:$0x3]
  %v83 = vld [vmem:[%s2] sm:$0x1]
  %v85 = vlaneseq
  %v86 = vshrl.u32 %v85, 7
  %v87 = vsub.s32 0, %v86
  %v88 = vrot.slane %v83, %v87
  %v154 = vunpack.c.l.b16 %v15
  %v155 = vunpack.c.l.b16 %v16
  %v156 = vunpack.c.l.b16 %v17
  %v157 = vunpack.c.l.b16 %v18
  %v158 = vunpack.c.l.b16 %v19
  %v159 = vunpack.c.l.b16 %v20
  %v160 = vunpack.c.l.b16 %v21
  %v161 = vunpack.c.l.b16 %v22
  %v162 = vunpack.c.l.b16 %v23
  %v163 = vunpack.c.l.b16 %v24
  %v164 = vunpack.c.l.b16 %v25
  %v165 = vunpack.c.l.b16 %v26
  %v166 = vunpack.c.l.b16 %v27
  %v167 = vunpack.c.l.b16 %v28
  %v168 = vunpack.c.l.b16 %v29
  %v169 = vunpack.c.l.b16 %v30
  %v170 = vunpack.c.l.b16 %v31
  %v171 = vunpack.c.l.b16 %v32
  %v172 = vunpack.c.l.b16 %v33
  %v173 = vunpack.c.l.b16 %v34
  %v174 = vunpack.c.l.b16 %v35
  %v175 = vunpack.c.l.b16 %v36
  %v176 = vunpack.c.l.b16 %v37
  %v177 = vunpack.c.l.b16 %v38
  %v178 = vunpack.c.l.b16 %v39
  %v179 = vunpack.c.l.b16 %v40
  %v180 = vunpack.c.l.b16 %v41
  %v181 = vunpack.c.l.b16 %v42
  %v182 = vunpack.c.l.b16 %v43
  %v183 = vunpack.c.l.b16 %v44
  %v184 = vunpack.c.l.b16 %v45
  %v185 = vunpack.c.l.b16 %v46
  %v186 = vunpack.c.l.b16 %v47
  %v187 = vunpack.c.l.b16 %v48
  %v188 = vunpack.c.l.b16 %v49
  %v189 = vunpack.c.l.b16 %v50
  %v190 = vunpack.c.l.b16 %v51
  %v191 = vunpack.c.l.b16 %v52
  %v192 = vunpack.c.l.b16 %v53
  %v193 = vunpack.c.l.b16 %v54
  %v194 = vunpack.c.l.b16 %v55
  %v195 = vunpack.c.l.b16 %v56
  %v196 = vunpack.c.l.b16 %v57
  %v197 = vunpack.c.l.b16 %v58
  %v198 = vunpack.c.l.b16 %v59
  %v199 = vunpack.c.l.b16 %v60
  %v200 = vunpack.c.l.b16 %v61
  %v201 = vunpack.c.l.b16 %v62
  %v202 = vunpack.c.l.b16 %v63
  %v203 = vunpack.c.l.b16 %v64
  %v204 = vunpack.c.l.b16 %v65
  %v205 = vunpack.c.l.b16 %v66
  %v206 = vunpack.c.l.b16 %v67
  %v207 = vunpack.c.l.b16 %v68
  %v208 = vunpack.c.l.b16 %v69
  %v209 = vunpack.c.l.b16 %v70
  %v210 = vunpack.c.l.b16 %v71
  %v211 = vunpack.c.l.b16 %v72
  %v212 = vunpack.c.l.b16 %v73
  %v213 = vunpack.c.l.b16 %v74
  %v214 = vunpack.c.l.b16 %v75
  %v215 = vunpack.c.l.b16 %v76
  %v216 = vunpack.c.l.b16 %v77
  %v217 = vunpack.c.l.b16 %v78
  %v218 = vpack.c.b16 %v155, %v154
  %v219 = vpack.c.b16 %v157, %v156
  %v220 = vpack.c.b16 %v159, %v158
  %v221 = vpack.c.b16 %v161, %v160
  %v222 = vpack.c.b16 %v163, %v162
  %v223 = vpack.c.b16 %v165, %v164
  %v224 = vpack.c.b16 %v167, %v166
  %v225 = vpack.c.b16 %v169, %v168
  %v226 = vpack.c.b16 %v171, %v170
  %v227 = vpack.c.b16 %v173, %v172
  %v228 = vpack.c.b16 %v175, %v174
  %v229 = vpack.c.b16 %v177, %v176
  %v230 = vpack.c.b16 %v179, %v178
  %v231 = vpack.c.b16 %v181, %v180
  %v232 = vpack.c.b16 %v183, %v182
  %v233 = vpack.c.b16 %v185, %v184
  %v234 = vpack.c.b16 %v187, %v186
  %v235 = vpack.c.b16 %v189, %v188
  %v236 = vpack.c.b16 %v191, %v190
  %v237 = vpack.c.b16 %v193, %v192
  %v238 = vpack.c.b16 %v195, %v194
  %v239 = vpack.c.b16 %v197, %v196
  %v240 = vpack.c.b16 %v199, %v198
  %v241 = vpack.c.b16 %v201, %v200
  %v242 = vpack.c.b16 %v203, %v202
  %v243 = vpack.c.b16 %v205, %v204
  %v244 = vpack.c.b16 %v207, %v206
  %v245 = vpack.c.b16 %v209, %v208
  %v246 = vpack.c.b16 %v211, %v210
  %v247 = vpack.c.b16 %v213, %v212
  %v248 = vpack.c.b16 %v215, %v214
  %v249 = vpack.c.b16 %v217, %v216
  %v254 = vunpack.c.l.b16 %v79
  %v255 = vunpack.c.l.b16 %v80
  %v256 = vunpack.c.l.b16 %v81
  %v257 = vunpack.c.l.b16 %v82
  %v258 = vpack.c.b16 %v255, %v254
  %v259 = vpack.c.b16 %v257, %v256
  %vm261 = vcmask 220160
  %v263 = vsel %vm261, %v218, 0
  %v266 = vsel %vm261, %v219, 0
  %v269 = vsel %vm261, %v220, 0
  %v272 = vsel %vm261, %v221, 0
  %v275 = vsel %vm261, %v222, 0
  %v278 = vsel %vm261, %v223, 0
  %v281 = vsel %vm261, %v224, 0
  %v284 = vsel %vm261, %v225, 0
  %v287 = vsel %vm261, %v226, 0
  %v290 = vsel %vm261, %v227, 0
  %v293 = vsel %vm261, %v228, 0
  %v296 = vsel %vm261, %v229, 0
  %v299 = vsel %vm261, %v230, 0
  %v302 = vsel %vm261, %v231, 0
  %v305 = vsel %vm261, %v232, 0
  %v308 = vsel %vm261, %v233, 0
  %v311 = vsel %vm261, %v234, 0
  %v314 = vsel %vm261, %v235, 0
  %v317 = vsel %vm261, %v236, 0
  %v320 = vsel %vm261, %v237, 0
  %v323 = vsel %vm261, %v238, 0
  %v326 = vsel %vm261, %v239, 0
  %v329 = vsel %vm261, %v240, 0
  %v332 = vsel %vm261, %v241, 0
  %v335 = vsel %vm261, %v242, 0
  %v338 = vsel %vm261, %v243, 0
  %v341 = vsel %vm261, %v244, 0
  %v344 = vsel %vm261, %v245, 0
  %v347 = vsel %vm261, %v246, 0
  %v350 = vsel %vm261, %v247, 0
  %v353 = vsel %vm261, %v248, 0
  %v356 = vsel %vm261, %v249, 0
  %vm358 = vcmask 1044480
  %vm359 = vcmask 1045504
  %v360 = vsel %vm358, 4294967295, 65535
  %v361 = vsel %vm359, %v360, 0
  %v363 = vand.u32 %v259, %v361
  %365 = vmatprep.subr.bf16.mxu0 0
  %366 = vmatpush1.bf16.msra.mxu0 0
  %367 = vmatprep.subr.bf16.mxu0 0
  %368 = vmatpush1.bf16.msra.mxu0 0
  %369 = vmatprep.subr.bf16.mxu0 0
  %370 = vmatpush1.bf16.msra.mxu0 0
  %371 = vmatprep.subr.bf16.mxu0 0
  %372 = vmatpush1.bf16.msra.mxu0 0
  %373 = vmatprep.subr.bf16.mxu0 0
  %374 = vmatpush1.bf16.msra.mxu0 0
  %375 = vmatprep.subr.bf16.mxu0 0
  %376 = vmatpush1.bf16.msra.mxu0 0
  %377 = vmatprep.subr.bf16.mxu0 0
  %378 = vmatpush1.bf16.msra.mxu0 %v363
  %379 = vmatprep.subr.bf16.mxu0 0
  %380 = vmatpush1.bf16.msra.mxu0 %v258
  %381 = vmatprep.subr.bf16.mxu0 0
  %382 = vmatpush2.bf16.msra.mxu0 0
  %383 = vmatprep.subr.bf16.mxu0 0
  %384 = vmatpush2.bf16.msra.mxu0 0
  %385 = vmatprep.subr.bf16.mxu0 0
  %386 = vmatpush2.bf16.msra.mxu0 0
  %387 = vmatprep.subr.bf16.mxu0 0
  %388 = vmatpush2.bf16.msra.mxu0 0
  %389 = vmatprep.subr.bf16.mxu0 0
  %390 = vmatpush2.bf16.msra.mxu0 0
  %391 = vmatprep.subr.bf16.mxu0 0
  %392 = vmatpush2.bf16.msra.mxu0 0
  %393 = vmatprep.subr.bf16.mxu0 0
  %394 = vmatpush2.bf16.msra.mxu0 0
  %395 = vmatprep.subr.bf16.mxu0 0
  %396 = vmatpush2.bf16.msra.mxu0 0
  %397 = vmatprep.mubr.bf16.mxu0 0
  %398 = vmatmul.mubr.bf16.gmra.mxu0 %v263
  %v399 = vpop.f32.mrf.mxu0
  %v400 = vadd.f32 %v88, %v399
  %v401 = vpop.f32.mrf.mxu0
  %v402 = vpop.f32.mrf.mxu0
  %v403 = vadd.f32 %v88, %v402
  %v404 = vpop.f32.mrf.mxu0
  %405 = vmatprep.mubr.bf16.mxu0 0
  %406 = vmatmul.mubr.bf16.gmra.mxu0 %v266
  %v407 = vpop.f32.mrf.mxu0
  %v408 = vadd.f32 %v88, %v407
  %v409 = vpop.f32.mrf.mxu0
  %v410 = vpop.f32.mrf.mxu0
  %v411 = vadd.f32 %v88, %v410
  %v412 = vpop.f32.mrf.mxu0
  %413 = vmatprep.mubr.bf16.mxu0 0
  %414 = vmatmul.mubr.bf16.gmra.mxu0 %v269
  %v415 = vpop.f32.mrf.mxu0
  %v416 = vadd.f32 %v88, %v415
  %v417 = vpop.f32.mrf.mxu0
  %v418 = vpop.f32.mrf.mxu0
  %v419 = vadd.f32 %v88, %v418
  %v420 = vpop.f32.mrf.mxu0
  %421 = vmatprep.mubr.bf16.mxu0 0
  %422 = vmatmul.mubr.bf16.gmra.mxu0 %v272
  %v423 = vpop.f32.mrf.mxu0
  %v424 = vadd.f32 %v88, %v423
  %v425 = vpop.f32.mrf.mxu0
  %v426 = vpop.f32.mrf.mxu0
  %v427 = vadd.f32 %v88, %v426
  %v428 = vpop.f32.mrf.mxu0
  %429 = vmatprep.mubr.bf16.mxu0 0
  %430 = vmatmul.mubr.bf16.gmra.mxu0 %v275
  %v431 = vpop.f32.mrf.mxu0
  %v432 = vadd.f32 %v88, %v431
  %v433 = vpop.f32.mrf.mxu0
  %v434 = vpop.f32.mrf.mxu0
  %v435 = vadd.f32 %v88, %v434
  %v436 = vpop.f32.mrf.mxu0
  %437 = vmatprep.mubr.bf16.mxu0 0
  %438 = vmatmul.mubr.bf16.gmra.mxu0 %v278
  %v439 = vpop.f32.mrf.mxu0
  %v440 = vadd.f32 %v88, %v439
  %v441 = vpop.f32.mrf.mxu0
  %v442 = vpop.f32.mrf.mxu0
  %v443 = vadd.f32 %v88, %v442
  %v444 = vpop.f32.mrf.mxu0
  %445 = vmatprep.mubr.bf16.mxu0 0
  %446 = vmatmul.mubr.bf16.gmra.mxu0 %v281
  %v447 = vpop.f32.mrf.mxu0
  %v448 = vadd.f32 %v88, %v447
  %v449 = vpop.f32.mrf.mxu0
  %v450 = vpop.f32.mrf.mxu0
  %v451 = vadd.f32 %v88, %v450
  %v452 = vpop.f32.mrf.mxu0
  %453 = vmatprep.mubr.bf16.mxu0 0
  %454 = vmatmul.mubr.bf16.gmra.mxu0 %v284
  %v455 = vpop.f32.mrf.mxu0
  %v456 = vadd.f32 %v88, %v455
  %v457 = vpop.f32.mrf.mxu0
  %v458 = vpop.f32.mrf.mxu0
  %v459 = vadd.f32 %v88, %v458
  %v460 = vpop.f32.mrf.mxu0
  %461 = vmatprep.mubr.bf16.mxu0 0
  %462 = vmatmul.mubr.bf16.gmra.mxu0 %v287
  %v463 = vpop.f32.mrf.mxu0
  %v464 = vadd.f32 %v88, %v463
  %v465 = vpop.f32.mrf.mxu0
  %v466 = vpop.f32.mrf.mxu0
  %v467 = vadd.f32 %v88, %v466
  %v468 = vpop.f32.mrf.mxu0
  %469 = vmatprep.mubr.bf16.mxu0 0
  %470 = vmatmul.mubr.bf16.gmra.mxu0 %v290
  %v471 = vpop.f32.mrf.mxu0
  %v472 = vadd.f32 %v88, %v471
  %v473 = vpop.f32.mrf.mxu0
  %v474 = vpop.f32.mrf.mxu0
  %v475 = vadd.f32 %v88, %v474
  %v476 = vpop.f32.mrf.mxu0
  %477 = vmatprep.mubr.bf16.mxu0 0
  %478 = vmatmul.mubr.bf16.gmra.mxu0 %v293
  %v479 = vpop.f32.mrf.mxu0
  %v480 = vadd.f32 %v88, %v479
  %v481 = vpop.f32.mrf.mxu0
  %v482 = vpop.f32.mrf.mxu0
  %v483 = vadd.f32 %v88, %v482
  %v484 = vpop.f32.mrf.mxu0
  %485 = vmatprep.mubr.bf16.mxu0 0
  %486 = vmatmul.mubr.bf16.gmra.mxu0 %v296
  %v487 = vpop.f32.mrf.mxu0
  %v488 = vadd.f32 %v88, %v487
  %v489 = vpop.f32.mrf.mxu0
  %v490 = vpop.f32.mrf.mxu0
  %v491 = vadd.f32 %v88, %v490
  %v492 = vpop.f32.mrf.mxu0
  %493 = vmatprep.mubr.bf16.mxu0 0
  %494 = vmatmul.mubr.bf16.gmra.mxu0 %v299
  %v495 = vpop.f32.mrf.mxu0
  %v496 = vadd.f32 %v88, %v495
  %v497 = vpop.f32.mrf.mxu0
  %v498 = vpop.f32.mrf.mxu0
  %v499 = vadd.f32 %v88, %v498
  %v500 = vpop.f32.mrf.mxu0
  %501 = vmatprep.mubr.bf16.mxu0 0
  %502 = vmatmul.mubr.bf16.gmra.mxu0 %v302
  %v503 = vpop.f32.mrf.mxu0
  %v504 = vadd.f32 %v88, %v503
  %v505 = vpop.f32.mrf.mxu0
  %v506 = vpop.f32.mrf.mxu0
  %v507 = vadd.f32 %v88, %v506
  %v508 = vpop.f32.mrf.mxu0
  %509 = vmatprep.mubr.bf16.mxu0 0
  %510 = vmatmul.mubr.bf16.gmra.mxu0 %v305
  %v511 = vpop.f32.mrf.mxu0
  %v512 = vadd.f32 %v88, %v511
  %v513 = vpop.f32.mrf.mxu0
  %v514 = vpop.f32.mrf.mxu0
  %v515 = vadd.f32 %v88, %v514
  %v516 = vpop.f32.mrf.mxu0
  %517 = vmatprep.mubr.bf16.mxu0 0
  %518 = vmatmul.mubr.bf16.gmra.mxu0 %v308
  %v519 = vpop.f32.mrf.mxu0
  %v520 = vadd.f32 %v88, %v519
  %v521 = vpop.f32.mrf.mxu0
  %v522 = vpop.f32.mrf.mxu0
  %v523 = vadd.f32 %v88, %v522
  %v524 = vpop.f32.mrf.mxu0
  %525 = vmatprep.mubr.bf16.mxu0 0
  %526 = vmatmul.mubr.bf16.gmra.mxu0 %v311
  %v527 = vpop.f32.mrf.mxu0
  %v528 = vadd.f32 %v88, %v527
  %v529 = vpop.f32.mrf.mxu0
  %v530 = vpop.f32.mrf.mxu0
  %v531 = vadd.f32 %v88, %v530
  %v532 = vpop.f32.mrf.mxu0
  %533 = vmatprep.mubr.bf16.mxu0 0
  %534 = vmatmul.mubr.bf16.gmra.mxu0 %v314
  %v535 = vpop.f32.mrf.mxu0
  %v536 = vadd.f32 %v88, %v535
  %v537 = vpop.f32.mrf.mxu0
  %v538 = vpop.f32.mrf.mxu0
  %v539 = vadd.f32 %v88, %v538
  %v540 = vpop.f32.mrf.mxu0
  %541 = vmatprep.mubr.bf16.mxu0 0
  %542 = vmatmul.mubr.bf16.gmra.mxu0 %v317
  %v543 = vpop.f32.mrf.mxu0
  %v544 = vadd.f32 %v88, %v543
  %v545 = vpop.f32.mrf.mxu0
  %v546 = vpop.f32.mrf.mxu0
  %v547 = vadd.f32 %v88, %v546
  %v548 = vpop.f32.mrf.mxu0
  %549 = vmatprep.mubr.bf16.mxu0 0
  %550 = vmatmul.mubr.bf16.gmra.mxu0 %v320
  %v551 = vpop.f32.mrf.mxu0
  %v552 = vadd.f32 %v88, %v551
  %v553 = vpop.f32.mrf.mxu0
  %v554 = vpop.f32.mrf.mxu0
  %v555 = vadd.f32 %v88, %v554
  %v556 = vpop.f32.mrf.mxu0
  %557 = vmatprep.mubr.bf16.mxu0 0
  %558 = vmatmul.mubr.bf16.gmra.mxu0 %v323
  %v559 = vpop.f32.mrf.mxu0
  %v560 = vadd.f32 %v88, %v559
  %v561 = vpop.f32.mrf.mxu0
  %v562 = vpop.f32.mrf.mxu0
  %v563 = vadd.f32 %v88, %v562
  %v564 = vpop.f32.mrf.mxu0
  %565 = vmatprep.mubr.bf16.mxu0 0
  %566 = vmatmul.mubr.bf16.gmra.mxu0 %v326
  %v567 = vpop.f32.mrf.mxu0
  %v568 = vadd.f32 %v88, %v567
  %v569 = vpop.f32.mrf.mxu0
  %v570 = vpop.f32.mrf.mxu0
  %v571 = vadd.f32 %v88, %v570
  %v572 = vpop.f32.mrf.mxu0
  %573 = vmatprep.mubr.bf16.mxu0 0
  %574 = vmatmul.mubr.bf16.gmra.mxu0 %v329
  %v575 = vpop.f32.mrf.mxu0
  %v576 = vadd.f32 %v88, %v575
  %v577 = vpop.f32.mrf.mxu0
  %v578 = vpop.f32.mrf.mxu0
  %v579 = vadd.f32 %v88, %v578
  %v580 = vpop.f32.mrf.mxu0
  %581 = vmatprep.mubr.bf16.mxu0 0
  %582 = vmatmul.mubr.bf16.gmra.mxu0 %v332
  %v583 = vpop.f32.mrf.mxu0
  %v584 = vadd.f32 %v88, %v583
  %v585 = vpop.f32.mrf.mxu0
  %v586 = vpop.f32.mrf.mxu0
  %v587 = vadd.f32 %v88, %v586
  %v588 = vpop.f32.mrf.mxu0
  %589 = vmatprep.mubr.bf16.mxu0 0
  %590 = vmatmul.mubr.bf16.gmra.mxu0 %v335
  %v591 = vpop.f32.mrf.mxu0
  %v592 = vadd.f32 %v88, %v591
  %v593 = vpop.f32.mrf.mxu0
  %v594 = vpop.f32.mrf.mxu0
  %v595 = vadd.f32 %v88, %v594
  %v596 = vpop.f32.mrf.mxu0
  %597 = vmatprep.mubr.bf16.mxu0 0
  %598 = vmatmul.mubr.bf16.gmra.mxu0 %v338
  %v599 = vpop.f32.mrf.mxu0
  %v600 = vadd.f32 %v88, %v599
  %v601 = vpop.f32.mrf.mxu0
  %v602 = vpop.f32.mrf.mxu0
  %v603 = vadd.f32 %v88, %v602
  %v604 = vpop.f32.mrf.mxu0
  %605 = vmatprep.mubr.bf16.mxu0 0
  %606 = vmatmul.mubr.bf16.gmra.mxu0 %v341
  %v607 = vpop.f32.mrf.mxu0
  %v608 = vadd.f32 %v88, %v607
  %v609 = vpop.f32.mrf.mxu0
  %v610 = vpop.f32.mrf.mxu0
  %v611 = vadd.f32 %v88, %v610
  %v612 = vpop.f32.mrf.mxu0
  %613 = vmatprep.mubr.bf16.mxu0 0
  %614 = vmatmul.mubr.bf16.gmra.mxu0 %v344
  %v615 = vpop.f32.mrf.mxu0
  %v616 = vadd.f32 %v88, %v615
  %v617 = vpop.f32.mrf.mxu0
  %v618 = vpop.f32.mrf.mxu0
  %v619 = vadd.f32 %v88, %v618
  %v620 = vpop.f32.mrf.mxu0
  %621 = vmatprep.mubr.bf16.mxu0 0
  %622 = vmatmul.mubr.bf16.gmra.mxu0 %v347
  %v623 = vpop.f32.mrf.mxu0
  %v624 = vadd.f32 %v88, %v623
  %v625 = vpop.f32.mrf.mxu0
  %v626 = vpop.f32.mrf.mxu0
  %v627 = vadd.f32 %v88, %v626
  %v628 = vpop.f32.mrf.mxu0
  %629 = vmatprep.mubr.bf16.mxu0 0
  %630 = vmatmul.mubr.bf16.gmra.mxu0 %v350
  %v631 = vpop.f32.mrf.mxu0
  %v632 = vadd.f32 %v88, %v631
  %v633 = vpop.f32.mrf.mxu0
  %v634 = vpop.f32.mrf.mxu0
  %v635 = vadd.f32 %v88, %v634
  %v636 = vpop.f32.mrf.mxu0
  %637 = vmatprep.mubr.bf16.mxu0 0
  %638 = vmatmul.mubr.bf16.gmra.mxu0 %v353
  %v639 = vpop.f32.mrf.mxu0
  %v640 = vadd.f32 %v88, %v639
  %v641 = vpop.f32.mrf.mxu0
  %v642 = vpop.f32.mrf.mxu0
  %v643 = vadd.f32 %v88, %v642
  %v644 = vpop.f32.mrf.mxu0
  %645 = vmatprep.mubr.bf16.mxu0 0
  %646 = vmatmul.mubr.bf16.gmra.mxu0 %v356
  %v647 = vpop.f32.mrf.mxu0
  %v648 = vadd.f32 %v88, %v647
  %v649 = vpop.f32.mrf.mxu0
  %v650 = vpop.f32.mrf.mxu0
  %v651 = vadd.f32 %v88, %v650
  %v652 = vpop.f32.mrf.mxu0
  %653 = vdwg.mxu0
  %v654 = vmax.f32 %v400, 0.0
  %v655 = vmax.f32 %v403, 0.0
  %v656 = vmax.f32 %v408, 0.0
  %v657 = vmax.f32 %v411, 0.0
  %v658 = vmax.f32 %v416, 0.0
  %v659 = vmax.f32 %v419, 0.0
  %v660 = vmax.f32 %v424, 0.0
  %v661 = vmax.f32 %v427, 0.0
  %v662 = vmax.f32 %v432, 0.0
  %v663 = vmax.f32 %v435, 0.0
  %v664 = vmax.f32 %v440, 0.0
  %v665 = vmax.f32 %v443, 0.0
  %v666 = vmax.f32 %v448, 0.0
  %v667 = vmax.f32 %v451, 0.0
  %v668 = vmax.f32 %v456, 0.0
  %v669 = vmax.f32 %v459, 0.0
  %v670 = vmax.f32 %v464, 0.0
  %v671 = vmax.f32 %v467, 0.0
  %v672 = vmax.f32 %v472, 0.0
  %v673 = vmax.f32 %v475, 0.0
  %v674 = vmax.f32 %v480, 0.0
  %v675 = vmax.f32 %v483, 0.0
  %v676 = vmax.f32 %v488, 0.0
  %v677 = vmax.f32 %v491, 0.0
  %v678 = vmax.f32 %v496, 0.0
  %v679 = vmax.f32 %v499, 0.0
  %v680 = vmax.f32 %v504, 0.0
  %v681 = vmax.f32 %v507, 0.0
  %v682 = vmax.f32 %v512, 0.0
  %v683 = vmax.f32 %v515, 0.0
  %v684 = vmax.f32 %v520, 0.0
  %v685 = vmax.f32 %v523, 0.0
  %v686 = vmax.f32 %v528, 0.0
  %v687 = vmax.f32 %v531, 0.0
  %v688 = vmax.f32 %v536, 0.0
  %v689 = vmax.f32 %v539, 0.0
  %v690 = vmax.f32 %v544, 0.0
  %v691 = vmax.f32 %v547, 0.0
  %v692 = vmax.f32 %v552, 0.0
  %v693 = vmax.f32 %v555, 0.0
  %v694 = vmax.f32 %v560, 0.0
  %v695 = vmax.f32 %v563, 0.0
  %v696 = vmax.f32 %v568, 0.0
  %v697 = vmax.f32 %v571, 0.0
  %v698 = vmax.f32 %v576, 0.0
  %v699 = vmax.f32 %v579, 0.0
  %v700 = vmax.f32 %v584, 0.0
  %v701 = vmax.f32 %v587, 0.0
  %v702 = vmax.f32 %v592, 0.0
  %v703 = vmax.f32 %v595, 0.0
  %v704 = vmax.f32 %v600, 0.0
  %v705 = vmax.f32 %v603, 0.0
  %v706 = vmax.f32 %v608, 0.0
  %v707 = vmax.f32 %v611, 0.0
  %v708 = vmax.f32 %v616, 0.0
  %v709 = vmax.f32 %v619, 0.0
  %v710 = vmax.f32 %v624, 0.0
  %v711 = vmax.f32 %v627, 0.0
  %v712 = vmax.f32 %v632, 0.0
  %v713 = vmax.f32 %v635, 0.0
  %v714 = vmax.f32 %v640, 0.0
  %v715 = vmax.f32 %v643, 0.0
  %v716 = vmax.f32 %v648, 0.0
  %v717 = vmax.f32 %v651, 0.0
  %v718 = vpack.c.bf16 %v655, %v654
  %v719 = vpack.c.bf16 %v657, %v656
  %v720 = vpack.c.bf16 %v659, %v658
  %v721 = vpack.c.bf16 %v661, %v660
  %v722 = vpack.c.bf16 %v663, %v662
  %v723 = vpack.c.bf16 %v665, %v664
  %v724 = vpack.c.bf16 %v667, %v666
  %v725 = vpack.c.bf16 %v669, %v668
  %v726 = vpack.c.bf16 %v671, %v670
  %v727 = vpack.c.bf16 %v673, %v672
  %v728 = vpack.c.bf16 %v675, %v674
  %v729 = vpack.c.bf16 %v677, %v676
  %v730 = vpack.c.bf16 %v679, %v678
  %v731 = vpack.c.bf16 %v681, %v680
  %v732 = vpack.c.bf16 %v683, %v682
  %v733 = vpack.c.bf16 %v685, %v684
  %v734 = vpack.c.bf16 %v687, %v686
  %v735 = vpack.c.bf16 %v689, %v688
  %v736 = vpack.c.bf16 %v691, %v690
  %v737 = vpack.c.bf16 %v693, %v692
  %v738 = vpack.c.bf16 %v695, %v694
  %v739 = vpack.c.bf16 %v697, %v696
  %v740 = vpack.c.bf16 %v699, %v698
  %v741 = vpack.c.bf16 %v701, %v700
  %v742 = vpack.c.bf16 %v703, %v702
  %v743 = vpack.c.bf16 %v705, %v704
  %v744 = vpack.c.bf16 %v707, %v706
  %v745 = vpack.c.bf16 %v709, %v708
  %v746 = vpack.c.bf16 %v711, %v710
  %v747 = vpack.c.bf16 %v713, %v712
  %v748 = vpack.c.bf16 %v715, %v714
  %v749 = vpack.c.bf16 %v717, %v716
  %v782 = vunpack.c.l.b16 %v718
  %v783 = vunpack.c.h.b16 %v718
  %v784 = vunpack.c.l.b16 %v719
  %v785 = vunpack.c.h.b16 %v719
  %v786 = vunpack.c.l.b16 %v720
  %v787 = vunpack.c.h.b16 %v720
  %v788 = vunpack.c.l.b16 %v721
  %v789 = vunpack.c.h.b16 %v721
  %v790 = vunpack.c.l.b16 %v722
  %v791 = vunpack.c.h.b16 %v722
  %v792 = vunpack.c.l.b16 %v723
  %v793 = vunpack.c.h.b16 %v723
  %v794 = vunpack.c.l.b16 %v724
  %v795 = vunpack.c.h.b16 %v724
  %v796 = vunpack.c.l.b16 %v725
  %v797 = vunpack.c.h.b16 %v725
  %v798 = vunpack.c.l.b16 %v726
  %v799 = vunpack.c.h.b16 %v726
  %v800 = vunpack.c.l.b16 %v727
  %v801 = vunpack.c.h.b16 %v727
  %v802 = vunpack.c.l.b16 %v728
  %v803 = vunpack.c.h.b16 %v728
  %v804 = vunpack.c.l.b16 %v729
  %v805 = vunpack.c.h.b16 %v729
  %v806 = vunpack.c.l.b16 %v730
  %v807 = vunpack.c.h.b16 %v730
  %v808 = vunpack.c.l.b16 %v731
  %v809 = vunpack.c.h.b16 %v731
  %v810 = vunpack.c.l.b16 %v732
  %v811 = vunpack.c.h.b16 %v732
  %v812 = vunpack.c.l.b16 %v733
  %v813 = vunpack.c.h.b16 %v733
  %v814 = vunpack.c.l.b16 %v734
  %v815 = vunpack.c.h.b16 %v734
  %v816 = vunpack.c.l.b16 %v735
  %v817 = vunpack.c.h.b16 %v735
  %v818 = vunpack.c.l.b16 %v736
  %v819 = vunpack.c.h.b16 %v736
  %v820 = vunpack.c.l.b16 %v737
  %v821 = vunpack.c.h.b16 %v737
  %v822 = vunpack.c.l.b16 %v738
  %v823 = vunpack.c.h.b16 %v738
  %v824 = vunpack.c.l.b16 %v739
  %v825 = vunpack.c.h.b16 %v739
  %v826 = vunpack.c.l.b16 %v740
  %v827 = vunpack.c.h.b16 %v740
  %v828 = vunpack.c.l.b16 %v741
  %v829 = vunpack.c.h.b16 %v741
  %v830 = vunpack.c.l.b16 %v742
  %v831 = vunpack.c.h.b16 %v742
  %v832 = vunpack.c.l.b16 %v743
  %v833 = vunpack.c.h.b16 %v743
  %v834 = vunpack.c.l.b16 %v744
  %v835 = vunpack.c.h.b16 %v744
  %v836 = vunpack.c.l.b16 %v745
  %v837 = vunpack.c.h.b16 %v745
  %v838 = vunpack.c.l.b16 %v746
  %v839 = vunpack.c.h.b16 %v746
  %v840 = vunpack.c.l.b16 %v747
  %v841 = vunpack.c.h.b16 %v747
  %v842 = vunpack.c.l.b16 %v748
  %v843 = vunpack.c.h.b16 %v748
  %v844 = vunpack.c.l.b16 %v749
  %v845 = vunpack.c.h.b16 %v749
  %v846 = vpack.c.b16 %v782, %v782
  %v847 = vpack.c.b16 %v783, %v783
  %v848 = vpack.c.b16 %v784, %v784
  %v849 = vpack.c.b16 %v785, %v785
  %v850 = vpack.c.b16 %v786, %v786
  %v851 = vpack.c.b16 %v787, %v787
  %v852 = vpack.c.b16 %v788, %v788
  %v853 = vpack.c.b16 %v789, %v789
  %v854 = vpack.c.b16 %v790, %v790
  %v855 = vpack.c.b16 %v791, %v791
  %v856 = vpack.c.b16 %v792, %v792
  %v857 = vpack.c.b16 %v793, %v793
  %v858 = vpack.c.b16 %v794, %v794
  %v859 = vpack.c.b16 %v795, %v795
  %v860 = vpack.c.b16 %v796, %v796
  %v861 = vpack.c.b16 %v797, %v797
  %v862 = vpack.c.b16 %v798, %v798
  %v863 = vpack.c.b16 %v799, %v799
  %v864 = vpack.c.b16 %v800, %v800
  %v865 = vpack.c.b16 %v801, %v801
  %v866 = vpack.c.b16 %v802, %v802
  %v867 = vpack.c.b16 %v803, %v803
  %v868 = vpack.c.b16 %v804, %v804
  %v869 = vpack.c.b16 %v805, %v805
  %v870 = vpack.c.b16 %v806, %v806
  %v871 = vpack.c.b16 %v807, %v807
  %v872 = vpack.c.b16 %v808, %v808
  %v873 = vpack.c.b16 %v809, %v809
  %v874 = vpack.c.b16 %v810, %v810
  %v875 = vpack.c.b16 %v811, %v811
  %v876 = vpack.c.b16 %v812, %v812
  %v877 = vpack.c.b16 %v813, %v813
  %v878 = vpack.c.b16 %v814, %v814
  %v879 = vpack.c.b16 %v815, %v815
  %v880 = vpack.c.b16 %v816, %v816
  %v881 = vpack.c.b16 %v817, %v817
  %v882 = vpack.c.b16 %v818, %v818
  %v883 = vpack.c.b16 %v819, %v819
  %v884 = vpack.c.b16 %v820, %v820
  %v885 = vpack.c.b16 %v821, %v821
  %v886 = vpack.c.b16 %v822, %v822
  %v887 = vpack.c.b16 %v823, %v823
  %v888 = vpack.c.b16 %v824, %v824
  %v889 = vpack.c.b16 %v825, %v825
  %v890 = vpack.c.b16 %v826, %v826
  %v891 = vpack.c.b16 %v827, %v827
  %v892 = vpack.c.b16 %v828, %v828
  %v893 = vpack.c.b16 %v829, %v829
  %v894 = vpack.c.b16 %v830, %v830
  %v895 = vpack.c.b16 %v831, %v831
  %v896 = vpack.c.b16 %v832, %v832
  %v897 = vpack.c.b16 %v833, %v833
  %v898 = vpack.c.b16 %v834, %v834
  %v899 = vpack.c.b16 %v835, %v835
  %v900 = vpack.c.b16 %v836, %v836
  %v901 = vpack.c.b16 %v837, %v837
  %v902 = vpack.c.b16 %v838, %v838
  %v903 = vpack.c.b16 %v839, %v839
  %v904 = vpack.c.b16 %v840, %v840
  %v905 = vpack.c.b16 %v841, %v841
  %v906 = vpack.c.b16 %v842, %v842
  %v907 = vpack.c.b16 %v843, %v843
  %v908 = vpack.c.b16 %v844, %v844
  %v909 = vpack.c.b16 %v845, %v845
  %vm974 = vcmask 519168
  %975 = vst.msk [vmem:[%s3] sm:$0xf] %vm974, %v846
  %976 = vst.msk [vmem:[%s3 + $0x4] sm:$0xf] %vm974, %v847
  %977 = vst.msk [vmem:[%s3 + $0x8] sm:$0xf] %vm974, %v848
  %978 = vst.msk [vmem:[%s3 + $0xc] sm:$0xf] %vm974, %v849
  %979 = vst.msk [vmem:[%s3 + $0x10] sm:$0xf] %vm974, %v850
  %980 = vst.msk [vmem:[%s3 + $0x14] sm:$0xf] %vm974, %v851
  %981 = vst.msk [vmem:[%s3 + $0x18] sm:$0xf] %vm974, %v852
  %982 = vst.msk [vmem:[%s3 + $0x1c] sm:$0xf] %vm974, %v853
  %983 = vst.msk [vmem:[%s3 + $0x20] sm:$0xf] %vm974, %v854
  %984 = vst.msk [vmem:[%s3 + $0x24] sm:$0xf] %vm974, %v855
  %985 = vst.msk [vmem:[%s3 + $0x28] sm:$0xf] %vm974, %v856
  %986 = vst.msk [vmem:[%s3 + $0x2c] sm:$0xf] %vm974, %v857
  %987 = vst.msk [vmem:[%s3 + $0x30] sm:$0xf] %vm974, %v858
  %988 = vst.msk [vmem:[%s3 + $0x34] sm:$0xf] %vm974, %v859
  %989 = vst.msk [vmem:[%s3 + $0x38] sm:$0xf] %vm974, %v860
  %990 = vst.msk [vmem:[%s3 + $0x3c] sm:$0xf] %vm974, %v861
  %991 = vst.msk [vmem:[%s3 + $0x40] sm:$0xf] %vm974, %v862
  %992 = vst.msk [vmem:[%s3 + $0x44] sm:$0xf] %vm974, %v863
  %993 = vst.msk [vmem:[%s3 + $0x48] sm:$0xf] %vm974, %v864
  %994 = vst.msk [vmem:[%s3 + $0x4c] sm:$0xf] %vm974, %v865
  %995 = vst.msk [vmem:[%s3 + $0x50] sm:$0xf] %vm974, %v866
  %996 = vst.msk [vmem:[%s3 + $0x54] sm:$0xf] %vm974, %v867
  %997 = vst.msk [vmem:[%s3 + $0x58] sm:$0xf] %vm974, %v868
  %998 = vst.msk [vmem:[%s3 + $0x5c] sm:$0xf] %vm974, %v869
  %999 = vst.msk [vmem:[%s3 + $0x60] sm:$0xf] %vm974, %v870
  %1000 = vst.msk [vmem:[%s3 + $0x64] sm:$0xf] %vm974, %v871
  %1001 = vst.msk [vmem:[%s3 + $0x68] sm:$0xf] %vm974, %v872
  %1002 = vst.msk [vmem:[%s3 + $0x6c] sm:$0xf] %vm974, %v873
  %1003 = vst.msk [vmem:[%s3 + $0x70] sm:$0xf] %vm974, %v874
  %1004 = vst.msk [vmem:[%s3 + $0x74] sm:$0xf] %vm974, %v875
  %1005 = vst.msk [vmem:[%s3 + $0x78] sm:$0xf] %vm974, %v876
  %1006 = vst.msk [vmem:[%s3 + $0x7c] sm:$0xf] %vm974, %v877
  %1007 = vst.msk [vmem:[%s3 + $0x80] sm:$0xf] %vm974, %v878
  %1008 = vst.msk [vmem:[%s3 + $0x84] sm:$0xf] %vm974, %v879
  %1009 = vst.msk [vmem:[%s3 + $0x88] sm:$0xf] %vm974, %v880
  %1010 = vst.msk [vmem:[%s3 + $0x8c] sm:$0xf] %vm974, %v881
  %1011 = vst.msk [vmem:[%s3 + $0x90] sm:$0xf] %vm974, %v882
  %1012 = vst.msk [vmem:[%s3 + $0x94] sm:$0xf] %vm974, %v883
  %1013 = vst.msk [vmem:[%s3 + $0x98] sm:$0xf] %vm974, %v884
  %1014 = vst.msk [vmem:[%s3 + $0x9c] sm:$0xf] %vm974, %v885
  %1015 = vst.msk [vmem:[%s3 + $0xa0] sm:$0xf] %vm974, %v886
  %1016 = vst.msk [vmem:[%s3 + $0xa4] sm:$0xf] %vm974, %v887
  %1017 = vst.msk [vmem:[%s3 + $0xa8] sm:$0xf] %vm974, %v888
  %1018 = vst.msk [vmem:[%s3 + $0xac] sm:$0xf] %vm974, %v889
  %1019 = vst.msk [vmem:[%s3 + $0xb0] sm:$0xf] %vm974, %v890
  %1020 = vst.msk [vmem:[%s3 + $0xb4] sm:$0xf] %vm974, %v891
  %1021 = vst.msk [vmem:[%s3 + $0xb8] sm:$0xf] %vm974, %v892
  %1022 = vst.msk [vmem:[%s3 + $0xbc] sm:$0xf] %vm974, %v893
  %1023 = vst.msk [vmem:[%s3 + $0xc0] sm:$0xf] %vm974, %v894
  %1024 = vst.msk [vmem:[%s3 + $0xc4] sm:$0xf] %vm974, %v895
  %1025 = vst.msk [vmem:[%s3 + $0xc8] sm:$0xf] %vm974, %v896
  %1026 = vst.msk [vmem:[%s3 + $0xcc] sm:$0xf] %vm974, %v897
  %1027 = vst.msk [vmem:[%s3 + $0xd0] sm:$0xf] %vm974, %v898
  %1028 = vst.msk [vmem:[%s3 + $0xd4] sm:$0xf] %vm974, %v899
  %1029 = vst.msk [vmem:[%s3 + $0xd8] sm:$0xf] %vm974, %v900
  %1030 = vst.msk [vmem:[%s3 + $0xdc] sm:$0xf] %vm974, %v901
  %1031 = vst.msk [vmem:[%s3 + $0xe0] sm:$0xf] %vm974, %v902
  %1032 = vst.msk [vmem:[%s3 + $0xe4] sm:$0xf] %vm974, %v903
  %1033 = vst.msk [vmem:[%s3 + $0xe8] sm:$0xf] %vm974, %v904
  %1034 = vst.msk [vmem:[%s3 + $0xec] sm:$0xf] %vm974, %v905
  %1035 = vst.msk [vmem:[%s3 + $0xf0] sm:$0xf] %vm974, %v906
  %1036 = vst.msk [vmem:[%s3 + $0xf4] sm:$0xf] %vm974, %v907
  %1037 = vst.msk [vmem:[%s3 + $0xf8] sm:$0xf] %vm974, %v908
  %1038 = vst.msk [vmem:[%s3 + $0xfc] sm:$0xf] %vm974, %v909
  // Predicated region
  $region14: #{video_frame_transformer.4} parent=0 // pred_check
    _
  $region15: #{video_frame_transformer.4} parent=0 // pred_check_branch
    %1040 = sbr.rel (0) target = $region17
  $region16: #{video_frame_transformer.4} parent=0 // pred_region
    _
  $region17: #{video_frame_transformer.4} parent=0 // pred_fallthru
    _
  // Predicated region
  $region18: #{video_frame_transformer.4} parent=0 // pred_check
    _
  $region19: #{video_frame_transformer.4} parent=0 // pred_check_branch
    %1042 = sbr.rel (0) target = $region21
  $region20: #{video_frame_transformer.4} parent=0 // pred_region
    _
  $region21: #{video_frame_transformer.4} parent=0 // pred_fallthru
    _

// kernel: tile.8
$region0: #{tile.8}
  #allocation0 [shape = 's32[1]{0}', space=sflag, size = 0x4, scoped, tag = 'scoped memory for tile.8']
  %s0 = inlined_call_operand.vmem [shape: f32[64], index: 0, kind: input, shape index: {}]
  %s1 = inlined_call_operand.vmem [shape: f32[4,64], index: 1, kind: output, shape index: {}]
  // Predicated region
  $region2: #{tile.8} parent=0 // pred_check
    _
  $region3: #{tile.8} parent=0 // pred_check_branch
    %3 = sbr.rel (0) target = $region5
  $region4: #{tile.8} parent=0 // pred_region
    _
  $region5: #{tile.8} parent=0 // pred_fallthru
    _
  %v4 = vld [vmem:[%s0] ss:$0 sm:$0xff]
  %5 = vst [vmem:[%s1] sm:$0xf] %v4

// kernel: tile.9
$region0: #{tile.9}
  %s0 = inlined_call_operand.vmem [shape: f32[4,64], index: 0, kind: input, shape index: {}]
  %s1 = inlined_call_operand.vmem [shape: f32[1,256], index: 1, kind: output, shape index: {}]
  $region1: #{tile.9} parent=0
    #allocation0 [shape = 'u8[8192]{0}', space=vmem, size = 0x2000, scoped, tag = 'scoped mem for output reshape']
    #allocation1 [shape = 'u8[4096]{0}', space=vmem, size = 0x1000, scoped, tag = 'scoped mem for input reshape']
    %s3 = sshll.u32 1, 4
    %s4 = ssub.s32 %s3, 1
    %v5 = vld [vmem:[%s0] sm:%s4]
    %6 = vst [vmem:[#allocation1] sm:%s4] %v5
    %s7 = smov 3
    %v8 = vld [vmem:[#allocation1] ss:$2 sm:%s7]
    %vm9 = vcmask 523264
    %10 = vst.msk [vmem:[#allocation0] ss:$8 sm:$0x3] %vm9, %v8
    %s11 = scalar_lea.vmem [#allocation1], 1
    %s12 = smov 3
    %v13 = vld [vmem:[%s11] ss:$2 sm:%s12]
    %14 = vrot.lane.b32.xlu0 %v13, 64
    %v15 = vpop.permute.xlu0 %14
    %vm16 = vcmask 1048064
    %17 = vst.msk [vmem:[#allocation0] ss:$8 sm:$0x3] %vm16, %v15
    %s19 = sshll.u32 1, 1
    %s20 = ssub.s32 %s19, 1
    %v22 = vld [vmem:[#allocation0] sm:%s20]
    %s23 = sshll.u32 1, 1
    %s24 = ssub.s32 %s23, 1
    %25 = vst [vmem:[%s1] sm:%s24] %v22
    %s26 = scalar_lea.vmem [#allocation0], 8
    %v27 = vld [vmem:[%s26] sm:%s20]
    %s28 = sshll.u32 1, 1
    %s29 = ssub.s32 %s28, 1
    %s30 = scalar_lea.vmem %s1, 1
    %31 = vst [vmem:[%s30] sm:%s29] %v27

// kernel: video_frame_transformer.5
$region0: #{video_frame_transformer.5}
  #allocation0 [shape = 'u32[]', space=smem, size = 0x4, offset = 0x4, fixed_abs, tag = 'smem constant byte address 0x4 - core index']
  #allocation1 [shape = 'u32[144,128]{1,0:T(1,128)}', space=vmem, size = 0x12000, scoped, tag = 'internal scratch']
  #allocation2 [shape = 'f32[128,128]{1,0:T(8,128)}', space=vmem, size = 0x10000, scoped, tag = 'scratch operand']
  %s0 = inlined_call_operand.vmem [shape: bf16[4,128,576], index: 0, kind: input, shape index: {}]
  %s1 = inlined_call_operand.vmem [shape: bf16[576,128], index: 1, kind: input, shape index: {}]
  %s2 = inlined_call_operand.vmem [shape: f32[1,128], index: 2, kind: input, shape index: {}]
  %s3 = inlined_call_operand.vmem [shape: bf16[128,128], index: 3, kind: output, shape index: {}]
  %s4 = sld [smem:[#allocation0]]
  $region53: #{video_frame_transformer.5} parent=0
    _
  %s6 = ssub.s32 1, %s4
  %s7 = scalar_select 0, %s6, %s4
  loop: start=0, step=1, limit=6
  $region2: #{video_frame_transformer.5} parent=0 // loop_pre_header
    _
  $region3: #{video_frame_transformer.5} parent=0 // loop_header
    %s9 = sphi 0, %s13
    %p10 = scmp.ge.s32.totalorder %s9, 6
    %s16 = sphi 0, %s28
    %s17 = sphi 0, %s24
    %s18 = sphi 0, %s16
    %s19 = sphi 0, %s17
    %s20 = sphi 0, %s18
    %s21 = sphi 0, %s19
    %s33 = sphi 0, %s35
    %s36 = sphi 0, %s33
    %s37 = sphi 0, %s36
    %s53 = sphi 0, %s37
    %s57 = sphi 0, %s57
    %s59 = sphi 0, %s57
    %s60 = sphi 0, %s59
    %s74 = sphi 0, %s60
    %s78 = sphi 0, %s78
    %s80 = sphi 0, %s78
    %s81 = sphi 0, %s80
    %s95 = sphi 0, %s81
    %s101 = sphi 0, %s103
    %s104 = sphi 0, %s101
    %s105 = sphi 0, %s104
    %s121 = sphi 0, %s105
  $region4: #{video_frame_transformer.5} parent=0 // loop_header_branch
    %12 = sbr.rel (%p10) target = $region8
  $region5: #{video_frame_transformer.5} parent=0 // loop_body
    %s14 = ssub.s32 %s9, 1
    %s15 = ssub.s32 %s9, 2
    %s22 = sadd.s32 1, %s17
    %p23 = scmp.ge.s32.totalorder %s22, 4
    %s24 = scalar_select %p23, 0, %s22
    %s25 = sadd.s32 1, %s16
    %s26 = scalar_select %p23, %s25, %s16
    %p27 = scmp.ge.s32.totalorder %s26, 1
    %s28 = scalar_select %p27, 0, %s26
    %s29 = ssub.s32 %s17, %s24
    %s30 = ssub.s32 %s16, %s28
    %s31 = sor.u32 %s29, %s30
    %p32 = scmp.eq.s32.totalorder %s31, 0
    %s34 = sadd.s32 %s33, 1
    %s35 = scalar_select %p32, %s33, %s34
    %p38 = pneg %p32
    %p39 = scmp.eq.s32.totalorder %s9, 3
    %p40 = por %p38, %p39
    %p41 = scmp.ne.s32.totalorder %s33, %s36
    %p42 = scmp.eq.s32.totalorder %s9, 0
    %p43 = por %p41, %p42
    %p44 = scmp.ne.s32.totalorder %s33, %s36
    %p45 = scmp.eq.s32.totalorder %s14, 3
    %p46 = por %p44, %p45
    %p47 = scmp.ne.s32.totalorder %s36, %s37
    %p48 = scmp.eq.s32.totalorder %s14, 0
    %p49 = por %p47, %p48
    %p50 = scmp.ne.s32.totalorder %s36, %s37
    %p51 = scmp.eq.s32.totalorder %s15, 3
    %p52 = por %p50, %p51
    %p54 = scmp.ne.s32.totalorder %s37, %s53
    %p55 = scmp.eq.s32.totalorder %s15, 0
    %p56 = por %p54, %p55
    %s58 = sadd.s32 %s57, 1
    %p61 = scmp.eq.s32.totalorder %s9, 3
    %p62 = scmp.ne.s32.totalorder %s57, %s59
    %p63 = scmp.eq.s32.totalorder %s9, 0
    %p64 = por %p62, %p63
    %p65 = scmp.ne.s32.totalorder %s57, %s59
    %p66 = scmp.eq.s32.totalorder %s14, 3
    %p67 = por %p65, %p66
    %p68 = scmp.ne.s32.totalorder %s59, %s60
    %p69 = scmp.eq.s32.totalorder %s14, 0
    %p70 = por %p68, %p69
    %p71 = scmp.ne.s32.totalorder %s59, %s60
    %p72 = scmp.eq.s32.totalorder %s15, 3
    %p73 = por %p71, %p72
    %p75 = scmp.ne.s32.totalorder %s60, %s74
    %p76 = scmp.eq.s32.totalorder %s15, 0
    %p77 = por %p75, %p76
    %s79 = sadd.s32 %s78, 1
    %p82 = scmp.eq.s32.totalorder %s9, 3
    %p83 = scmp.ne.s32.totalorder %s78, %s80
    %p84 = scmp.eq.s32.totalorder %s9, 0
    %p85 = por %p83, %p84
    %p86 = scmp.ne.s32.totalorder %s78, %s80
    %p87 = scmp.eq.s32.totalorder %s14, 3
    %p88 = por %p86, %p87
    %p89 = scmp.ne.s32.totalorder %s80, %s81
    %p90 = scmp.eq.s32.totalorder %s14, 0
    %p91 = por %p89, %p90
    %p92 = scmp.ne.s32.totalorder %s80, %s81
    %p93 = scmp.eq.s32.totalorder %s15, 3
    %p94 = por %p92, %p93
    %p96 = scmp.ne.s32.totalorder %s81, %s95
    %p97 = scmp.eq.s32.totalorder %s15, 0
    %p98 = por %p96, %p97
    %s99 = ssub.s32 %s16, %s28
    %p100 = scmp.eq.s32.totalorder %s99, 0
    %s102 = sadd.s32 %s101, 1
    %s103 = scalar_select %p100, %s101, %s102
    %p106 = pneg %p100
    %p107 = scmp.eq.s32.totalorder %s9, 3
    %p108 = por %p106, %p107
    %p109 = scmp.ne.s32.totalorder %s101, %s104
    %p110 = scmp.eq.s32.totalorder %s9, 0
    %p111 = por %p109, %p110
    %p112 = scmp.ne.s32.totalorder %s101, %s104
    %p113 = scmp.eq.s32.totalorder %s14, 3
    %p114 = por %p112, %p113
    %p115 = scmp.ne.s32.totalorder %s104, %s105
    %p116 = scmp.eq.s32.totalorder %s14, 0
    %p117 = por %p115, %p116
    %p118 = scmp.ne.s32.totalorder %s104, %s105
    %p119 = scmp.eq.s32.totalorder %s15, 3
    %p120 = por %p118, %p119
    %p122 = scmp.ne.s32.totalorder %s105, %s121
    %p123 = scmp.eq.s32.totalorder %s15, 0
    %p124 = por %p122, %p123
    %p125 = scmp.le.s32.totalorder 1, %s9
    %p126 = scmp.lt.s32.totalorder %s9, 5
    %p127 = pnand %p125, %p126
    %p128 = pneg %p127
    // Predicated region
    $region9: #{video_frame_transformer.5} parent=5 // pred_check
      _
    $region10: #{video_frame_transformer.5} parent=5 // pred_check_branch
      %130 = sbr.rel (%p127) target = $region12
    $region11: #{video_frame_transformer.5} parent=5 // pred_region
      %s131 = ssub.s32 %s9, 1
      // Predicated region
      $region13: #{video_frame_transformer.5} parent=11 // pred_check
        %p132 = pneg %p70
      $region14: #{video_frame_transformer.5} parent=11 // pred_check_branch
        %134 = sbr.rel (%p132) target = $region16
      $region15: #{video_frame_transformer.5} parent=11 // pred_region
        _
      $region16: #{video_frame_transformer.5} parent=11 // pred_fallthru
        _
      // Predicated region
      $region17: #{video_frame_transformer.5} parent=11 // pred_check
        %p135 = pneg %p91
      $region18: #{video_frame_transformer.5} parent=11 // pred_check_branch
        %137 = sbr.rel (%p135) target = $region20
      $region19: #{video_frame_transformer.5} parent=11 // pred_region
        _
      $region20: #{video_frame_transformer.5} parent=11 // pred_fallthru
        _
    $region12: #{video_frame_transformer.5} parent=5 // pred_fallthru
      _
    %p138 = scmp.lt.s32.totalorder %s9, 4
    // Predicated region
    $region21: #{video_frame_transformer.5} parent=5 // pred_check
      %p139 = pneg %p138
    $region22: #{video_frame_transformer.5} parent=5 // pred_check_branch
      %141 = sbr.rel (%p139) target = $region24
    $region23: #{video_frame_transformer.5} parent=5 // pred_region
      // Predicated region
      $region25: #{video_frame_transformer.5} parent=23 // pred_check
        %p142 = pneg %p43
      $region26: #{video_frame_transformer.5} parent=23 // pred_check_branch
        %144 = sbr.rel (%p142) target = $region28
      $region27: #{video_frame_transformer.5} parent=23 // pred_region
        %s145 = smul.u32 16, %s16
        %p146 = scmp.lt.s32.totalorder %s17, 3
        %s147 = scalar_select %p146, %s17, 3
        %p148 = scmp.lt.s32.totalorder %s145, 15
        %s149 = scalar_select %p148, %s145, 15
        %s150 = smul.addr %s149, 5
        %s151 = smul.addr %s147, 80
        %s152 = sadd.s32 %s150, %s151
        %s153 = smul.addr %s152, 4
        %s154 = scalar_lea.vmem %s0, %s153
        %s155 = smul.u32 16, %s16
      $region28: #{video_frame_transformer.5} parent=23 // pred_fallthru
        _
    $region24: #{video_frame_transformer.5} parent=5 // pred_fallthru
      _
    %p156 = scmp.le.s32.totalorder 1, %s9
    %p157 = scmp.lt.s32.totalorder %s9, 5
    %p158 = pnand %p156, %p157
    %p159 = pneg %p158
    // Predicated region
    $region29: #{video_frame_transformer.5} parent=5 // pred_check
      _
    $region30: #{video_frame_transformer.5} parent=5 // pred_check_branch
      %161 = sbr.rel (%p158) target = $region32
    $region31: #{video_frame_transformer.5} parent=5 // pred_region
      %s162 = ssub.s32 %s9, 1
      %s163 = smul.u32 16, %s18
      %p164 = scmp.lt.s32.totalorder %s19, 3
      %s165 = scalar_select %p164, %s19, 3
      %p166 = scmp.lt.s32.totalorder %s163, 15
      %s167 = scalar_select %p166, %s163, 15
      %s168 = smul.addr %s167, 5
      %s169 = smul.addr %s165, 80
      %s170 = sadd.s32 %s168, %s169
      %s171 = smul.addr %s170, 4
      %s172 = scalar_lea.vmem %s0, %s171
      %p173 = pneg %p49
      %p174 = pneg %p46
      %p175 = pneg %p70
      %p176 = pneg %p67
      %p177 = pneg %p91
      %p178 = pneg %p88
      %p179 = pneg %p117
      %p180 = pneg %p114
      %s181 = smul.u32 16, %s18
      %p182 = scmp.lt.s32.totalorder %s181, 15
      %s183 = scalar_select %p182, %s181, 15
      %s184 = smul.addr %s183, 4
      %s185 = scalar_lea.vmem %s3, %s184
      %s186 = smul.u32 16, %s18
      %p187 = scmp.lt.s32.totalorder %s19, 3
      %s188 = scalar_select %p187, %s19, 3
      %p189 = scmp.lt.s32.totalorder %s186, 15
      %s190 = scalar_select %p189, %s186, 15
      %s191 = smul.addr %s190, 5
      %s192 = smul.addr %s188, 80
      %s193 = sadd.s32 %s191, %s192
      %s194 = smul.addr %s193, 4
      %s195 = scalar_lea.vmem %s0, %s194
      %s196 = smul.u32 16, %s18
      %s197 = smul.u32 16, %s18
      %p198 = scmp.lt.s32.totalorder %s197, 15
      %s199 = scalar_select %p198, %s197, 15
      %s200 = smul.addr %s199, 4
      %s201 = scalar_lea.vmem %s3, %s200
      %s202 = smul.u32 16, %s18
      %p204 = scmp.eq.s32.totalorder %s19, 0
      // Predicated region
      $region33: #{video_frame_transformer.5} parent=31 // pred_check
        %p205 = pneg %p204
      $region34: #{video_frame_transformer.5} parent=31 // pred_check_branch
        %207 = sbr.rel (%p205) target = $region36
      $region35: #{video_frame_transformer.5} parent=31 // pred_region
        %208 = vst [vmem:[#allocation2] sm:$0xff] 0.0
        %209 = vst [vmem:[#allocation2 + $0x8] sm:$0xff] 0.0
        %210 = vst [vmem:[#allocation2 + $0x10] sm:$0xff] 0.0
        %211 = vst [vmem:[#allocation2 + $0x18] sm:$0xff] 0.0
        %212 = vst [vmem:[#allocation2 + $0x20] sm:$0xff] 0.0
        %213 = vst [vmem:[#allocation2 + $0x28] sm:$0xff] 0.0
        %214 = vst [vmem:[#allocation2 + $0x30] sm:$0xff] 0.0
        %215 = vst [vmem:[#allocation2 + $0x38] sm:$0xff] 0.0
        %216 = vst [vmem:[#allocation2 + $0x40] sm:$0xff] 0.0
        %217 = vst [vmem:[#allocation2 + $0x48] sm:$0xff] 0.0
        %218 = vst [vmem:[#allocation2 + $0x50] sm:$0xff] 0.0
        %219 = vst [vmem:[#allocation2 + $0x58] sm:$0xff] 0.0
        %220 = vst [vmem:[#allocation2 + $0x60] sm:$0xff] 0.0
        %221 = vst [vmem:[#allocation2 + $0x68] sm:$0xff] 0.0
        %222 = vst [vmem:[#allocation2 + $0x70] sm:$0xff] 0.0
        %223 = vst [vmem:[#allocation2 + $0x78] sm:$0xff] 0.0
      $region36: #{video_frame_transformer.5} parent=31 // pred_fallthru
        _
      %v224 = vld [vmem:[%s195] sm:$0xff]
      %v225 = vld [vmem:[%s195 + $0x8] sm:$0xff]
      %v226 = vld [vmem:[%s195 + $0x10] sm:$0xf]
      %v227 = vld [vmem:[%s195 + $0x14] sm:$0xff]
      %v228 = vld [vmem:[%s195 + $0x1c] sm:$0xff]
      %v229 = vld [vmem:[%s195 + $0x24] sm:$0xf]
      %v230 = vld [vmem:[%s195 + $0x28] sm:$0xff]
      %v231 = vld [vmem:[%s195 + $0x30] sm:$0xff]
      %v232 = vld [vmem:[%s195 + $0x38] sm:$0xf]
      %v233 = vld [vmem:[%s195 + $0x3c] sm:$0xff]
      %v234 = vld [vmem:[%s195 + $0x44] sm:$0xff]
      %v235 = vld [vmem:[%s195 + $0x4c] sm:$0xf]
      %v236 = vld [vmem:[%s195 + $0x50] sm:$0xff]
      %v237 = vld [vmem:[%s195 + $0x58] sm:$0xff]
      %v238 = vld [vmem:[%s195 + $0x60] sm:$0xf]
      %v239 = vld [vmem:[%s195 + $0x64] sm:$0xff]
      %v240 = vld [vmem:[%s195 + $0x6c] sm:$0xff]
      %v241 = vld [vmem:[%s195 + $0x74] sm:$0xf]
      %v242 = vld [vmem:[%s195 + $0x78] sm:$0xff]
      %v243 = vld [vmem:[%s195 + $0x80] sm:$0xff]
      %v244 = vld [vmem:[%s195 + $0x88] sm:$0xf]
      %v245 = vld [vmem:[%s195 + $0x8c] sm:$0xff]
      %v246 = vld [vmem:[%s195 + $0x94] sm:$0xff]
      %v247 = vld [vmem:[%s195 + $0x9c] sm:$0xf]
      %v248 = vld [vmem:[%s195 + $0xa0] sm:$0xff]
      %v249 = vld [vmem:[%s195 + $0xa8] sm:$0xff]
      %v250 = vld [vmem:[%s195 + $0xb0] sm:$0xf]
      %v251 = vld [vmem:[%s195 + $0xb4] sm:$0xff]
      %v252 = vld [vmem:[%s195 + $0xbc] sm:$0xff]
      %v253 = vld [vmem:[%s195 + $0xc4] sm:$0xf]
      %v254 = vld [vmem:[%s195 + $0xc8] sm:$0xff]
      %v255 = vld [vmem:[%s195 + $0xd0] sm:$0xff]
      %v256 = vld [vmem:[%s195 + $0xd8] sm:$0xf]
      %v257 = vld [vmem:[%s195 + $0xdc] sm:$0xff]
      %v258 = vld [vmem:[%s195 + $0xe4] sm:$0xff]
      %v259 = vld [vmem:[%s195 + $0xec] sm:$0xf]
      %v260 = vld [vmem:[%s195 + $0xf0] sm:$0xff]
      %v261 = vld [vmem:[%s195 + $0xf8] sm:$0xff]
      %v262 = vld [vmem:[%s195 + $0x100] sm:$0xf]
      %v263 = vld [vmem:[%s195 + $0x104] sm:$0xff]
      %v264 = vld [vmem:[%s195 + $0x10c] sm:$0xff]
      %v265 = vld [vmem:[%s195 + $0x114] sm:$0xf]
      %v266 = vld [vmem:[%s195 + $0x118] sm:$0xff]
      %v267 = vld [vmem:[%s195 + $0x120] sm:$0xff]
      %v268 = vld [vmem:[%s195 + $0x128] sm:$0xf]
      %v269 = vld [vmem:[%s195 + $0x12c] sm:$0xff]
      %v270 = vld [vmem:[%s195 + $0x134] sm:$0xff]
      %v271 = vld [vmem:[%s195 + $0x13c] sm:$0xf]
      %v272 = vld [vmem:[%s1] sm:$0xf]
      %v273 = vld [vmem:[%s1 + $0x4] sm:$0xf]
      %v274 = vld [vmem:[%s1 + $0x8] sm:$0xf]
      %v275 = vld [vmem:[%s1 + $0xc] sm:$0xf]
      %v276 = vld [vmem:[%s1 + $0x10] sm:$0xf]
      %v277 = vld [vmem:[%s1 + $0x14] sm:$0xf]
      %v278 = vld [vmem:[%s1 + $0x18] sm:$0xf]
      %v279 = vld [vmem:[%s1 + $0x1c] sm:$0xf]
      %v280 = vld [vmem:[%s1 + $0x20] sm:$0xf]
      %v281 = vld [vmem:[%s1 + $0x24] sm:$0xf]
      %v282 = vld [vmem:[%s1 + $0x28] sm:$0xf]
      %v283 = vld [vmem:[%s1 + $0x2c] sm:$0xf]
      %v284 = vld [vmem:[%s1 + $0x30] sm:$0xf]
      %v285 = vld [vmem:[%s1 + $0x34] sm:$0xf]
      %v286 = vld [vmem:[%s1 + $0x38] sm:$0xf]
      %v287 = vld [vmem:[%s1 + $0x3c] sm:$0xf]
      %v288 = vld [vmem:[%s1 + $0x40] sm:$0xf]
      %v289 = vld [vmem:[%s1 + $0x44] sm:$0xf]
      %v290 = vld [vmem:[%s1 + $0x48] sm:$0xf]
      %v291 = vld [vmem:[%s1 + $0x4c] sm:$0xf]
      %v292 = vld [vmem:[%s1 + $0x50] sm:$0xf]
      %v293 = vld [vmem:[%s1 + $0x54] sm:$0xf]
      %v294 = vld [vmem:[%s1 + $0x58] sm:$0xf]
      %v295 = vld [vmem:[%s1 + $0x5c] sm:$0xf]
      %v296 = vld [vmem:[%s1 + $0x60] sm:$0xf]
      %v297 = vld [vmem:[%s1 + $0x64] sm:$0xf]
      %v298 = vld [vmem:[%s1 + $0x68] sm:$0xf]
      %v299 = vld [vmem:[%s1 + $0x6c] sm:$0xf]
      %v300 = vld [vmem:[%s1 + $0x70] sm:$0xf]
      %v301 = vld [vmem:[%s1 + $0x74] sm:$0xf]
      %v302 = vld [vmem:[%s1 + $0x78] sm:$0xf]
      %v303 = vld [vmem:[%s1 + $0x7c] sm:$0xf]
      %v304 = vld [vmem:[%s1 + $0x80] sm:$0xf]
      %v305 = vld [vmem:[%s1 + $0x84] sm:$0xf]
      %v306 = vld [vmem:[%s1 + $0x88] sm:$0xf]
      %v307 = vld [vmem:[%s1 + $0x8c] sm:$0xf]
      %v308 = vld [vmem:[%s1 + $0x90] sm:$0xf]
      %v309 = vld [vmem:[%s1 + $0x94] sm:$0xf]
      %v310 = vld [vmem:[%s1 + $0x98] sm:$0xf]
      %v311 = vld [vmem:[%s1 + $0x9c] sm:$0xf]
      %v312 = vld [vmem:[%s1 + $0xa0] sm:$0xf]
      %v313 = vld [vmem:[%s1 + $0xa4] sm:$0xf]
      %v314 = vld [vmem:[%s1 + $0xa8] sm:$0xf]
      %v315 = vld [vmem:[%s1 + $0xac] sm:$0xf]
      %v316 = vld [vmem:[%s1 + $0xb0] sm:$0xf]
      %v317 = vld [vmem:[%s1 + $0xb4] sm:$0xf]
      %v318 = vld [vmem:[%s1 + $0xb8] sm:$0xf]
      %v319 = vld [vmem:[%s1 + $0xbc] sm:$0xf]
      %v320 = vld [vmem:[%s1 + $0xc0] sm:$0xf]
      %v321 = vld [vmem:[%s1 + $0xc4] sm:$0xf]
      %v322 = vld [vmem:[%s1 + $0xc8] sm:$0xf]
      %v323 = vld [vmem:[%s1 + $0xcc] sm:$0xf]
      %v324 = vld [vmem:[%s1 + $0xd0] sm:$0xf]
      %v325 = vld [vmem:[%s1 + $0xd4] sm:$0xf]
      %v326 = vld [vmem:[%s1 + $0xd8] sm:$0xf]
      %v327 = vld [vmem:[%s1 + $0xdc] sm:$0xf]
      %v328 = vld [vmem:[%s1 + $0xe0] sm:$0xf]
      %v329 = vld [vmem:[%s1 + $0xe4] sm:$0xf]
      %v330 = vld [vmem:[%s1 + $0xe8] sm:$0xf]
      %v331 = vld [vmem:[%s1 + $0xec] sm:$0xf]
      %v332 = vld [vmem:[%s1 + $0xf0] sm:$0xf]
      %v333 = vld [vmem:[%s1 + $0xf4] sm:$0xf]
      %v334 = vld [vmem:[%s1 + $0xf8] sm:$0xf]
      %v335 = vld [vmem:[%s1 + $0xfc] sm:$0xf]
      %v336 = vld [vmem:[%s1 + $0x100] sm:$0xf]
      %v337 = vld [vmem:[%s1 + $0x104] sm:$0xf]
      %v338 = vld [vmem:[%s1 + $0x108] sm:$0xf]
      %v339 = vld [vmem:[%s1 + $0x10c] sm:$0xf]
      %v340 = vld [vmem:[%s1 + $0x110] sm:$0xf]
      %v341 = vld [vmem:[%s1 + $0x114] sm:$0xf]
      %v342 = vld [vmem:[%s1 + $0x118] sm:$0xf]
      %v343 = vld [vmem:[%s1 + $0x11c] sm:$0xf]
      %v344 = vld [vmem:[%s2] sm:$0x1]
      %v346 = vlaneseq
      %v347 = vshrl.u32 %v346, 7
      %v348 = vsub.s32 0, %v347
      %v349 = vrot.slane %v344, %v348
      %v399 = vunpack.c.l.b16 %v224
      %v400 = vunpack.c.h.b16 %v224
      %v401 = vunpack.c.l.b16 %v225
      %v402 = vunpack.c.h.b16 %v225
      %v403 = vunpack.c.l.b16 %v226
      %v404 = vunpack.c.l.b16 %v227
      %v405 = vunpack.c.h.b16 %v227
      %v406 = vunpack.c.l.b16 %v228
      %v407 = vunpack.c.h.b16 %v228
      %v408 = vunpack.c.l.b16 %v229
      %v409 = vunpack.c.l.b16 %v230
      %v410 = vunpack.c.h.b16 %v230
      %v411 = vunpack.c.l.b16 %v231
      %v412 = vunpack.c.h.b16 %v231
      %v413 = vunpack.c.l.b16 %v232
      %v414 = vunpack.c.l.b16 %v233
      %v415 = vunpack.c.h.b16 %v233
      %v416 = vunpack.c.l.b16 %v234
      %v417 = vunpack.c.h.b16 %v234
      %v418 = vunpack.c.l.b16 %v235
      %v419 = vunpack.c.l.b16 %v236
      %v420 = vunpack.c.h.b16 %v236
      %v421 = vunpack.c.l.b16 %v237
      %v422 = vunpack.c.h.b16 %v237
      %v423 = vunpack.c.l.b16 %v238
      %v424 = vunpack.c.l.b16 %v239
      %v425 = vunpack.c.h.b16 %v239
      %v426 = vunpack.c.l.b16 %v240
      %v427 = vunpack.c.h.b16 %v240
      %v428 = vunpack.c.l.b16 %v241
      %v429 = vunpack.c.l.b16 %v242
      %v430 = vunpack.c.h.b16 %v242
      %v431 = vunpack.c.l.b16 %v243
      %v432 = vunpack.c.h.b16 %v243
      %v433 = vunpack.c.l.b16 %v244
      %v434 = vunpack.c.l.b16 %v245
      %v435 = vunpack.c.h.b16 %v245
      %v436 = vunpack.c.l.b16 %v246
      %v437 = vunpack.c.h.b16 %v246
      %v438 = vunpack.c.l.b16 %v247
      %v439 = vunpack.c.l.b16 %v248
      %v440 = vunpack.c.h.b16 %v248
      %v441 = vunpack.c.l.b16 %v249
      %v442 = vunpack.c.h.b16 %v249
      %v443 = vunpack.c.l.b16 %v250
      %v444 = vunpack.c.l.b16 %v251
      %v445 = vunpack.c.h.b16 %v251
      %v446 = vunpack.c.l.b16 %v252
      %v447 = vunpack.c.h.b16 %v252
      %v448 = vunpack.c.l.b16 %v253
      %v449 = vunpack.c.l.b16 %v254
      %v450 = vunpack.c.h.b16 %v254
      %v451 = vunpack.c.l.b16 %v255
      %v452 = vunpack.c.h.b16 %v255
      %v453 = vunpack.c.l.b16 %v256
      %v454 = vunpack.c.l.b16 %v257
      %v455 = vunpack.c.h.b16 %v257
      %v456 = vunpack.c.l.b16 %v258
      %v457 = vunpack.c.h.b16 %v258
      %v458 = vunpack.c.l.b16 %v259
      %v459 = vunpack.c.l.b16 %v260
      %v460 = vunpack.c.h.b16 %v260
      %v461 = vunpack.c.l.b16 %v261
      %v462 = vunpack.c.h.b16 %v261
      %v463 = vunpack.c.l.b16 %v262
      %v464 = vunpack.c.l.b16 %v263
      %v465 = vunpack.c.h.b16 %v263
      %v466 = vunpack.c.l.b16 %v264
      %v467 = vunpack.c.h.b16 %v264
      %v468 = vunpack.c.l.b16 %v265
      %v469 = vunpack.c.l.b16 %v266
      %v470 = vunpack.c.h.b16 %v266
      %v471 = vunpack.c.l.b16 %v267
      %v472 = vunpack.c.h.b16 %v267
      %v473 = vunpack.c.l.b16 %v268
      %v474 = vunpack.c.l.b16 %v269
      %v475 = vunpack.c.h.b16 %v269
      %v476 = vunpack.c.l.b16 %v270
      %v477 = vunpack.c.h.b16 %v270
      %v478 = vunpack.c.l.b16 %v271
      %v479 = vpack.c.b16 %v404, %v399
      %v480 = vpack.c.b16 %v405, %v400
      %v481 = vpack.c.b16 %v406, %v401
      %v482 = vpack.c.b16 %v407, %v402
      %v483 = vpack.c.b16 %v408, %v403
      %v484 = vpack.c.b16 %v414, %v409
      %v485 = vpack.c.b16 %v415, %v410
      %v486 = vpack.c.b16 %v416, %v411
      %v487 = vpack.c.b16 %v417, %v412
      %v488 = vpack.c.b16 %v418, %v413
      %v489 = vpack.c.b16 %v424, %v419
      %v490 = vpack.c.b16 %v425, %v420
      %v491 = vpack.c.b16 %v426, %v421
      %v492 = vpack.c.b16 %v427, %v422
      %v493 = vpack.c.b16 %v428, %v423
      %v494 = vpack.c.b16 %v434, %v429
      %v495 = vpack.c.b16 %v435, %v430
      %v496 = vpack.c.b16 %v436, %v431
      %v497 = vpack.c.b16 %v437, %v432
      %v498 = vpack.c.b16 %v438, %v433
      %v499 = vpack.c.b16 %v444, %v439
      %v500 = vpack.c.b16 %v445, %v440
      %v501 = vpack.c.b16 %v446, %v441
      %v502 = vpack.c.b16 %v447, %v442
      %v503 = vpack.c.b16 %v448, %v443
      %v504 = vpack.c.b16 %v454, %v449
      %v505 = vpack.c.b16 %v455, %v450
      %v506 = vpack.c.b16 %v456, %v451
      %v507 = vpack.c.b16 %v457, %v452
      %v508 = vpack.c.b16 %v458, %v453
      %v509 = vpack.c.b16 %v464, %v459
      %v510 = vpack.c.b16 %v465, %v460
      %v511 = vpack.c.b16 %v466, %v461
      %v512 = vpack.c.b16 %v467, %v462
      %v513 = vpack.c.b16 %v468, %v463
      %v514 = vpack.c.b16 %v474, %v469
      %v515 = vpack.c.b16 %v475, %v470
      %v516 = vpack.c.b16 %v476, %v471
      %v517 = vpack.c.b16 %v477, %v472
      %v518 = vpack.c.b16 %v478, %v473
      %v623 = vunpack.c.l.b16 %v272
      %v624 = vunpack.c.l.b16 %v273
      %v625 = vunpack.c.l.b16 %v274
      %v626 = vunpack.c.l.b16 %v275
      %v627 = vunpack.c.l.b16 %v276
      %v628 = vunpack.c.l.b16 %v277
      %v629 = vunpack.c.l.b16 %v278
      %v630 = vunpack.c.l.b16 %v279
      %v631 = vunpack.c.l.b16 %v280
      %v632 = vunpack.c.l.b16 %v281
      %v633 = vunpack.c.l.b16 %v282
      %v634 = vunpack.c.l.b16 %v283
      %v635 = vunpack.c.l.b16 %v284
      %v636 = vunpack.c.l.b16 %v285
      %v637 = vunpack.c.l.b16 %v286
      %v638 = vunpack.c.l.b16 %v287
      %v639 = vunpack.c.l.b16 %v288
      %v640 = vunpack.c.l.b16 %v289
      %v641 = vunpack.c.l.b16 %v290
      %v642 = vunpack.c.l.b16 %v291
      %v643 = vunpack.c.l.b16 %v292
      %v644 = vunpack.c.l.b16 %v293
      %v645 = vunpack.c.l.b16 %v294
      %v646 = vunpack.c.l.b16 %v295
      %v647 = vunpack.c.l.b16 %v296
      %v648 = vunpack.c.l.b16 %v297
      %v649 = vunpack.c.l.b16 %v298
      %v650 = vunpack.c.l.b16 %v299
      %v651 = vunpack.c.l.b16 %v300
      %v652 = vunpack.c.l.b16 %v301
      %v653 = vunpack.c.l.b16 %v302
      %v654 = vunpack.c.l.b16 %v303
      %v655 = vunpack.c.l.b16 %v304
      %v656 = vunpack.c.l.b16 %v305
      %v657 = vunpack.c.l.b16 %v306
      %v658 = vunpack.c.l.b16 %v307
      %v659 = vunpack.c.l.b16 %v308
      %v660 = vunpack.c.l.b16 %v309
      %v661 = vunpack.c.l.b16 %v310
      %v662 = vunpack.c.l.b16 %v311
      %v663 = vunpack.c.l.b16 %v312
      %v664 = vunpack.c.l.b16 %v313
      %v665 = vunpack.c.l.b16 %v314
      %v666 = vunpack.c.l.b16 %v315
      %v667 = vunpack.c.l.b16 %v316
      %v668 = vunpack.c.l.b16 %v317
      %v669 = vunpack.c.l.b16 %v318
      %v670 = vunpack.c.l.b16 %v319
      %v671 = vunpack.c.l.b16 %v320
      %v672 = vunpack.c.l.b16 %v321
      %v673 = vunpack.c.l.b16 %v322
      %v674 = vunpack.c.l.b16 %v323
      %v675 = vunpack.c.l.b16 %v324
      %v676 = vunpack.c.l.b16 %v325
      %v677 = vunpack.c.l.b16 %v326
      %v678 = vunpack.c.l.b16 %v327
      %v679 = vunpack.c.l.b16 %v328
      %v680 = vunpack.c.l.b16 %v329
      %v681 = vunpack.c.l.b16 %v330
      %v682 = vunpack.c.l.b16 %v331
      %v683 = vunpack.c.l.b16 %v332
      %v684 = vunpack.c.l.b16 %v333
      %v685 = vunpack.c.l.b16 %v334
      %v686 = vunpack.c.l.b16 %v335
      %v687 = vunpack.c.l.b16 %v336
      %v688 = vunpack.c.l.b16 %v337
      %v689 = vunpack.c.l.b16 %v338
      %v690 = vunpack.c.l.b16 %v339
      %v691 = vunpack.c.l.b16 %v340
      %v692 = vunpack.c.l.b16 %v341
      %v693 = vunpack.c.l.b16 %v342
      %v694 = vunpack.c.l.b16 %v343
      %v695 = vpack.c.b16 %v624, %v623
      %v696 = vpack.c.b16 %v626, %v625
      %v697 = vpack.c.b16 %v628, %v627
      %v698 = vpack.c.b16 %v630, %v629
      %v699 = vpack.c.b16 %v632, %v631
      %v700 = vpack.c.b16 %v634, %v633
      %v701 = vpack.c.b16 %v636, %v635
      %v702 = vpack.c.b16 %v638, %v637
      %v703 = vpack.c.b16 %v640, %v639
      %v704 = vpack.c.b16 %v642, %v641
      %v705 = vpack.c.b16 %v644, %v643
      %v706 = vpack.c.b16 %v646, %v645
      %v707 = vpack.c.b16 %v648, %v647
      %v708 = vpack.c.b16 %v650, %v649
      %v709 = vpack.c.b16 %v652, %v651
      %v710 = vpack.c.b16 %v654, %v653
      %v711 = vpack.c.b16 %v656, %v655
      %v712 = vpack.c.b16 %v658, %v657
      %v713 = vpack.c.b16 %v660, %v659
      %v714 = vpack.c.b16 %v662, %v661
      %v715 = vpack.c.b16 %v664, %v663
      %v716 = vpack.c.b16 %v666, %v665
      %v717 = vpack.c.b16 %v668, %v667
      %v718 = vpack.c.b16 %v670, %v669
      %v719 = vpack.c.b16 %v672, %v671
      %v720 = vpack.c.b16 %v674, %v673
      %v721 = vpack.c.b16 %v676, %v675
      %v722 = vpack.c.b16 %v678, %v677
      %v723 = vpack.c.b16 %v680, %v679
      %v724 = vpack.c.b16 %v682, %v681
      %v725 = vpack.c.b16 %v684, %v683
      %v726 = vpack.c.b16 %v686, %v685
      %v727 = vpack.c.b16 %v688, %v687
      %v728 = vpack.c.b16 %v690, %v689
      %v729 = vpack.c.b16 %v692, %v691
      %v730 = vpack.c.b16 %v694, %v693
      %vm767 = vcmask 523264
      %v769 = vsel %vm767, %v483, 0
      %v772 = vsel %vm767, %v488, 0
      %v775 = vsel %vm767, %v493, 0
      %v778 = vsel %vm767, %v498, 0
      %v781 = vsel %vm767, %v503, 0
      %v784 = vsel %vm767, %v508, 0
      %v787 = vsel %vm767, %v513, 0
      %v790 = vsel %vm767, %v518, 0
      %792 = vmatprep.subr.bf16.mxu0 0
      %793 = vmatpush1.bf16.msra.mxu0 %v702
      %794 = vmatprep.subr.bf16.mxu0 0
      %795 = vmatpush1.bf16.msra.mxu0 %v701
      %796 = vmatprep.subr.bf16.mxu0 0
      %797 = vmatpush1.bf16.msra.mxu0 %v700
      %798 = vmatprep.subr.bf16.mxu0 0
      %799 = vmatpush1.bf16.msra.mxu0 %v699
      %800 = vmatprep.subr.bf16.mxu0 0
      %801 = vmatpush1.bf16.msra.mxu0 %v698
      %802 = vmatprep.subr.bf16.mxu0 0
      %803 = vmatpush1.bf16.msra.mxu0 %v697
      %804 = vmatprep.subr.bf16.mxu0 0
      %805 = vmatpush1.bf16.msra.mxu0 %v696
      %806 = vmatprep.subr.bf16.mxu0 0
      %807 = vmatpush1.bf16.msra.mxu0 %v695
      %808 = vmatprep.subr.bf16.mxu0 0
      %809 = vmatpush2.bf16.msra.mxu0 %v710
      %810 = vmatprep.subr.bf16.mxu0 0
      %811 = vmatpush2.bf16.msra.mxu0 %v709
      %812 = vmatprep.subr.bf16.mxu0 0
      %813 = vmatpush2.bf16.msra.mxu0 %v708
      %814 = vmatprep.subr.bf16.mxu0 0
      %815 = vmatpush2.bf16.msra.mxu0 %v707
      %816 = vmatprep.subr.bf16.mxu0 0
      %817 = vmatpush2.bf16.msra.mxu0 %v706
      %818 = vmatprep.subr.bf16.mxu0 0
      %819 = vmatpush2.bf16.msra.mxu0 %v705
      %820 = vmatprep.subr.bf16.mxu0 0
      %821 = vmatpush2.bf16.msra.mxu0 %v704
      %822 = vmatprep.subr.bf16.mxu0 0
      %823 = vmatpush2.bf16.msra.mxu0 %v703
      %824 = vmatprep.mubr.bf16.mxu0 %v480
      %825 = vmatmul.mubr.bf16.gmra.mxu0 %v479
      %v826 = vpop.f32.mrf.mxu0
      %v827 = vadd.f32 %v349, %v826
      %v828 = vpop.f32.mrf.mxu0
      %v829 = vpop.f32.mrf.mxu0
      %v830 = vadd.f32 %v349, %v829
      %v831 = vpop.f32.mrf.mxu0
      %832 = vmatprep.mubr.bf16.mxu0 %v485
      %833 = vmatmul.mubr.bf16.gmra.mxu0 %v484
      %v834 = vpop.f32.mrf.mxu0
      %v835 = vadd.f32 %v349, %v834
      %v836 = vpop.f32.mrf.mxu0
      %v837 = vpop.f32.mrf.mxu0
      %v838 = vadd.f32 %v349, %v837
      %v839 = vpop.f32.mrf.mxu0
      %840 = vmatprep.mubr.bf16.mxu0 %v490
      %841 = vmatmul.mubr.bf16.gmra.mxu0 %v489
      %v842 = vpop.f32.mrf.mxu0
      %v843 = vadd.f32 %v349, %v842
      %v844 = vpop.f32.mrf.mxu0
      %v845 = vpop.f32.mrf.mxu0
      %v846 = vadd.f32 %v349, %v845
      %v847 = vpop.f32.mrf.mxu0
      %848 = vmatprep.mubr.bf16.mxu0 %v495
      %849 = vmatmul.mubr.bf16.gmra.mxu0 %v494
      %v850 = vpop.f32.mrf.mxu0
      %v851 = vadd.f32 %v349, %v850
      %v852 = vpop.f32.mrf.mxu0
      %v853 = vpop.f32.mrf.mxu0
      %v854 = vadd.f32 %v349, %v853
      %v855 = vpop.f32.mrf.mxu0
      %856 = vmatprep.mubr.bf16.mxu0 %v500
      %857 = vmatmul.mubr.bf16.gmra.mxu0 %v499
      %v858 = vpop.f32.mrf.mxu0
      %v859 = vadd.f32 %v349, %v858
      %v860 = vpop.f32.mrf.mxu0
      %v861 = vpop.f32.mrf.mxu0
      %v862 = vadd.f32 %v349, %v861
      %v863 = vpop.f32.mrf.mxu0
      %864 = vmatprep.mubr.bf16.mxu0 %v505
      %865 = vmatmul.mubr.bf16.gmra.mxu0 %v504
      %v866 = vpop.f32.mrf.mxu0
      %v867 = vadd.f32 %v349, %v866
      %v868 = vpop.f32.mrf.mxu0
      %v869 = vpop.f32.mrf.mxu0
      %v870 = vadd.f32 %v349, %v869
      %v871 = vpop.f32.mrf.mxu0
      %872 = vmatprep.mubr.bf16.mxu0 %v510
      %873 = vmatmul.mubr.bf16.gmra.mxu0 %v509
      %v874 = vpop.f32.mrf.mxu0
      %v875 = vadd.f32 %v349, %v874
      %v876 = vpop.f32.mrf.mxu0
      %v877 = vpop.f32.mrf.mxu0
      %v878 = vadd.f32 %v349, %v877
      %v879 = vpop.f32.mrf.mxu0
      %880 = vmatprep.mubr.bf16.mxu0 %v515
      %881 = vmatmul.mubr.bf16.gmra.mxu0 %v514
      %v882 = vpop.f32.mrf.mxu0
      %v883 = vadd.f32 %v349, %v882
      %v884 = vpop.f32.mrf.mxu0
      %v885 = vpop.f32.mrf.mxu0
      %v886 = vadd.f32 %v349, %v885
      %v887 = vpop.f32.mrf.mxu0
      %888 = vdwg.mxu0
      %889 = vmatprep.subr.bf16.mxu0 0
      %890 = vmatpush1.bf16.msra.mxu0 %v718
      %891 = vmatprep.subr.bf16.mxu0 0
      %892 = vmatpush1.bf16.msra.mxu0 %v717
      %893 = vmatprep.subr.bf16.mxu0 0
      %894 = vmatpush1.bf16.msra.mxu0 %v716
      %895 = vmatprep.subr.bf16.mxu0 0
      %896 = vmatpush1.bf16.msra.mxu0 %v715
      %897 = vmatprep.subr.bf16.mxu0 0
      %898 = vmatpush1.bf16.msra.mxu0 %v714
      %899 = vmatprep.subr.bf16.mxu0 0
      %900 = vmatpush1.bf16.msra.mxu0 %v713
      %901 = vmatprep.subr.bf16.mxu0 0
      %902 = vmatpush1.bf16.msra.mxu0 %v712
      %903 = vmatprep.subr.bf16.mxu0 0
      %904 = vmatpush1.bf16.msra.mxu0 %v711
      %905 = vmatprep.subr.bf16.mxu0 0
      %906 = vmatpush2.bf16.msra.mxu0 %v726
      %907 = vmatprep.subr.bf16.mxu0 0
      %908 = vmatpush2.bf16.msra.mxu0 %v725
      %909 = vmatprep.subr.bf16.mxu0 0
      %910 = vmatpush2.bf16.msra.mxu0 %v724
      %911 = vmatprep.subr.bf16.mxu0 0
      %912 = vmatpush2.bf16.msra.mxu0 %v723
      %913 = vmatprep.subr.bf16.mxu0 0
      %914 = vmatpush2.bf16.msra.mxu0 %v722
      %915 = vmatprep.subr.bf16.mxu0 0
      %916 = vmatpush2.bf16.msra.mxu0 %v721
      %917 = vmatprep.subr.bf16.mxu0 0
      %918 = vmatpush2.bf16.msra.mxu0 %v720
      %919 = vmatprep.subr.bf16.mxu0 0
      %920 = vmatpush2.bf16.msra.mxu0 %v719
      %921 = vmatprep.mubr.bf16.mxu0 %v482
      %922 = vmatmul.mubr.bf16.gmra.mxu0 %v481
      %v923 = vpop.f32.mrf.mxu0
      %v924 = vadd.f32 %v827, %v923
      %v925 = vpop.f32.mrf.mxu0
      %v926 = vpop.f32.mrf.mxu0
      %v927 = vadd.f32 %v830, %v926
      %v928 = vpop.f32.mrf.mxu0
      %929 = vmatprep.mubr.bf16.mxu0 %v487
      %930 = vmatmul.mubr.bf16.gmra.mxu0 %v486
      %v931 = vpop.f32.mrf.mxu0
      %v932 = vadd.f32 %v835, %v931
      %v933 = vpop.f32.mrf.mxu0
      %v934 = vpop.f32.mrf.mxu0
      %v935 = vadd.f32 %v838, %v934
      %v936 = vpop.f32.mrf.mxu0
      %937 = vmatprep.mubr.bf16.mxu0 %v492
      %938 = vmatmul.mubr.bf16.gmra.mxu0 %v491
      %v939 = vpop.f32.mrf.mxu0
      %v940 = vadd.f32 %v843, %v939
      %v941 = vpop.f32.mrf.mxu0
      %v942 = vpop.f32.mrf.mxu0
      %v943 = vadd.f32 %v846, %v942
      %v944 = vpop.f32.mrf.mxu0
      %945 = vmatprep.mubr.bf16.mxu0 %v497
      %946 = vmatmul.mubr.bf16.gmra.mxu0 %v496
      %v947 = vpop.f32.mrf.mxu0
      %v948 = vadd.f32 %v851, %v947
      %v949 = vpop.f32.mrf.mxu0
      %v950 = vpop.f32.mrf.mxu0
      %v951 = vadd.f32 %v854, %v950
      %v952 = vpop.f32.mrf.mxu0
      %953 = vmatprep.mubr.bf16.mxu0 %v502
      %954 = vmatmul.mubr.bf16.gmra.mxu0 %v501
      %v955 = vpop.f32.mrf.mxu0
      %v956 = vadd.f32 %v859, %v955
      %v957 = vpop.f32.mrf.mxu0
      %v958 = vpop.f32.mrf.mxu0
      %v959 = vadd.f32 %v862, %v958
      %v960 = vpop.f32.mrf.mxu0
      %961 = vmatprep.mubr.bf16.mxu0 %v507
      %962 = vmatmul.mubr.bf16.gmra.mxu0 %v506
      %v963 = vpop.f32.mrf.mxu0
      %v964 = vadd.f32 %v867, %v963
      %v965 = vpop.f32.mrf.mxu0
      %v966 = vpop.f32.mrf.mxu0
      %v967 = vadd.f32 %v870, %v966
      %v968 = vpop.f32.mrf.mxu0
      %969 = vmatprep.mubr.bf16.mxu0 %v512
      %970 = vmatmul.mubr.bf16.gmra.mxu0 %v511
      %v971 = vpop.f32.mrf.mxu0
      %v972 = vadd.f32 %v875, %v971
      %v973 = vpop.f32.mrf.mxu0
      %v974 = vpop.f32.mrf.mxu0
      %v975 = vadd.f32 %v878, %v974
      %v976 = vpop.f32.mrf.mxu0
      %977 = vmatprep.mubr.bf16.mxu0 %v517
      %978 = vmatmul.mubr.bf16.gmra.mxu0 %v516
      %v979 = vpop.f32.mrf.mxu0
      %v980 = vadd.f32 %v883, %v979
      %v981 = vpop.f32.mrf.mxu0
      %v982 = vpop.f32.mrf.mxu0
      %v983 = vadd.f32 %v886, %v982
      %v984 = vpop.f32.mrf.mxu0
      %985 = vdwg.mxu0
      %986 = vmatprep.subr.bf16.mxu0 0
      %987 = vmatpush1.bf16.msra.mxu0 0
      %988 = vmatprep.subr.bf16.mxu0 0
      %989 = vmatpush1.bf16.msra.mxu0 0
      %990 = vmatprep.subr.bf16.mxu0 0
      %991 = vmatpush1.bf16.msra.mxu0 0
      %992 = vmatprep.subr.bf16.mxu0 0
      %993 = vmatpush1.bf16.msra.mxu0 0
      %994 = vmatprep.subr.bf16.mxu0 0
      %995 = vmatpush1.bf16.msra.mxu0 %v730
      %996 = vmatprep.subr.bf16.mxu0 0
      %997 = vmatpush1.bf16.msra.mxu0 %v729
      %998 = vmatprep.subr.bf16.mxu0 0
      %999 = vmatpush1.bf16.msra.mxu0 %v728
      %1000 = vmatprep.subr.bf16.mxu0 0
      %1001 = vmatpush1.bf16.msra.mxu0 %v727
      %1002 = vmatprep.subr.bf16.mxu0 0
      %1003 = vmatpush2.bf16.msra.mxu0 0
      %1004 = vmatprep.subr.bf16.mxu0 0
      %1005 = vmatpush2.bf16.msra.mxu0 0
      %1006 = vmatprep.subr.bf16.mxu0 0
      %1007 = vmatpush2.bf16.msra.mxu0 0
      %1008 = vmatprep.subr.bf16.mxu0 0
      %1009 = vmatpush2.bf16.msra.mxu0 0
      %1010 = vmatprep.subr.bf16.mxu0 0
      %1011 = vmatpush2.bf16.msra.mxu0 0
      %1012 = vmatprep.subr.bf16.mxu0 0
      %1013 = vmatpush2.bf16.msra.mxu0 0
      %1014 = vmatprep.subr.bf16.mxu0 0
      %1015 = vmatpush2.bf16.msra.mxu0 0
      %1016 = vmatprep.subr.bf16.mxu0 0
      %1017 = vmatpush2.bf16.msra.mxu0 0
      %1018 = vmatprep.mubr.bf16.mxu0 0
      %1019 = vmatmul.mubr.bf16.gmra.mxu0 %v769
      %v1020 = vpop.f32.mrf.mxu0
      %v1021 = vadd.f32 %v924, %v1020
      %v1022 = vpop.f32.mrf.mxu0
      %v1023 = vpop.f32.mrf.mxu0
      %v1024 = vadd.f32 %v927, %v1023
      %v1025 = vpop.f32.mrf.mxu0
      %1026 = vmatprep.mubr.bf16.mxu0 0
      %1027 = vmatmul.mubr.bf16.gmra.mxu0 %v772
      %v1028 = vpop.f32.mrf.mxu0
      %v1029 = vadd.f32 %v932, %v1028
      %v1030 = vpop.f32.mrf.mxu0
      %v1031 = vpop.f32.mrf.mxu0
      %v1032 = vadd.f32 %v935, %v1031
      %v1033 = vpop.f32.mrf.mxu0
      %1034 = vmatprep.mubr.bf16.mxu0 0
      %1035 = vmatmul.mubr.bf16.gmra.mxu0 %v775
      %v1036 = vpop.f32.mrf.mxu0
      %v1037 = vadd.f32 %v940, %v1036
      %v1038 = vpop.f32.mrf.mxu0
      %v1039 = vpop.f32.mrf.mxu0
      %v1040 = vadd.f32 %v943, %v1039
      %v1041 = vpop.f32.mrf.mxu0
      %1042 = vmatprep.mubr.bf16.mxu0 0
      %1043 = vmatmul.mubr.bf16.gmra.mxu0 %v778
      %v1044 = vpop.f32.mrf.mxu0
      %v1045 = vadd.f32 %v948, %v1044
      %v1046 = vpop.f32.mrf.mxu0
      %v1047 = vpop.f32.mrf.mxu0
      %v1048 = vadd.f32 %v951, %v1047
      %v1049 = vpop.f32.mrf.mxu0
      %1050 = vmatprep.mubr.bf16.mxu0 0
      %1051 = vmatmul.mubr.bf16.gmra.mxu0 %v781
      %v1052 = vpop.f32.mrf.mxu0
      %v1053 = vadd.f32 %v956, %v1052
      %v1054 = vpop.f32.mrf.mxu0
      %v1055 = vpop.f32.mrf.mxu0
      %v1056 = vadd.f32 %v959, %v1055
      %v1057 = vpop.f32.mrf.mxu0
      %1058 = vmatprep.mubr.bf16.mxu0 0
      %1059 = vmatmul.mubr.bf16.gmra.mxu0 %v784
      %v1060 = vpop.f32.mrf.mxu0
      %v1061 = vadd.f32 %v964, %v1060
      %v1062 = vpop.f32.mrf.mxu0
      %v1063 = vpop.f32.mrf.mxu0
      %v1064 = vadd.f32 %v967, %v1063
      %v1065 = vpop.f32.mrf.mxu0
      %1066 = vmatprep.mubr.bf16.mxu0 0
      %1067 = vmatmul.mubr.bf16.gmra.mxu0 %v787
      %v1068 = vpop.f32.mrf.mxu0
      %v1069 = vadd.f32 %v972, %v1068
      %v1070 = vpop.f32.mrf.mxu0
      %v1071 = vpop.f32.mrf.mxu0
      %v1072 = vadd.f32 %v975, %v1071
      %v1073 = vpop.f32.mrf.mxu0
      %1074 = vmatprep.mubr.bf16.mxu0 0
      %1075 = vmatmul.mubr.bf16.gmra.mxu0 %v790
      %v1076 = vpop.f32.mrf.mxu0
      %v1077 = vadd.f32 %v980, %v1076
      %v1078 = vpop.f32.mrf.mxu0
      %v1079 = vpop.f32.mrf.mxu0
      %v1080 = vadd.f32 %v983, %v1079
      %v1081 = vpop.f32.mrf.mxu0
      %1082 = vdwg.mxu0
      %v1083 = vmax.f32 %v1021, 0.0
      %v1084 = vmax.f32 %v1024, 0.0
      %v1085 = vmax.f32 %v1029, 0.0
      %v1086 = vmax.f32 %v1032, 0.0
      %v1087 = vmax.f32 %v1037, 0.0
      %v1088 = vmax.f32 %v1040, 0.0
      %v1089 = vmax.f32 %v1045, 0.0
      %v1090 = vmax.f32 %v1048, 0.0
      %v1091 = vmax.f32 %v1053, 0.0
      %v1092 = vmax.f32 %v1056, 0.0
      %v1093 = vmax.f32 %v1061, 0.0
      %v1094 = vmax.f32 %v1064, 0.0
      %v1095 = vmax.f32 %v1069, 0.0
      %v1096 = vmax.f32 %v1072, 0.0
      %v1097 = vmax.f32 %v1077, 0.0
      %v1098 = vmax.f32 %v1080, 0.0
      %v1099 = vld [vmem:[#allocation2] sm:$0xff]
      %v1100 = vld [vmem:[#allocation2 + $0x8] sm:$0xff]
      %v1101 = vld [vmem:[#allocation2 + $0x10] sm:$0xff]
      %v1102 = vld [vmem:[#allocation2 + $0x18] sm:$0xff]
      %v1103 = vld [vmem:[#allocation2 + $0x20] sm:$0xff]
      %v1104 = vld [vmem:[#allocation2 + $0x28] sm:$0xff]
      %v1105 = vld [vmem:[#allocation2 + $0x30] sm:$0xff]
      %v1106 = vld [vmem:[#allocation2 + $0x38] sm:$0xff]
      %v1107 = vld [vmem:[#allocation2 + $0x40] sm:$0xff]
      %v1108 = vld [vmem:[#allocation2 + $0x48] sm:$0xff]
      %v1109 = vld [vmem:[#allocation2 + $0x50] sm:$0xff]
      %v1110 = vld [vmem:[#allocation2 + $0x58] sm:$0xff]
      %v1111 = vld [vmem:[#allocation2 + $0x60] sm:$0xff]
      %v1112 = vld [vmem:[#allocation2 + $0x68] sm:$0xff]
      %v1113 = vld [vmem:[#allocation2 + $0x70] sm:$0xff]
      %v1114 = vld [vmem:[#allocation2 + $0x78] sm:$0xff]
      %v1115 = vmax.f32 %v1099, %v1083
      %v1116 = vmax.f32 %v1100, %v1084
      %v1117 = vmax.f32 %v1101, %v1085
      %v1118 = vmax.f32 %v1102, %v1086
      %v1119 = vmax.f32 %v1103, %v1087
      %v1120 = vmax.f32 %v1104, %v1088
      %v1121 = vmax.f32 %v1105, %v1089
      %v1122 = vmax.f32 %v1106, %v1090
      %v1123 = vmax.f32 %v1107, %v1091
      %v1124 = vmax.f32 %v1108, %v1092
      %v1125 = vmax.f32 %v1109, %v1093
      %v1126 = vmax.f32 %v1110, %v1094
      %v1127 = vmax.f32 %v1111, %v1095
      %v1128 = vmax.f32 %v1112, %v1096
      %v1129 = vmax.f32 %v1113, %v1097
      %v1130 = vmax.f32 %v1114, %v1098
      %1131 = vst [vmem:[#allocation2] sm:$0xff] %v1115
      %1132 = vst [vmem:[#allocation2 + $0x8] sm:$0xff] %v1116
      %1133 = vst [vmem:[#allocation2 + $0x10] sm:$0xff] %v1117
      %1134 = vst [vmem:[#allocation2 + $0x18] sm:$0xff] %v1118
      %1135 = vst [vmem:[#allocation2 + $0x20] sm:$0xff] %v1119
      %1136 = vst [vmem:[#allocation2 + $0x28] sm:$0xff] %v1120
      %1137 = vst [vmem:[#allocation2 + $0x30] sm:$0xff] %v1121
      %1138 = vst [vmem:[#allocation2 + $0x38] sm:$0xff] %v1122
      %1139 = vst [vmem:[#allocation2 + $0x40] sm:$0xff] %v1123
      %1140 = vst [vmem:[#allocation2 + $0x48] sm:$0xff] %v1124
      %1141 = vst [vmem:[#allocation2 + $0x50] sm:$0xff] %v1125
      %1142 = vst [vmem:[#allocation2 + $0x58] sm:$0xff] %v1126
      %1143 = vst [vmem:[#allocation2 + $0x60] sm:$0xff] %v1127
      %1144 = vst [vmem:[#allocation2 + $0x68] sm:$0xff] %v1128
      %1145 = vst [vmem:[#allocation2 + $0x70] sm:$0xff] %v1129
      %1146 = vst [vmem:[#allocation2 + $0x78] sm:$0xff] %v1130
      %p1147 = scmp.eq.s32.totalorder %s19, 3
      // Predicated region
      $region37: #{video_frame_transformer.5} parent=31 // pred_check
        %p1148 = pneg %p1147
      $region38: #{video_frame_transformer.5} parent=31 // pred_check_branch
        %1150 = sbr.rel (%p1148) target = $region40
      $region39: #{video_frame_transformer.5} parent=31 // pred_region
        %v1151 = vld [vmem:[#allocation2] sm:$0xff]
        %v1152 = vld [vmem:[#allocation2 + $0x8] sm:$0xff]
        %v1153 = vld [vmem:[#allocation2 + $0x10] sm:$0xff]
        %v1154 = vld [vmem:[#allocation2 + $0x18] sm:$0xff]
        %v1155 = vld [vmem:[#allocation2 + $0x20] sm:$0xff]
        %v1156 = vld [vmem:[#allocation2 + $0x28] sm:$0xff]
        %v1157 = vld [vmem:[#allocation2 + $0x30] sm:$0xff]
        %v1158 = vld [vmem:[#allocation2 + $0x38] sm:$0xff]
        %v1159 = vld [vmem:[#allocation2 + $0x40] sm:$0xff]
        %v1160 = vld [vmem:[#allocation2 + $0x48] sm:$0xff]
        %v1161 = vld [vmem:[#allocation2 + $0x50] sm:$0xff]
        %v1162 = vld [vmem:[#allocation2 + $0x58] sm:$0xff]
        %v1163 = vld [vmem:[#allocation2 + $0x60] sm:$0xff]
        %v1164 = vld [vmem:[#allocation2 + $0x68] sm:$0xff]
        %v1165 = vld [vmem:[#allocation2 + $0x70] sm:$0xff]
        %v1166 = vld [vmem:[#allocation2 + $0x78] sm:$0xff]
        %v1167 = vpack.c.bf16 %v1152, %v1151
        %v1168 = vpack.c.bf16 %v1154, %v1153
        %v1169 = vpack.c.bf16 %v1156, %v1155
        %v1170 = vpack.c.bf16 %v1158, %v1157
        %v1171 = vpack.c.bf16 %v1160, %v1159
        %v1172 = vpack.c.bf16 %v1162, %v1161
        %v1173 = vpack.c.bf16 %v1164, %v1163
        %v1174 = vpack.c.bf16 %v1166, %v1165
        %v1183 = vunpack.c.l.b16 %v1167
        %v1184 = vunpack.c.h.b16 %v1167
        %v1185 = vunpack.c.l.b16 %v1168
        %v1186 = vunpack.c.h.b16 %v1168
        %v1187 = vunpack.c.l.b16 %v1169
        %v1188 = vunpack.c.h.b16 %v1169
        %v1189 = vunpack.c.l.b16 %v1170
        %v1190 = vunpack.c.h.b16 %v1170
        %v1191 = vunpack.c.l.b16 %v1171
        %v1192 = vunpack.c.h.b16 %v1171
        %v1193 = vunpack.c.l.b16 %v1172
        %v1194 = vunpack.c.h.b16 %v1172
        %v1195 = vunpack.c.l.b16 %v1173
        %v1196 = vunpack.c.h.b16 %v1173
        %v1197 = vunpack.c.l.b16 %v1174
        %v1198 = vunpack.c.h.b16 %v1174
        %v1199 = vpack.c.b16 %v1183, %v1183
        %v1200 = vpack.c.b16 %v1184, %v1184
        %v1201 = vpack.c.b16 %v1185, %v1185
        %v1202 = vpack.c.b16 %v1186, %v1186
        %v1203 = vpack.c.b16 %v1187, %v1187
        %v1204 = vpack.c.b16 %v1188, %v1188
        %v1205 = vpack.c.b16 %v1189, %v1189
        %v1206 = vpack.c.b16 %v1190, %v1190
        %v1207 = vpack.c.b16 %v1191, %v1191
        %v1208 = vpack.c.b16 %v1192, %v1192
        %v1209 = vpack.c.b16 %v1193, %v1193
        %v1210 = vpack.c.b16 %v1194, %v1194
        %v1211 = vpack.c.b16 %v1195, %v1195
        %v1212 = vpack.c.b16 %v1196, %v1196
        %v1213 = vpack.c.b16 %v1197, %v1197
        %v1214 = vpack.c.b16 %v1198, %v1198
        %1231 = vst [vmem:[%s201] sm:$0xf] %v1199
        %1232 = vst [vmem:[%s201 + $0x4] sm:$0xf] %v1200
        %1233 = vst [vmem:[%s201 + $0x8] sm:$0xf] %v1201
        %1234 = vst [vmem:[%s201 + $0xc] sm:$0xf] %v1202
        %1235 = vst [vmem:[%s201 + $0x10] sm:$0xf] %v1203
        %1236 = vst [vmem:[%s201 + $0x14] sm:$0xf] %v1204
        %1237 = vst [vmem:[%s201 + $0x18] sm:$0xf] %v1205
        %1238 = vst [vmem:[%s201 + $0x1c] sm:$0xf] %v1206
        %1239 = vst [vmem:[%s201 + $0x20] sm:$0xf] %v1207
        %1240 = vst [vmem:[%s201 + $0x24] sm:$0xf] %v1208
        %1241 = vst [vmem:[%s201 + $0x28] sm:$0xf] %v1209
        %1242 = vst [vmem:[%s201 + $0x2c] sm:$0xf] %v1210
        %1243 = vst [vmem:[%s201 + $0x30] sm:$0xf] %v1211
        %1244 = vst [vmem:[%s201 + $0x34] sm:$0xf] %v1212
        %1245 = vst [vmem:[%s201 + $0x38] sm:$0xf] %v1213
        %1246 = vst [vmem:[%s201 + $0x3c] sm:$0xf] %v1214
      $region40: #{video_frame_transformer.5} parent=31 // pred_fallthru
        _
      %s1247 = smul.u32 16, %s18
      %p1248 = scmp.lt.s32.totalorder %s1247, 15
      %s1249 = scalar_select %p1248, %s1247, 15
      %s1250 = smul.addr %s1249, 4
      %s1251 = scalar_lea.vmem %s3, %s1250
      // Predicated region
      $region41: #{video_frame_transformer.5} parent=31 // pred_check
        %p1252 = pneg %p114
      $region42: #{video_frame_transformer.5} parent=31 // pred_check_branch
        %1254 = sbr.rel (%p1252) target = $region44
      $region43: #{video_frame_transformer.5} parent=31 // pred_region
        %s1255 = smul.u32 16, %s18
      $region44: #{video_frame_transformer.5} parent=31 // pred_fallthru
        _
      // Predicated region
      $region45: #{video_frame_transformer.5} parent=31 // pred_check
        %p1256 = pneg %p114
      $region46: #{video_frame_transformer.5} parent=31 // pred_check_branch
        %1258 = sbr.rel (%p1256) target = $region48
      $region47: #{video_frame_transformer.5} parent=31 // pred_region
        %s1259 = smul.u32 16, %s18
        %p1260 = scmp.lt.s32.totalorder %s1259, 15
        %s1261 = scalar_select %p1260, %s1259, 15
        %s1262 = smul.addr %s1261, 4
        %s1263 = scalar_lea.vmem %s3, %s1262
      $region48: #{video_frame_transformer.5} parent=31 // pred_fallthru
        _
    $region32: #{video_frame_transformer.5} parent=5 // pred_fallthru
      _
    %p1264 = scmp.le.s32.totalorder 2, %s9
    // Predicated region
    $region49: #{video_frame_transformer.5} parent=5 // pred_check
      %p1265 = pneg %p1264
    $region50: #{video_frame_transformer.5} parent=5 // pred_check_branch
      %1267 = sbr.rel (%p1265) target = $region52
    $region51: #{video_frame_transformer.5} parent=5 // pred_region
      %s1268 = ssub.s32 %s9, 2
    $region52: #{video_frame_transformer.5} parent=5 // pred_fallthru
      _
  $region6: #{video_frame_transformer.5} parent=0 // loop_footer
    %s13 = sadd.s32 1, %s9
  $region7: #{video_frame_transformer.5} parent=0 // loop_footer_branch
    %8 = sbr.rel target = $region3
  $region8: #{video_frame_transformer.5} parent=0 // loop_exit
    _

// kernel: video_frame_transformer.6
$region0: #{video_frame_transformer.6}
  #allocation0 [shape = 'u32[]', space=smem, size = 0x4, offset = 0x4, fixed_abs, tag = 'smem constant byte address 0x4 - core index']
  #allocation1 [shape = 'u32[144,128]{1,0:T(1,128)}', space=vmem, size = 0x12000, scoped, tag = 'internal scratch']
  %s0 = inlined_call_operand.vmem [shape: bf16[128,128], index: 0, kind: input, shape index: {}]
  %s1 = inlined_call_operand.vmem [shape: bf16[128,256], index: 1, kind: input, shape index: {}]
  %s2 = inlined_call_operand.vmem [shape: f32[1,256], index: 2, kind: input, shape index: {}]
  %s3 = inlined_call_operand.vmem [shape: bf16[128,256], index: 3, kind: output, shape index: {}]
  %s4 = sld [smem:[#allocation0]]
  $region22: #{video_frame_transformer.6} parent=0
    _
  %s6 = ssub.s32 1, %s4
  %s7 = scalar_select 0, %s6, %s4
  // Predicated region
  $region2: #{video_frame_transformer.6} parent=0 // pred_check
    _
  $region3: #{video_frame_transformer.6} parent=0 // pred_check_branch
    %9 = sbr.rel (0) target = $region5
  $region4: #{video_frame_transformer.6} parent=0 // pred_region
    _
  $region5: #{video_frame_transformer.6} parent=0 // pred_fallthru
    _
  // Predicated region
  $region6: #{video_frame_transformer.6} parent=0 // pred_check
    _
  $region7: #{video_frame_transformer.6} parent=0 // pred_check_branch
    %11 = sbr.rel (0) target = $region9
  $region8: #{video_frame_transformer.6} parent=0 // pred_region
    _
  $region9: #{video_frame_transformer.6} parent=0 // pred_fallthru
    _
  // Predicated region
  $region10: #{video_frame_transformer.6} parent=0 // pred_check
    _
  $region11: #{video_frame_transformer.6} parent=0 // pred_check_branch
    %13 = sbr.rel (0) target = $region13
  $region12: #{video_frame_transformer.6} parent=0 // pred_region
    _
  $region13: #{video_frame_transformer.6} parent=0 // pred_fallthru
    _
  %v15 = vld [vmem:[%s0] sm:$0xf]
  %v16 = vld [vmem:[%s0 + $0x4] sm:$0xf]
  %v17 = vld [vmem:[%s0 + $0x8] sm:$0xf]
  %v18 = vld [vmem:[%s0 + $0xc] sm:$0xf]
  %v19 = vld [vmem:[%s0 + $0x10] sm:$0xf]
  %v20 = vld [vmem:[%s0 + $0x14] sm:$0xf]
  %v21 = vld [vmem:[%s0 + $0x18] sm:$0xf]
  %v22 = vld [vmem:[%s0 + $0x1c] sm:$0xf]
  %v23 = vld [vmem:[%s0 + $0x20] sm:$0xf]
  %v24 = vld [vmem:[%s0 + $0x24] sm:$0xf]
  %v25 = vld [vmem:[%s0 + $0x28] sm:$0xf]
  %v26 = vld [vmem:[%s0 + $0x2c] sm:$0xf]
  %v27 = vld [vmem:[%s0 + $0x30] sm:$0xf]
  %v28 = vld [vmem:[%s0 + $0x34] sm:$0xf]
  %v29 = vld [vmem:[%s0 + $0x38] sm:$0xf]
  %v30 = vld [vmem:[%s0 + $0x3c] sm:$0xf]
  %v31 = vld [vmem:[%s1] sm:$0xff]
  %v32 = vld [vmem:[%s1 + $0x8] sm:$0xff]
  %v33 = vld [vmem:[%s1 + $0x10] sm:$0xff]
  %v34 = vld [vmem:[%s1 + $0x18] sm:$0xff]
  %v35 = vld [vmem:[%s1 + $0x20] sm:$0xff]
  %v36 = vld [vmem:[%s1 + $0x28] sm:$0xff]
  %v37 = vld [vmem:[%s1 + $0x30] sm:$0xff]
  %v38 = vld [vmem:[%s1 + $0x38] sm:$0xff]
  %v39 = vld [vmem:[%s1 + $0x40] sm:$0xff]
  %v40 = vld [vmem:[%s1 + $0x48] sm:$0xff]
  %v41 = vld [vmem:[%s1 + $0x50] sm:$0xff]
  %v42 = vld [vmem:[%s1 + $0x58] sm:$0xff]
  %v43 = vld [vmem:[%s1 + $0x60] sm:$0xff]
  %v44 = vld [vmem:[%s1 + $0x68] sm:$0xff]
  %v45 = vld [vmem:[%s1 + $0x70] sm:$0xff]
  %v46 = vld [vmem:[%s1 + $0x78] sm:$0xff]
  %v47 = vld [vmem:[%s2] sm:$0x3]
  %v49 = vlaneseq
  %v50 = vshrl.u32 %v49, 7
  %v51 = vsub.s32 0, %v50
  %v52 = vrot.slane %v47, %v51
  %v53 = vlaneseq
  %v54 = vshrl.u32 %v53, 7
  %v55 = vsub.s32 1, %v54
  %v56 = vrot.slane %v47, %v55
  %v75 = vunpack.c.l.b16 %v15
  %v76 = vunpack.c.l.b16 %v16
  %v77 = vunpack.c.l.b16 %v17
  %v78 = vunpack.c.l.b16 %v18
  %v79 = vunpack.c.l.b16 %v19
  %v80 = vunpack.c.l.b16 %v20
  %v81 = vunpack.c.l.b16 %v21
  %v82 = vunpack.c.l.b16 %v22
  %v83 = vunpack.c.l.b16 %v23
  %v84 = vunpack.c.l.b16 %v24
  %v85 = vunpack.c.l.b16 %v25
  %v86 = vunpack.c.l.b16 %v26
  %v87 = vunpack.c.l.b16 %v27
  %v88 = vunpack.c.l.b16 %v28
  %v89 = vunpack.c.l.b16 %v29
  %v90 = vunpack.c.l.b16 %v30
  %v91 = vpack.c.b16 %v76, %v75
  %v92 = vpack.c.b16 %v78, %v77
  %v93 = vpack.c.b16 %v80, %v79
  %v94 = vpack.c.b16 %v82, %v81
  %v95 = vpack.c.b16 %v84, %v83
  %v96 = vpack.c.b16 %v86, %v85
  %v97 = vpack.c.b16 %v88, %v87
  %v98 = vpack.c.b16 %v90, %v89
  %v123 = vunpack.c.l.b16 %v31
  %v124 = vunpack.c.h.b16 %v31
  %v125 = vunpack.c.l.b16 %v32
  %v126 = vunpack.c.h.b16 %v32
  %v127 = vunpack.c.l.b16 %v33
  %v128 = vunpack.c.h.b16 %v33
  %v129 = vunpack.c.l.b16 %v34
  %v130 = vunpack.c.h.b16 %v34
  %v131 = vunpack.c.l.b16 %v35
  %v132 = vunpack.c.h.b16 %v35
  %v133 = vunpack.c.l.b16 %v36
  %v134 = vunpack.c.h.b16 %v36
  %v135 = vunpack.c.l.b16 %v37
  %v136 = vunpack.c.h.b16 %v37
  %v137 = vunpack.c.l.b16 %v38
  %v138 = vunpack.c.h.b16 %v38
  %v139 = vunpack.c.l.b16 %v39
  %v140 = vunpack.c.h.b16 %v39
  %v141 = vunpack.c.l.b16 %v40
  %v142 = vunpack.c.h.b16 %v40
  %v143 = vunpack.c.l.b16 %v41
  %v144 = vunpack.c.h.b16 %v41
  %v145 = vunpack.c.l.b16 %v42
  %v146 = vunpack.c.h.b16 %v42
  %v147 = vunpack.c.l.b16 %v43
  %v148 = vunpack.c.h.b16 %v43
  %v149 = vunpack.c.l.b16 %v44
  %v150 = vunpack.c.h.b16 %v44
  %v151 = vunpack.c.l.b16 %v45
  %v152 = vunpack.c.h.b16 %v45
  %v153 = vunpack.c.l.b16 %v46
  %v154 = vunpack.c.h.b16 %v46
  %v155 = vpack.c.b16 %v125, %v123
  %v156 = vpack.c.b16 %v126, %v124
  %v157 = vpack.c.b16 %v129, %v127
  %v158 = vpack.c.b16 %v130, %v128
  %v159 = vpack.c.b16 %v133, %v131
  %v160 = vpack.c.b16 %v134, %v132
  %v161 = vpack.c.b16 %v137, %v135
  %v162 = vpack.c.b16 %v138, %v136
  %v163 = vpack.c.b16 %v141, %v139
  %v164 = vpack.c.b16 %v142, %v140
  %v165 = vpack.c.b16 %v145, %v143
  %v166 = vpack.c.b16 %v146, %v144
  %v167 = vpack.c.b16 %v149, %v147
  %v168 = vpack.c.b16 %v150, %v148
  %v169 = vpack.c.b16 %v153, %v151
  %v170 = vpack.c.b16 %v154, %v152
  %187 = vmatprep.subr.bf16.mxu0 %v170
  %188 = vmatpush1.bf16.msra.mxu0 %v169
  %189 = vmatprep.subr.bf16.mxu0 %v168
  %190 = vmatpush1.bf16.msra.mxu0 %v167
  %191 = vmatprep.subr.bf16.mxu0 %v166
  %192 = vmatpush1.bf16.msra.mxu0 %v165
  %193 = vmatprep.subr.bf16.mxu0 %v164
  %194 = vmatpush1.bf16.msra.mxu0 %v163
  %195 = vmatprep.subr.bf16.mxu0 %v162
  %196 = vmatpush1.bf16.msra.mxu0 %v161
  %197 = vmatprep.subr.bf16.mxu0 %v160
  %198 = vmatpush1.bf16.msra.mxu0 %v159
  %199 = vmatprep.subr.bf16.mxu0 %v158
  %200 = vmatpush1.bf16.msra.mxu0 %v157
  %201 = vmatprep.subr.bf16.mxu0 %v156
  %202 = vmatpush1.bf16.msra.mxu0 %v155
  %203 = vmatprep.subr.bf16.mxu0 0
  %204 = vmatpush2.bf16.msra.mxu0 0
  %205 = vmatprep.subr.bf16.mxu0 0
  %206 = vmatpush2.bf16.msra.mxu0 0
  %207 = vmatprep.subr.bf16.mxu0 0
  %208 = vmatpush2.bf16.msra.mxu0 0
  %209 = vmatprep.subr.bf16.mxu0 0
  %210 = vmatpush2.bf16.msra.mxu0 0
  %211 = vmatprep.subr.bf16.mxu0 0
  %212 = vmatpush2.bf16.msra.mxu0 0
  %213 = vmatprep.subr.bf16.mxu0 0
  %214 = vmatpush2.bf16.msra.mxu0 0
  %215 = vmatprep.subr.bf16.mxu0 0
  %216 = vmatpush2.bf16.msra.mxu0 0
  %217 = vmatprep.subr.bf16.mxu0 0
  %218 = vmatpush2.bf16.msra.mxu0 0
  %219 = vmatprep.mubr.bf16.mxu0 0
  %220 = vmatmul.mubr.bf16.gmra.mxu0 %v91
  %v221 = vpop.f32.mrf.mxu0
  %v222 = vadd.f32 %v52, %v221
  %v223 = vpop.f32.mrf.mxu0
  %v224 = vadd.f32 %v56, %v223
  %v225 = vpop.f32.mrf.mxu0
  %v226 = vadd.f32 %v52, %v225
  %v227 = vpop.f32.mrf.mxu0
  %v228 = vadd.f32 %v56, %v227
  %229 = vmatprep.mubr.bf16.mxu0 0
  %230 = vmatmul.mubr.bf16.gmra.mxu0 %v92
  %v231 = vpop.f32.mrf.mxu0
  %v232 = vadd.f32 %v52, %v231
  %v233 = vpop.f32.mrf.mxu0
  %v234 = vadd.f32 %v56, %v233
  %v235 = vpop.f32.mrf.mxu0
  %v236 = vadd.f32 %v52, %v235
  %v237 = vpop.f32.mrf.mxu0
  %v238 = vadd.f32 %v56, %v237
  %239 = vmatprep.mubr.bf16.mxu0 0
  %240 = vmatmul.mubr.bf16.gmra.mxu0 %v93
  %v241 = vpop.f32.mrf.mxu0
  %v242 = vadd.f32 %v52, %v241
  %v243 = vpop.f32.mrf.mxu0
  %v244 = vadd.f32 %v56, %v243
  %v245 = vpop.f32.mrf.mxu0
  %v246 = vadd.f32 %v52, %v245
  %v247 = vpop.f32.mrf.mxu0
  %v248 = vadd.f32 %v56, %v247
  %249 = vmatprep.mubr.bf16.mxu0 0
  %250 = vmatmul.mubr.bf16.gmra.mxu0 %v94
  %v251 = vpop.f32.mrf.mxu0
  %v252 = vadd.f32 %v52, %v251
  %v253 = vpop.f32.mrf.mxu0
  %v254 = vadd.f32 %v56, %v253
  %v255 = vpop.f32.mrf.mxu0
  %v256 = vadd.f32 %v52, %v255
  %v257 = vpop.f32.mrf.mxu0
  %v258 = vadd.f32 %v56, %v257
  %259 = vmatprep.mubr.bf16.mxu0 0
  %260 = vmatmul.mubr.bf16.gmra.mxu0 %v95
  %v261 = vpop.f32.mrf.mxu0
  %v262 = vadd.f32 %v52, %v261
  %v263 = vpop.f32.mrf.mxu0
  %v264 = vadd.f32 %v56, %v263
  %v265 = vpop.f32.mrf.mxu0
  %v266 = vadd.f32 %v52, %v265
  %v267 = vpop.f32.mrf.mxu0
  %v268 = vadd.f32 %v56, %v267
  %269 = vmatprep.mubr.bf16.mxu0 0
  %270 = vmatmul.mubr.bf16.gmra.mxu0 %v96
  %v271 = vpop.f32.mrf.mxu0
  %v272 = vadd.f32 %v52, %v271
  %v273 = vpop.f32.mrf.mxu0
  %v274 = vadd.f32 %v56, %v273
  %v275 = vpop.f32.mrf.mxu0
  %v276 = vadd.f32 %v52, %v275
  %v277 = vpop.f32.mrf.mxu0
  %v278 = vadd.f32 %v56, %v277
  %279 = vmatprep.mubr.bf16.mxu0 0
  %280 = vmatmul.mubr.bf16.gmra.mxu0 %v97
  %v281 = vpop.f32.mrf.mxu0
  %v282 = vadd.f32 %v52, %v281
  %v283 = vpop.f32.mrf.mxu0
  %v284 = vadd.f32 %v56, %v283
  %v285 = vpop.f32.mrf.mxu0
  %v286 = vadd.f32 %v52, %v285
  %v287 = vpop.f32.mrf.mxu0
  %v288 = vadd.f32 %v56, %v287
  %289 = vmatprep.mubr.bf16.mxu0 0
  %290 = vmatmul.mubr.bf16.gmra.mxu0 %v98
  %v291 = vpop.f32.mrf.mxu0
  %v292 = vadd.f32 %v52, %v291
  %v293 = vpop.f32.mrf.mxu0
  %v294 = vadd.f32 %v56, %v293
  %v295 = vpop.f32.mrf.mxu0
  %v296 = vadd.f32 %v52, %v295
  %v297 = vpop.f32.mrf.mxu0
  %v298 = vadd.f32 %v56, %v297
  %299 = vdwg.mxu0
  %v300 = vmax.f32 %v222, 0.0
  %v301 = vmax.f32 %v224, 0.0
  %v302 = vmax.f32 %v226, 0.0
  %v303 = vmax.f32 %v228, 0.0
  %v304 = vmax.f32 %v232, 0.0
  %v305 = vmax.f32 %v234, 0.0
  %v306 = vmax.f32 %v236, 0.0
  %v307 = vmax.f32 %v238, 0.0
  %v308 = vmax.f32 %v242, 0.0
  %v309 = vmax.f32 %v244, 0.0
  %v310 = vmax.f32 %v246, 0.0
  %v311 = vmax.f32 %v248, 0.0
  %v312 = vmax.f32 %v252, 0.0
  %v313 = vmax.f32 %v254, 0.0
  %v314 = vmax.f32 %v256, 0.0
  %v315 = vmax.f32 %v258, 0.0
  %v316 = vmax.f32 %v262, 0.0
  %v317 = vmax.f32 %v264, 0.0
  %v318 = vmax.f32 %v266, 0.0
  %v319 = vmax.f32 %v268, 0.0
  %v320 = vmax.f32 %v272, 0.0
  %v321 = vmax.f32 %v274, 0.0
  %v322 = vmax.f32 %v276, 0.0
  %v323 = vmax.f32 %v278, 0.0
  %v324 = vmax.f32 %v282, 0.0
  %v325 = vmax.f32 %v284, 0.0
  %v326 = vmax.f32 %v286, 0.0
  %v327 = vmax.f32 %v288, 0.0
  %v328 = vmax.f32 %v292, 0.0
  %v329 = vmax.f32 %v294, 0.0
  %v330 = vmax.f32 %v296, 0.0
  %v331 = vmax.f32 %v298, 0.0
  %v332 = vpack.c.bf16 %v302, %v300
  %v333 = vpack.c.bf16 %v303, %v301
  %v334 = vpack.c.bf16 %v306, %v304
  %v335 = vpack.c.bf16 %v307, %v305
  %v336 = vpack.c.bf16 %v310, %v308
  %v337 = vpack.c.bf16 %v311, %v309
  %v338 = vpack.c.bf16 %v314, %v312
  %v339 = vpack.c.bf16 %v315, %v313
  %v340 = vpack.c.bf16 %v318, %v316
  %v341 = vpack.c.bf16 %v319, %v317
  %v342 = vpack.c.bf16 %v322, %v320
  %v343 = vpack.c.bf16 %v323, %v321
  %v344 = vpack.c.bf16 %v326, %v324
  %v345 = vpack.c.bf16 %v327, %v325
  %v346 = vpack.c.bf16 %v330, %v328
  %v347 = vpack.c.bf16 %v331, %v329
  %v364 = vunpack.c.l.b16 %v332
  %v365 = vunpack.c.l.b16 %v333
  %v366 = vunpack.c.h.b16 %v332
  %v367 = vunpack.c.h.b16 %v333
  %v368 = vunpack.c.l.b16 %v334
  %v369 = vunpack.c.l.b16 %v335
  %v370 = vunpack.c.h.b16 %v334
  %v371 = vunpack.c.h.b16 %v335
  %v372 = vunpack.c.l.b16 %v336
  %v373 = vunpack.c.l.b16 %v337
  %v374 = vunpack.c.h.b16 %v336
  %v375 = vunpack.c.h.b16 %v337
  %v376 = vunpack.c.l.b16 %v338
  %v377 = vunpack.c.l.b16 %v339
  %v378 = vunpack.c.h.b16 %v338
  %v379 = vunpack.c.h.b16 %v339
  %v380 = vunpack.c.l.b16 %v340
  %v381 = vunpack.c.l.b16 %v341
  %v382 = vunpack.c.h.b16 %v340
  %v383 = vunpack.c.h.b16 %v341
  %v384 = vunpack.c.l.b16 %v342
  %v385 = vunpack.c.l.b16 %v343
  %v386 = vunpack.c.h.b16 %v342
  %v387 = vunpack.c.h.b16 %v343
  %v388 = vunpack.c.l.b16 %v344
  %v389 = vunpack.c.l.b16 %v345
  %v390 = vunpack.c.h.b16 %v344
  %v391 = vunpack.c.h.b16 %v345
  %v392 = vunpack.c.l.b16 %v346
  %v393 = vunpack.c.l.b16 %v347
  %v394 = vunpack.c.h.b16 %v346
  %v395 = vunpack.c.h.b16 %v347
  %v396 = vpack.c.b16 %v365, %v364
  %v397 = vpack.c.b16 %v367, %v366
  %v398 = vpack.c.b16 %v369, %v368
  %v399 = vpack.c.b16 %v371, %v370
  %v400 = vpack.c.b16 %v373, %v372
  %v401 = vpack.c.b16 %v375, %v374
  %v402 = vpack.c.b16 %v377, %v376
  %v403 = vpack.c.b16 %v379, %v378
  %v404 = vpack.c.b16 %v381, %v380
  %v405 = vpack.c.b16 %v383, %v382
  %v406 = vpack.c.b16 %v385, %v384
  %v407 = vpack.c.b16 %v387, %v386
  %v408 = vpack.c.b16 %v389, %v388
  %v409 = vpack.c.b16 %v391, %v390
  %v410 = vpack.c.b16 %v393, %v392
  %v411 = vpack.c.b16 %v395, %v394
  %428 = vst [vmem:[%s3] sm:$0xff] %v396
  %429 = vst [vmem:[%s3 + $0x8] sm:$0xff] %v397
  %430 = vst [vmem:[%s3 + $0x10] sm:$0xff] %v398
  %431 = vst [vmem:[%s3 + $0x18] sm:$0xff] %v399
  %432 = vst [vmem:[%s3 + $0x20] sm:$0xff] %v400
  %433 = vst [vmem:[%s3 + $0x28] sm:$0xff] %v401
  %434 = vst [vmem:[%s3 + $0x30] sm:$0xff] %v402
  %435 = vst [vmem:[%s3 + $0x38] sm:$0xff] %v403
  %436 = vst [vmem:[%s3 + $0x40] sm:$0xff] %v404
  %437 = vst [vmem:[%s3 + $0x48] sm:$0xff] %v405
  %438 = vst [vmem:[%s3 + $0x50] sm:$0xff] %v406
  %439 = vst [vmem:[%s3 + $0x58] sm:$0xff] %v407
  %440 = vst [vmem:[%s3 + $0x60] sm:$0xff] %v408
  %441 = vst [vmem:[%s3 + $0x68] sm:$0xff] %v409
  %442 = vst [vmem:[%s3 + $0x70] sm:$0xff] %v410
  %443 = vst [vmem:[%s3 + $0x78] sm:$0xff] %v411
  // Predicated region
  $region14: #{video_frame_transformer.6} parent=0 // pred_check
    _
  $region15: #{video_frame_transformer.6} parent=0 // pred_check_branch
    %445 = sbr.rel (0) target = $region17
  $region16: #{video_frame_transformer.6} parent=0 // pred_region
    _
  $region17: #{video_frame_transformer.6} parent=0 // pred_fallthru
    _
  // Predicated region
  $region18: #{video_frame_transformer.6} parent=0 // pred_check
    _
  $region19: #{video_frame_transformer.6} parent=0 // pred_check_branch
    %447 = sbr.rel (0) target = $region21
  $region20: #{video_frame_transformer.6} parent=0 // pred_region
    _
  $region21: #{video_frame_transformer.6} parent=0 // pred_fallthru
    _

// kernel: video_frame_transformer.7
$region0: #{video_frame_transformer.7}
  #allocation0 [shape = 'u32[]', space=smem, size = 0x4, offset = 0x4, fixed_abs, tag = 'smem constant byte address 0x4 - core index']
  #allocation1 [shape = 'u32[144,128]{1,0:T(1,128)}', space=vmem, size = 0x12000, scoped, tag = 'internal scratch']
  %s0 = inlined_call_operand.vmem [shape: bf16[512,576], index: 0, kind: input, shape index: {}]
  %s1 = inlined_call_operand.vmem [shape: bf16[576,128], index: 1, kind: input, shape index: {}]
  %s2 = inlined_call_operand.vmem [shape: f32[1,128], index: 2, kind: input, shape index: {}]
  %s3 = inlined_call_operand.vmem [shape: f32[512,128], index: 3, kind: output, shape index: {}]
  %s4 = sld [smem:[#allocation0]]
  $region22: #{video_frame_transformer.7} parent=0
    _
  %s6 = ssub.s32 1, %s4
  %s7 = scalar_select 0, %s6, %s4
  // Predicated region
  $region2: #{video_frame_transformer.7} parent=0 // pred_check
    _
  $region3: #{video_frame_transformer.7} parent=0 // pred_check_branch
    %9 = sbr.rel (0) target = $region5
  $region4: #{video_frame_transformer.7} parent=0 // pred_region
    _
  $region5: #{video_frame_transformer.7} parent=0 // pred_fallthru
    _
  // Predicated region
  $region6: #{video_frame_transformer.7} parent=0 // pred_check
    _
  $region7: #{video_frame_transformer.7} parent=0 // pred_check_branch
    %11 = sbr.rel (0) target = $region9
  $region8: #{video_frame_transformer.7} parent=0 // pred_region
    _
  $region9: #{video_frame_transformer.7} parent=0 // pred_fallthru
    _
  // Predicated region
  $region10: #{video_frame_transformer.7} parent=0 // pred_check
    _
  $region11: #{video_frame_transformer.7} parent=0 // pred_check_branch
    %13 = sbr.rel (0) target = $region13
  $region12: #{video_frame_transformer.7} parent=0 // pred_region
    _
  $region13: #{video_frame_transformer.7} parent=0 // pred_fallthru
    _
  %v15 = vld [vmem:[%s0] sm:$0xff]
  %v16 = vld [vmem:[%s0 + $0x8] sm:$0xff]
  %v17 = vld [vmem:[%s0 + $0x10] sm:$0xf]
  %v18 = vld [vmem:[%s0 + $0x14] sm:$0xff]
  %v19 = vld [vmem:[%s0 + $0x1c] sm:$0xff]
  %v20 = vld [vmem:[%s0 + $0x24] sm:$0xf]
  %v21 = vld [vmem:[%s0 + $0x28] sm:$0xff]
  %v22 = vld [vmem:[%s0 + $0x30] sm:$0xff]
  %v23 = vld [vmem:[%s0 + $0x38] sm:$0xf]
  %v24 = vld [vmem:[%s0 + $0x3c] sm:$0xff]
  %v25 = vld [vmem:[%s0 + $0x44] sm:$0xff]
  %v26 = vld [vmem:[%s0 + $0x4c] sm:$0xf]
  %v27 = vld [vmem:[%s0 + $0x50] sm:$0xff]
  %v28 = vld [vmem:[%s0 + $0x58] sm:$0xff]
  %v29 = vld [vmem:[%s0 + $0x60] sm:$0xf]
  %v30 = vld [vmem:[%s0 + $0x64] sm:$0xff]
  %v31 = vld [vmem:[%s0 + $0x6c] sm:$0xff]
  %v32 = vld [vmem:[%s0 + $0x74] sm:$0xf]
  %v33 = vld [vmem:[%s0 + $0x78] sm:$0xff]
  %v34 = vld [vmem:[%s0 + $0x80] sm:$0xff]
  %v35 = vld [vmem:[%s0 + $0x88] sm:$0xf]
  %v36 = vld [vmem:[%s0 + $0x8c] sm:$0xff]
  %v37 = vld [vmem:[%s0 + $0x94] sm:$0xff]
  %v38 = vld [vmem:[%s0 + $0x9c] sm:$0xf]
  %v39 = vld [vmem:[%s0 + $0xa0] sm:$0xff]
  %v40 = vld [vmem:[%s0 + $0xa8] sm:$0xff]
  %v41 = vld [vmem:[%s0 + $0xb0] sm:$0xf]
  %v42 = vld [vmem:[%s0 + $0xb4] sm:$0xff]
  %v43 = vld [vmem:[%s0 + $0xbc] sm:$0xff]
  %v44 = vld [vmem:[%s0 + $0xc4] sm:$0xf]
  %v45 = vld [vmem:[%s0 + $0xc8] sm:$0xff]
  %v46 = vld [vmem:[%s0 + $0xd0] sm:$0xff]
  %v47 = vld [vmem:[%s0 + $0xd8] sm:$0xf]
  %v48 = vld [vmem:[%s0 + $0xdc] sm:$0xff]
  %v49 = vld [vmem:[%s0 + $0xe4] sm:$0xff]
  %v50 = vld [vmem:[%s0 + $0xec] sm:$0xf]
  %v51 = vld [vmem:[%s0 + $0xf0] sm:$0xff]
  %v52 = vld [vmem:[%s0 + $0xf8] sm:$0xff]
  %v53 = vld [vmem:[%s0 + $0x100] sm:$0xf]
  %v54 = vld [vmem:[%s0 + $0x104] sm:$0xff]
  %v55 = vld [vmem:[%s0 + $0x10c] sm:$0xff]
  %v56 = vld [vmem:[%s0 + $0x114] sm:$0xf]
  %v57 = vld [vmem:[%s0 + $0x118] sm:$0xff]
  %v58 = vld [vmem:[%s0 + $0x120] sm:$0xff]
  %v59 = vld [vmem:[%s0 + $0x128] sm:$0xf]
  %v60 = vld [vmem:[%s0 + $0x12c] sm:$0xff]
  %v61 = vld [vmem:[%s0 + $0x134] sm:$0xff]
  %v62 = vld [vmem:[%s0 + $0x13c] sm:$0xf]
  %v63 = vld [vmem:[%s0 + $0x140] sm:$0xff]
  %v64 = vld [vmem:[%s0 + $0x148] sm:$0xff]
  %v65 = vld [vmem:[%s0 + $0x150] sm:$0xf]
  %v66 = vld [vmem:[%s0 + $0x154] sm:$0xff]
  %v67 = vld [vmem:[%s0 + $0x15c] sm:$0xff]
  %v68 = vld [vmem:[%s0 + $0x164] sm:$0xf]
  %v69 = vld [vmem:[%s0 + $0x168] sm:$0xff]
  %v70 = vld [vmem:[%s0 + $0x170] sm:$0xff]
  %v71 = vld [vmem:[%s0 + $0x178] sm:$0xf]
  %v72 = vld [vmem:[%s0 + $0x17c] sm:$0xff]
  %v73 = vld [vmem:[%s0 + $0x184] sm:$0xff]
  %v74 = vld [vmem:[%s0 + $0x18c] sm:$0xf]
  %v75 = vld [vmem:[%s0 + $0x190] sm:$0xff]
  %v76 = vld [vmem:[%s0 + $0x198] sm:$0xff]
  %v77 = vld [vmem:[%s0 + $0x1a0] sm:$0xf]
  %v78 = vld [vmem:[%s0 + $0x1a4] sm:$0xff]
  %v79 = vld [vmem:[%s0 + $0x1ac] sm:$0xff]
  %v80 = vld [vmem:[%s0 + $0x1b4] sm:$0xf]
  %v81 = vld [vmem:[%s0 + $0x1b8] sm:$0xff]
  %v82 = vld [vmem:[%s0 + $0x1c0] sm:$0xff]
  %v83 = vld [vmem:[%s0 + $0x1c8] sm:$0xf]
  %v84 = vld [vmem:[%s0 + $0x1cc] sm:$0xff]
  %v85 = vld [vmem:[%s0 + $0x1d4] sm:$0xff]
  %v86 = vld [vmem:[%s0 + $0x1dc] sm:$0xf]
  %v87 = vld [vmem:[%s0 + $0x1e0] sm:$0xff]
  %v88 = vld [vmem:[%s0 + $0x1e8] sm:$0xff]
  %v89 = vld [vmem:[%s0 + $0x1f0] sm:$0xf]
  %v90 = vld [vmem:[%s0 + $0x1f4] sm:$0xff]
  %v91 = vld [vmem:[%s0 + $0x1fc] sm:$0xff]
  %v92 = vld [vmem:[%s0 + $0x204] sm:$0xf]
  %v93 = vld [vmem:[%s0 + $0x208] sm:$0xff]
  %v94 = vld [vmem:[%s0 + $0x210] sm:$0xff]
  %v95 = vld [vmem:[%s0 + $0x218] sm:$0xf]
  %v96 = vld [vmem:[%s0 + $0x21c] sm:$0xff]
  %v97 = vld [vmem:[%s0 + $0x224] sm:$0xff]
  %v98 = vld [vmem:[%s0 + $0x22c] sm:$0xf]
  %v99 = vld [vmem:[%s0 + $0x230] sm:$0xff]
  %v100 = vld [vmem:[%s0 + $0x238] sm:$0xff]
  %v101 = vld [vmem:[%s0 + $0x240] sm:$0xf]
  %v102 = vld [vmem:[%s0 + $0x244] sm:$0xff]
  %v103 = vld [vmem:[%s0 + $0x24c] sm:$0xff]
  %v104 = vld [vmem:[%s0 + $0x254] sm:$0xf]
  %v105 = vld [vmem:[%s0 + $0x258] sm:$0xff]
  %v106 = vld [vmem:[%s0 + $0x260] sm:$0xff]
  %v107 = vld [vmem:[%s0 + $0x268] sm:$0xf]
  %v108 = vld [vmem:[%s0 + $0x26c] sm:$0xff]
  %v109 = vld [vmem:[%s0 + $0x274] sm:$0xff]
  %v110 = vld [vmem:[%s0 + $0x27c] sm:$0xf]
  %v111 = vld [vmem:[%s0 + $0x280] sm:$0xff]
  %v112 = vld [vmem:[%s0 + $0x288] sm:$0xff]
  %v113 = vld [vmem:[%s0 + $0x290] sm:$0xf]
  %v114 = vld [vmem:[%s0 + $0x294] sm:$0xff]
  %v115 = vld [vmem:[%s0 + $0x29c] sm:$0xff]
  %v116 = vld [vmem:[%s0 + $0x2a4] sm:$0xf]
  %v117 = vld [vmem:[%s0 + $0x2a8] sm:$0xff]
  %v118 = vld [vmem:[%s0 + $0x2b0] sm:$0xff]
  %v119 = vld [vmem:[%s0 + $0x2b8] sm:$0xf]
  %v120 = vld [vmem:[%s0 + $0x2bc] sm:$0xff]
  %v121 = vld [vmem:[%s0 + $0x2c4] sm:$0xff]
  %v122 = vld [vmem:[%s0 + $0x2cc] sm:$0xf]
  %v123 = vld [vmem:[%s0 + $0x2d0] sm:$0xff]
  %v124 = vld [vmem:[%s0 + $0x2d8] sm:$0xff]
  %v125 = vld [vmem:[%s0 + $0x2e0] sm:$0xf]
  %v126 = vld [vmem:[%s0 + $0x2e4] sm:$0xff]
  %v127 = vld [vmem:[%s0 + $0x2ec] sm:$0xff]
  %v128 = vld [vmem:[%s0 + $0x2f4] sm:$0xf]
  %v129 = vld [vmem:[%s0 + $0x2f8] sm:$0xff]
  %v130 = vld [vmem:[%s0 + $0x300] sm:$0xff]
  %v131 = vld [vmem:[%s0 + $0x308] sm:$0xf]
  %v132 = vld [vmem:[%s0 + $0x30c] sm:$0xff]
  %v133 = vld [vmem:[%s0 + $0x314] sm:$0xff]
  %v134 = vld [vmem:[%s0 + $0x31c] sm:$0xf]
  %v135 = vld [vmem:[%s0 + $0x320] sm:$0xff]
  %v136 = vld [vmem:[%s0 + $0x328] sm:$0xff]
  %v137 = vld [vmem:[%s0 + $0x330] sm:$0xf]
  %v138 = vld [vmem:[%s0 + $0x334] sm:$0xff]
  %v139 = vld [vmem:[%s0 + $0x33c] sm:$0xff]
  %v140 = vld [vmem:[%s0 + $0x344] sm:$0xf]
  %v141 = vld [vmem:[%s0 + $0x348] sm:$0xff]
  %v142 = vld [vmem:[%s0 + $0x350] sm:$0xff]
  %v143 = vld [vmem:[%s0 + $0x358] sm:$0xf]
  %v144 = vld [vmem:[%s0 + $0x35c] sm:$0xff]
  %v145 = vld [vmem:[%s0 + $0x364] sm:$0xff]
  %v146 = vld [vmem:[%s0 + $0x36c] sm:$0xf]
  %v147 = vld [vmem:[%s0 + $0x370] sm:$0xff]
  %v148 = vld [vmem:[%s0 + $0x378] sm:$0xff]
  %v149 = vld [vmem:[%s0 + $0x380] sm:$0xf]
  %v150 = vld [vmem:[%s0 + $0x384] sm:$0xff]
  %v151 = vld [vmem:[%s0 + $0x38c] sm:$0xff]
  %v152 = vld [vmem:[%s0 + $0x394] sm:$0xf]
  %v153 = vld [vmem:[%s0 + $0x398] sm:$0xff]
  %v154 = vld [vmem:[%s0 + $0x3a0] sm:$0xff]
  %v155 = vld [vmem:[%s0 + $0x3a8] sm:$0xf]
  %v156 = vld [vmem:[%s0 + $0x3ac] sm:$0xff]
  %v157 = vld [vmem:[%s0 + $0x3b4] sm:$0xff]
  %v158 = vld [vmem:[%s0 + $0x3bc] sm:$0xf]
  %v159 = vld [vmem:[%s0 + $0x3c0] sm:$0xff]
  %v160 = vld [vmem:[%s0 + $0x3c8] sm:$0xff]
  %v161 = vld [vmem:[%s0 + $0x3d0] sm:$0xf]
  %v162 = vld [vmem:[%s0 + $0x3d4] sm:$0xff]
  %v163 = vld [vmem:[%s0 + $0x3dc] sm:$0xff]
  %v164 = vld [vmem:[%s0 + $0x3e4] sm:$0xf]
  %v165 = vld [vmem:[%s0 + $0x3e8] sm:$0xff]
  %v166 = vld [vmem:[%s0 + $0x3f0] sm:$0xff]
  %v167 = vld [vmem:[%s0 + $0x3f8] sm:$0xf]
  %v168 = vld [vmem:[%s0 + $0x3fc] sm:$0xff]
  %v169 = vld [vmem:[%s0 + $0x404] sm:$0xff]
  %v170 = vld [vmem:[%s0 + $0x40c] sm:$0xf]
  %v171 = vld [vmem:[%s0 + $0x410] sm:$0xff]
  %v172 = vld [vmem:[%s0 + $0x418] sm:$0xff]
  %v173 = vld [vmem:[%s0 + $0x420] sm:$0xf]
  %v174 = vld [vmem:[%s0 + $0x424] sm:$0xff]
  %v175 = vld [vmem:[%s0 + $0x42c] sm:$0xff]
  %v176 = vld [vmem:[%s0 + $0x434] sm:$0xf]
  %v177 = vld [vmem:[%s0 + $0x438] sm:$0xff]
  %v178 = vld [vmem:[%s0 + $0x440] sm:$0xff]
  %v179 = vld [vmem:[%s0 + $0x448] sm:$0xf]
  %v180 = vld [vmem:[%s0 + $0x44c] sm:$0xff]
  %v181 = vld [vmem:[%s0 + $0x454] sm:$0xff]
  %v182 = vld [vmem:[%s0 + $0x45c] sm:$0xf]
  %v183 = vld [vmem:[%s0 + $0x460] sm:$0xff]
  %v184 = vld [vmem:[%s0 + $0x468] sm:$0xff]
  %v185 = vld [vmem:[%s0 + $0x470] sm:$0xf]
  %v186 = vld [vmem:[%s0 + $0x474] sm:$0xff]
  %v187 = vld [vmem:[%s0 + $0x47c] sm:$0xff]
  %v188 = vld [vmem:[%s0 + $0x484] sm:$0xf]
  %v189 = vld [vmem:[%s0 + $0x488] sm:$0xff]
  %v190 = vld [vmem:[%s0 + $0x490] sm:$0xff]
  %v191 = vld [vmem:[%s0 + $0x498] sm:$0xf]
  %v192 = vld [vmem:[%s0 + $0x49c] sm:$0xff]
  %v193 = vld [vmem:[%s0 + $0x4a4] sm:$0xff]
  %v194 = vld [vmem:[%s0 + $0x4ac] sm:$0xf]
  %v195 = vld [vmem:[%s0 + $0x4b0] sm:$0xff]
  %v196 = vld [vmem:[%s0 + $0x4b8] sm:$0xff]
  %v197 = vld [vmem:[%s0 + $0x4c0] sm:$0xf]
  %v198 = vld [vmem:[%s0 + $0x4c4] sm:$0xff]
  %v199 = vld [vmem:[%s0 + $0x4cc] sm:$0xff]
  %v200 = vld [vmem:[%s0 + $0x4d4] sm:$0xf]
  %v201 = vld [vmem:[%s0 + $0x4d8] sm:$0xff]
  %v202 = vld [vmem:[%s0 + $0x4e0] sm:$0xff]
  %v203 = vld [vmem:[%s0 + $0x4e8] sm:$0xf]
  %v204 = vld [vmem:[%s0 + $0x4ec] sm:$0xff]
  %v205 = vld [vmem:[%s0 + $0x4f4] sm:$0xff]
  %v206 = vld [vmem:[%s0 + $0x4fc] sm:$0xf]
  %v207 = vld [vmem:[%s1] sm:$0xf]
  %v208 = vld [vmem:[%s1 + $0x4] sm:$0xf]
  %v209 = vld [vmem:[%s1 + $0x8] sm:$0xf]
  %v210 = vld [vmem:[%s1 + $0xc] sm:$0xf]
  %v211 = vld [vmem:[%s1 + $0x10] sm:$0xf]
  %v212 = vld [vmem:[%s1 + $0x14] sm:$0xf]
  %v213 = vld [vmem:[%s1 + $0x18] sm:$0xf]
  %v214 = vld [vmem:[%s1 + $0x1c] sm:$0xf]
  %v215 = vld [vmem:[%s1 + $0x20] sm:$0xf]
  %v216 = vld [vmem:[%s1 + $0x24] sm:$0xf]
  %v217 = vld [vmem:[%s1 + $0x28] sm:$0xf]
  %v218 = vld [vmem:[%s1 + $0x2c] sm:$0xf]
  %v219 = vld [vmem:[%s1 + $0x30] sm:$0xf]
  %v220 = vld [vmem:[%s1 + $0x34] sm:$0xf]
  %v221 = vld [vmem:[%s1 + $0x38] sm:$0xf]
  %v222 = vld [vmem:[%s1 + $0x3c] sm:$0xf]
  %v223 = vld [vmem:[%s1 + $0x40] sm:$0xf]
  %v224 = vld [vmem:[%s1 + $0x44] sm:$0xf]
  %v225 = vld [vmem:[%s1 + $0x48] sm:$0xf]
  %v226 = vld [vmem:[%s1 + $0x4c] sm:$0xf]
  %v227 = vld [vmem:[%s1 + $0x50] sm:$0xf]
  %v228 = vld [vmem:[%s1 + $0x54] sm:$0xf]
  %v229 = vld [vmem:[%s1 + $0x58] sm:$0xf]
  %v230 = vld [vmem:[%s1 + $0x5c] sm:$0xf]
  %v231 = vld [vmem:[%s1 + $0x60] sm:$0xf]
  %v232 = vld [vmem:[%s1 + $0x64] sm:$0xf]
  %v233 = vld [vmem:[%s1 + $0x68] sm:$0xf]
  %v234 = vld [vmem:[%s1 + $0x6c] sm:$0xf]
  %v235 = vld [vmem:[%s1 + $0x70] sm:$0xf]
  %v236 = vld [vmem:[%s1 + $0x74] sm:$0xf]
  %v237 = vld [vmem:[%s1 + $0x78] sm:$0xf]
  %v238 = vld [vmem:[%s1 + $0x7c] sm:$0xf]
  %v239 = vld [vmem:[%s1 + $0x80] sm:$0xf]
  %v240 = vld [vmem:[%s1 + $0x84] sm:$0xf]
  %v241 = vld [vmem:[%s1 + $0x88] sm:$0xf]
  %v242 = vld [vmem:[%s1 + $0x8c] sm:$0xf]
  %v243 = vld [vmem:[%s1 + $0x90] sm:$0xf]
  %v244 = vld [vmem:[%s1 + $0x94] sm:$0xf]
  %v245 = vld [vmem:[%s1 + $0x98] sm:$0xf]
  %v246 = vld [vmem:[%s1 + $0x9c] sm:$0xf]
  %v247 = vld [vmem:[%s1 + $0xa0] sm:$0xf]
  %v248 = vld [vmem:[%s1 + $0xa4] sm:$0xf]
  %v249 = vld [vmem:[%s1 + $0xa8] sm:$0xf]
  %v250 = vld [vmem:[%s1 + $0xac] sm:$0xf]
  %v251 = vld [vmem:[%s1 + $0xb0] sm:$0xf]
  %v252 = vld [vmem:[%s1 + $0xb4] sm:$0xf]
  %v253 = vld [vmem:[%s1 + $0xb8] sm:$0xf]
  %v254 = vld [vmem:[%s1 + $0xbc] sm:$0xf]
  %v255 = vld [vmem:[%s1 + $0xc0] sm:$0xf]
  %v256 = vld [vmem:[%s1 + $0xc4] sm:$0xf]
  %v257 = vld [vmem:[%s1 + $0xc8] sm:$0xf]
  %v258 = vld [vmem:[%s1 + $0xcc] sm:$0xf]
  %v259 = vld [vmem:[%s1 + $0xd0] sm:$0xf]
  %v260 = vld [vmem:[%s1 + $0xd4] sm:$0xf]
  %v261 = vld [vmem:[%s1 + $0xd8] sm:$0xf]
  %v262 = vld [vmem:[%s1 + $0xdc] sm:$0xf]
  %v263 = vld [vmem:[%s1 + $0xe0] sm:$0xf]
  %v264 = vld [vmem:[%s1 + $0xe4] sm:$0xf]
  %v265 = vld [vmem:[%s1 + $0xe8] sm:$0xf]
  %v266 = vld [vmem:[%s1 + $0xec] sm:$0xf]
  %v267 = vld [vmem:[%s1 + $0xf0] sm:$0xf]
  %v268 = vld [vmem:[%s1 + $0xf4] sm:$0xf]
  %v269 = vld [vmem:[%s1 + $0xf8] sm:$0xf]
  %v270 = vld [vmem:[%s1 + $0xfc] sm:$0xf]
  %v271 = vld [vmem:[%s1 + $0x100] sm:$0xf]
  %v272 = vld [vmem:[%s1 + $0x104] sm:$0xf]
  %v273 = vld [vmem:[%s1 + $0x108] sm:$0xf]
  %v274 = vld [vmem:[%s1 + $0x10c] sm:$0xf]
  %v275 = vld [vmem:[%s1 + $0x110] sm:$0xf]
  %v276 = vld [vmem:[%s1 + $0x114] sm:$0xf]
  %v277 = vld [vmem:[%s1 + $0x118] sm:$0xf]
  %v278 = vld [vmem:[%s1 + $0x11c] sm:$0xf]
  %v279 = vld [vmem:[%s2] sm:$0x1]
  %v281 = vlaneseq
  %v282 = vshrl.u32 %v281, 7
  %v283 = vsub.s32 0, %v282
  %v284 = vrot.slane %v279, %v283
  %v478 = vunpack.c.l.b16 %v15
  %v479 = vunpack.c.h.b16 %v15
  %v480 = vunpack.c.l.b16 %v16
  %v481 = vunpack.c.h.b16 %v16
  %v482 = vunpack.c.l.b16 %v17
  %v483 = vunpack.c.l.b16 %v18
  %v484 = vunpack.c.h.b16 %v18
  %v485 = vunpack.c.l.b16 %v19
  %v486 = vunpack.c.h.b16 %v19
  %v487 = vunpack.c.l.b16 %v20
  %v488 = vunpack.c.l.b16 %v21
  %v489 = vunpack.c.h.b16 %v21
  %v490 = vunpack.c.l.b16 %v22
  %v491 = vunpack.c.h.b16 %v22
  %v492 = vunpack.c.l.b16 %v23
  %v493 = vunpack.c.l.b16 %v24
  %v494 = vunpack.c.h.b16 %v24
  %v495 = vunpack.c.l.b16 %v25
  %v496 = vunpack.c.h.b16 %v25
  %v497 = vunpack.c.l.b16 %v26
  %v498 = vunpack.c.l.b16 %v27
  %v499 = vunpack.c.h.b16 %v27
  %v500 = vunpack.c.l.b16 %v28
  %v501 = vunpack.c.h.b16 %v28
  %v502 = vunpack.c.l.b16 %v29
  %v503 = vunpack.c.l.b16 %v30
  %v504 = vunpack.c.h.b16 %v30
  %v505 = vunpack.c.l.b16 %v31
  %v506 = vunpack.c.h.b16 %v31
  %v507 = vunpack.c.l.b16 %v32
  %v508 = vunpack.c.l.b16 %v33
  %v509 = vunpack.c.h.b16 %v33
  %v510 = vunpack.c.l.b16 %v34
  %v511 = vunpack.c.h.b16 %v34
  %v512 = vunpack.c.l.b16 %v35
  %v513 = vunpack.c.l.b16 %v36
  %v514 = vunpack.c.h.b16 %v36
  %v515 = vunpack.c.l.b16 %v37
  %v516 = vunpack.c.h.b16 %v37
  %v517 = vunpack.c.l.b16 %v38
  %v518 = vunpack.c.l.b16 %v39
  %v519 = vunpack.c.h.b16 %v39
  %v520 = vunpack.c.l.b16 %v40
  %v521 = vunpack.c.h.b16 %v40
  %v522 = vunpack.c.l.b16 %v41
  %v523 = vunpack.c.l.b16 %v42
  %v524 = vunpack.c.h.b16 %v42
  %v525 = vunpack.c.l.b16 %v43
  %v526 = vunpack.c.h.b16 %v43
  %v527 = vunpack.c.l.b16 %v44
  %v528 = vunpack.c.l.b16 %v45
  %v529 = vunpack.c.h.b16 %v45
  %v530 = vunpack.c.l.b16 %v46
  %v531 = vunpack.c.h.b16 %v46
  %v532 = vunpack.c.l.b16 %v47
  %v533 = vunpack.c.l.b16 %v48
  %v534 = vunpack.c.h.b16 %v48
  %v535 = vunpack.c.l.b16 %v49
  %v536 = vunpack.c.h.b16 %v49
  %v537 = vunpack.c.l.b16 %v50
  %v538 = vunpack.c.l.b16 %v51
  %v539 = vunpack.c.h.b16 %v51
  %v540 = vunpack.c.l.b16 %v52
  %v541 = vunpack.c.h.b16 %v52
  %v542 = vunpack.c.l.b16 %v53
  %v543 = vunpack.c.l.b16 %v54
  %v544 = vunpack.c.h.b16 %v54
  %v545 = vunpack.c.l.b16 %v55
  %v546 = vunpack.c.h.b16 %v55
  %v547 = vunpack.c.l.b16 %v56
  %v548 = vunpack.c.l.b16 %v57
  %v549 = vunpack.c.h.b16 %v57
  %v550 = vunpack.c.l.b16 %v58
  %v551 = vunpack.c.h.b16 %v58
  %v552 = vunpack.c.l.b16 %v59
  %v553 = vunpack.c.l.b16 %v60
  %v554 = vunpack.c.h.b16 %v60
  %v555 = vunpack.c.l.b16 %v61
  %v556 = vunpack.c.h.b16 %v61
  %v557 = vunpack.c.l.b16 %v62
  %v558 = vunpack.c.l.b16 %v63
  %v559 = vunpack.c.h.b16 %v63
  %v560 = vunpack.c.l.b16 %v64
  %v561 = vunpack.c.h.b16 %v64
  %v562 = vunpack.c.l.b16 %v65
  %v563 = vunpack.c.l.b16 %v66
  %v564 = vunpack.c.h.b16 %v66
  %v565 = vunpack.c.l.b16 %v67
  %v566 = vunpack.c.h.b16 %v67
  %v567 = vunpack.c.l.b16 %v68
  %v568 = vunpack.c.l.b16 %v69
  %v569 = vunpack.c.h.b16 %v69
  %v570 = vunpack.c.l.b16 %v70
  %v571 = vunpack.c.h.b16 %v70
  %v572 = vunpack.c.l.b16 %v71
  %v573 = vunpack.c.l.b16 %v72
  %v574 = vunpack.c.h.b16 %v72
  %v575 = vunpack.c.l.b16 %v73
  %v576 = vunpack.c.h.b16 %v73
  %v577 = vunpack.c.l.b16 %v74
  %v578 = vunpack.c.l.b16 %v75
  %v579 = vunpack.c.h.b16 %v75
  %v580 = vunpack.c.l.b16 %v76
  %v581 = vunpack.c.h.b16 %v76
  %v582 = vunpack.c.l.b16 %v77
  %v583 = vunpack.c.l.b16 %v78
  %v584 = vunpack.c.h.b16 %v78
  %v585 = vunpack.c.l.b16 %v79
  %v586 = vunpack.c.h.b16 %v79
  %v587 = vunpack.c.l.b16 %v80
  %v588 = vunpack.c.l.b16 %v81
  %v589 = vunpack.c.h.b16 %v81
  %v590 = vunpack.c.l.b16 %v82
  %v591 = vunpack.c.h.b16 %v82
  %v592 = vunpack.c.l.b16 %v83
  %v593 = vunpack.c.l.b16 %v84
  %v594 = vunpack.c.h.b16 %v84
  %v595 = vunpack.c.l.b16 %v85
  %v596 = vunpack.c.h.b16 %v85
  %v597 = vunpack.c.l.b16 %v86
  %v598 = vunpack.c.l.b16 %v87
  %v599 = vunpack.c.h.b16 %v87
  %v600 = vunpack.c.l.b16 %v88
  %v601 = vunpack.c.h.b16 %v88
  %v602 = vunpack.c.l.b16 %v89
  %v603 = vunpack.c.l.b16 %v90
  %v604 = vunpack.c.h.b16 %v90
  %v605 = vunpack.c.l.b16 %v91
  %v606 = vunpack.c.h.b16 %v91
  %v607 = vunpack.c.l.b16 %v92
  %v608 = vunpack.c.l.b16 %v93
  %v609 = vunpack.c.h.b16 %v93
  %v610 = vunpack.c.l.b16 %v94
  %v611 = vunpack.c.h.b16 %v94
  %v612 = vunpack.c.l.b16 %v95
  %v613 = vunpack.c.l.b16 %v96
  %v614 = vunpack.c.h.b16 %v96
  %v615 = vunpack.c.l.b16 %v97
  %v616 = vunpack.c.h.b16 %v97
  %v617 = vunpack.c.l.b16 %v98
  %v618 = vunpack.c.l.b16 %v99
  %v619 = vunpack.c.h.b16 %v99
  %v620 = vunpack.c.l.b16 %v100
  %v621 = vunpack.c.h.b16 %v100
  %v622 = vunpack.c.l.b16 %v101
  %v623 = vunpack.c.l.b16 %v102
  %v624 = vunpack.c.h.b16 %v102
  %v625 = vunpack.c.l.b16 %v103
  %v626 = vunpack.c.h.b16 %v103
  %v627 = vunpack.c.l.b16 %v104
  %v628 = vunpack.c.l.b16 %v105
  %v629 = vunpack.c.h.b16 %v105
  %v630 = vunpack.c.l.b16 %v106
  %v631 = vunpack.c.h.b16 %v106
  %v632 = vunpack.c.l.b16 %v107
  %v633 = vunpack.c.l.b16 %v108
  %v634 = vunpack.c.h.b16 %v108
  %v635 = vunpack.c.l.b16 %v109
  %v636 = vunpack.c.h.b16 %v109
  %v637 = vunpack.c.l.b16 %v110
  %v638 = vunpack.c.l.b16 %v111
  %v639 = vunpack.c.h.b16 %v111
  %v640 = vunpack.c.l.b16 %v112
  %v641 = vunpack.c.h.b16 %v112
  %v642 = vunpack.c.l.b16 %v113
  %v643 = vunpack.c.l.b16 %v114
  %v644 = vunpack.c.h.b16 %v114
  %v645 = vunpack.c.l.b16 %v115
  %v646 = vunpack.c.h.b16 %v115
  %v647 = vunpack.c.l.b16 %v116
  %v648 = vunpack.c.l.b16 %v117
  %v649 = vunpack.c.h.b16 %v117
  %v650 = vunpack.c.l.b16 %v118
  %v651 = vunpack.c.h.b16 %v118
  %v652 = vunpack.c.l.b16 %v119
  %v653 = vunpack.c.l.b16 %v120
  %v654 = vunpack.c.h.b16 %v120
  %v655 = vunpack.c.l.b16 %v121
  %v656 = vunpack.c.h.b16 %v121
  %v657 = vunpack.c.l.b16 %v122
  %v658 = vunpack.c.l.b16 %v123
  %v659 = vunpack.c.h.b16 %v123
  %v660 = vunpack.c.l.b16 %v124
  %v661 = vunpack.c.h.b16 %v124
  %v662 = vunpack.c.l.b16 %v125
  %v663 = vunpack.c.l.b16 %v126
  %v664 = vunpack.c.h.b16 %v126
  %v665 = vunpack.c.l.b16 %v127
  %v666 = vunpack.c.h.b16 %v127
  %v667 = vunpack.c.l.b16 %v128
  %v668 = vunpack.c.l.b16 %v129
  %v669 = vunpack.c.h.b16 %v129
  %v670 = vunpack.c.l.b16 %v130
  %v671 = vunpack.c.h.b16 %v130
  %v672 = vunpack.c.l.b16 %v131
  %v673 = vunpack.c.l.b16 %v132
  %v674 = vunpack.c.h.b16 %v132
  %v675 = vunpack.c.l.b16 %v133
  %v676 = vunpack.c.h.b16 %v133
  %v677 = vunpack.c.l.b16 %v134
  %v678 = vunpack.c.l.b16 %v135
  %v679 = vunpack.c.h.b16 %v135
  %v680 = vunpack.c.l.b16 %v136
  %v681 = vunpack.c.h.b16 %v136
  %v682 = vunpack.c.l.b16 %v137
  %v683 = vunpack.c.l.b16 %v138
  %v684 = vunpack.c.h.b16 %v138
  %v685 = vunpack.c.l.b16 %v139
  %v686 = vunpack.c.h.b16 %v139
  %v687 = vunpack.c.l.b16 %v140
  %v688 = vunpack.c.l.b16 %v141
  %v689 = vunpack.c.h.b16 %v141
  %v690 = vunpack.c.l.b16 %v142
  %v691 = vunpack.c.h.b16 %v142
  %v692 = vunpack.c.l.b16 %v143
  %v693 = vunpack.c.l.b16 %v144
  %v694 = vunpack.c.h.b16 %v144
  %v695 = vunpack.c.l.b16 %v145
  %v696 = vunpack.c.h.b16 %v145
  %v697 = vunpack.c.l.b16 %v146
  %v698 = vunpack.c.l.b16 %v147
  %v699 = vunpack.c.h.b16 %v147
  %v700 = vunpack.c.l.b16 %v148
  %v701 = vunpack.c.h.b16 %v148
  %v702 = vunpack.c.l.b16 %v149
  %v703 = vunpack.c.l.b16 %v150
  %v704 = vunpack.c.h.b16 %v150
  %v705 = vunpack.c.l.b16 %v151
  %v706 = vunpack.c.h.b16 %v151
  %v707 = vunpack.c.l.b16 %v152
  %v708 = vunpack.c.l.b16 %v153
  %v709 = vunpack.c.h.b16 %v153
  %v710 = vunpack.c.l.b16 %v154
  %v711 = vunpack.c.h.b16 %v154
  %v712 = vunpack.c.l.b16 %v155
  %v713 = vunpack.c.l.b16 %v156
  %v714 = vunpack.c.h.b16 %v156
  %v715 = vunpack.c.l.b16 %v157
  %v716 = vunpack.c.h.b16 %v157
  %v717 = vunpack.c.l.b16 %v158
  %v718 = vunpack.c.l.b16 %v159
  %v719 = vunpack.c.h.b16 %v159
  %v720 = vunpack.c.l.b16 %v160
  %v721 = vunpack.c.h.b16 %v160
  %v722 = vunpack.c.l.b16 %v161
  %v723 = vunpack.c.l.b16 %v162
  %v724 = vunpack.c.h.b16 %v162
  %v725 = vunpack.c.l.b16 %v163
  %v726 = vunpack.c.h.b16 %v163
  %v727 = vunpack.c.l.b16 %v164
  %v728 = vunpack.c.l.b16 %v165
  %v729 = vunpack.c.h.b16 %v165
  %v730 = vunpack.c.l.b16 %v166
  %v731 = vunpack.c.h.b16 %v166
  %v732 = vunpack.c.l.b16 %v167
  %v733 = vunpack.c.l.b16 %v168
  %v734 = vunpack.c.h.b16 %v168
  %v735 = vunpack.c.l.b16 %v169
  %v736 = vunpack.c.h.b16 %v169
  %v737 = vunpack.c.l.b16 %v170
  %v738 = vunpack.c.l.b16 %v171
  %v739 = vunpack.c.h.b16 %v171
  %v740 = vunpack.c.l.b16 %v172
  %v741 = vunpack.c.h.b16 %v172
  %v742 = vunpack.c.l.b16 %v173
  %v743 = vunpack.c.l.b16 %v174
  %v744 = vunpack.c.h.b16 %v174
  %v745 = vunpack.c.l.b16 %v175
  %v746 = vunpack.c.h.b16 %v175
  %v747 = vunpack.c.l.b16 %v176
  %v748 = vunpack.c.l.b16 %v177
  %v749 = vunpack.c.h.b16 %v177
  %v750 = vunpack.c.l.b16 %v178
  %v751 = vunpack.c.h.b16 %v178
  %v752 = vunpack.c.l.b16 %v179
  %v753 = vunpack.c.l.b16 %v180
  %v754 = vunpack.c.h.b16 %v180
  %v755 = vunpack.c.l.b16 %v181
  %v756 = vunpack.c.h.b16 %v181
  %v757 = vunpack.c.l.b16 %v182
  %v758 = vunpack.c.l.b16 %v183
  %v759 = vunpack.c.h.b16 %v183
  %v760 = vunpack.c.l.b16 %v184
  %v761 = vunpack.c.h.b16 %v184
  %v762 = vunpack.c.l.b16 %v185
  %v763 = vunpack.c.l.b16 %v186
  %v764 = vunpack.c.h.b16 %v186
  %v765 = vunpack.c.l.b16 %v187
  %v766 = vunpack.c.h.b16 %v187
  %v767 = vunpack.c.l.b16 %v188
  %v768 = vunpack.c.l.b16 %v189
  %v769 = vunpack.c.h.b16 %v189
  %v770 = vunpack.c.l.b16 %v190
  %v771 = vunpack.c.h.b16 %v190
  %v772 = vunpack.c.l.b16 %v191
  %v773 = vunpack.c.l.b16 %v192
  %v774 = vunpack.c.h.b16 %v192
  %v775 = vunpack.c.l.b16 %v193
  %v776 = vunpack.c.h.b16 %v193
  %v777 = vunpack.c.l.b16 %v194
  %v778 = vunpack.c.l.b16 %v195
  %v779 = vunpack.c.h.b16 %v195
  %v780 = vunpack.c.l.b16 %v196
  %v781 = vunpack.c.h.b16 %v196
  %v782 = vunpack.c.l.b16 %v197
  %v783 = vunpack.c.l.b16 %v198
  %v784 = vunpack.c.h.b16 %v198
  %v785 = vunpack.c.l.b16 %v199
  %v786 = vunpack.c.h.b16 %v199
  %v787 = vunpack.c.l.b16 %v200
  %v788 = vunpack.c.l.b16 %v201
  %v789 = vunpack.c.h.b16 %v201
  %v790 = vunpack.c.l.b16 %v202
  %v791 = vunpack.c.h.b16 %v202
  %v792 = vunpack.c.l.b16 %v203
  %v793 = vunpack.c.l.b16 %v204
  %v794 = vunpack.c.h.b16 %v204
  %v795 = vunpack.c.l.b16 %v205
  %v796 = vunpack.c.h.b16 %v205
  %v797 = vunpack.c.l.b16 %v206
  %v798 = vpack.c.b16 %v483, %v478
  %v799 = vpack.c.b16 %v484, %v479
  %v800 = vpack.c.b16 %v485, %v480
  %v801 = vpack.c.b16 %v486, %v481
  %v802 = vpack.c.b16 %v487, %v482
  %v803 = vpack.c.b16 %v493, %v488
  %v804 = vpack.c.b16 %v494, %v489
  %v805 = vpack.c.b16 %v495, %v490
  %v806 = vpack.c.b16 %v496, %v491
  %v807 = vpack.c.b16 %v497, %v492
  %v808 = vpack.c.b16 %v503, %v498
  %v809 = vpack.c.b16 %v504, %v499
  %v810 = vpack.c.b16 %v505, %v500
  %v811 = vpack.c.b16 %v506, %v501
  %v812 = vpack.c.b16 %v507, %v502
  %v813 = vpack.c.b16 %v513, %v508
  %v814 = vpack.c.b16 %v514, %v509
  %v815 = vpack.c.b16 %v515, %v510
  %v816 = vpack.c.b16 %v516, %v511
  %v817 = vpack.c.b16 %v517, %v512
  %v818 = vpack.c.b16 %v523, %v518
  %v819 = vpack.c.b16 %v524, %v519
  %v820 = vpack.c.b16 %v525, %v520
  %v821 = vpack.c.b16 %v526, %v521
  %v822 = vpack.c.b16 %v527, %v522
  %v823 = vpack.c.b16 %v533, %v528
  %v824 = vpack.c.b16 %v534, %v529
  %v825 = vpack.c.b16 %v535, %v530
  %v826 = vpack.c.b16 %v536, %v531
  %v827 = vpack.c.b16 %v537, %v532
  %v828 = vpack.c.b16 %v543, %v538
  %v829 = vpack.c.b16 %v544, %v539
  %v830 = vpack.c.b16 %v545, %v540
  %v831 = vpack.c.b16 %v546, %v541
  %v832 = vpack.c.b16 %v547, %v542
  %v833 = vpack.c.b16 %v553, %v548
  %v834 = vpack.c.b16 %v554, %v549
  %v835 = vpack.c.b16 %v555, %v550
  %v836 = vpack.c.b16 %v556, %v551
  %v837 = vpack.c.b16 %v557, %v552
  %v838 = vpack.c.b16 %v563, %v558
  %v839 = vpack.c.b16 %v564, %v559
  %v840 = vpack.c.b16 %v565, %v560
  %v841 = vpack.c.b16 %v566, %v561
  %v842 = vpack.c.b16 %v567, %v562
  %v843 = vpack.c.b16 %v573, %v568
  %v844 = vpack.c.b16 %v574, %v569
  %v845 = vpack.c.b16 %v575, %v570
  %v846 = vpack.c.b16 %v576, %v571
  %v847 = vpack.c.b16 %v577, %v572
  %v848 = vpack.c.b16 %v583, %v578
  %v849 = vpack.c.b16 %v584, %v579
  %v850 = vpack.c.b16 %v585, %v580
  %v851 = vpack.c.b16 %v586, %v581
  %v852 = vpack.c.b16 %v587, %v582
  %v853 = vpack.c.b16 %v593, %v588
  %v854 = vpack.c.b16 %v594, %v589
  %v855 = vpack.c.b16 %v595, %v590
  %v856 = vpack.c.b16 %v596, %v591
  %v857 = vpack.c.b16 %v597, %v592
  %v858 = vpack.c.b16 %v603, %v598
  %v859 = vpack.c.b16 %v604, %v599
  %v860 = vpack.c.b16 %v605, %v600
  %v861 = vpack.c.b16 %v606, %v601
  %v862 = vpack.c.b16 %v607, %v602
  %v863 = vpack.c.b16 %v613, %v608
  %v864 = vpack.c.b16 %v614, %v609
  %v865 = vpack.c.b16 %v615, %v610
  %v866 = vpack.c.b16 %v616, %v611
  %v867 = vpack.c.b16 %v617, %v612
  %v868 = vpack.c.b16 %v623, %v618
  %v869 = vpack.c.b16 %v624, %v619
  %v870 = vpack.c.b16 %v625, %v620
  %v871 = vpack.c.b16 %v626, %v621
  %v872 = vpack.c.b16 %v627, %v622
  %v873 = vpack.c.b16 %v633, %v628
  %v874 = vpack.c.b16 %v634, %v629
  %v875 = vpack.c.b16 %v635, %v630
  %v876 = vpack.c.b16 %v636, %v631
  %v877 = vpack.c.b16 %v637, %v632
  %v878 = vpack.c.b16 %v643, %v638
  %v879 = vpack.c.b16 %v644, %v639
  %v880 = vpack.c.b16 %v645, %v640
  %v881 = vpack.c.b16 %v646, %v641
  %v882 = vpack.c.b16 %v647, %v642
  %v883 = vpack.c.b16 %v653, %v648
  %v884 = vpack.c.b16 %v654, %v649
  %v885 = vpack.c.b16 %v655, %v650
  %v886 = vpack.c.b16 %v656, %v651
  %v887 = vpack.c.b16 %v657, %v652
  %v888 = vpack.c.b16 %v663, %v658
  %v889 = vpack.c.b16 %v664, %v659
  %v890 = vpack.c.b16 %v665, %v660
  %v891 = vpack.c.b16 %v666, %v661
  %v892 = vpack.c.b16 %v667, %v662
  %v893 = vpack.c.b16 %v673, %v668
  %v894 = vpack.c.b16 %v674, %v669
  %v895 = vpack.c.b16 %v675, %v670
  %v896 = vpack.c.b16 %v676, %v671
  %v897 = vpack.c.b16 %v677, %v672
  %v898 = vpack.c.b16 %v683, %v678
  %v899 = vpack.c.b16 %v684, %v679
  %v900 = vpack.c.b16 %v685, %v680
  %v901 = vpack.c.b16 %v686, %v681
  %v902 = vpack.c.b16 %v687, %v682
  %v903 = vpack.c.b16 %v693, %v688
  %v904 = vpack.c.b16 %v694, %v689
  %v905 = vpack.c.b16 %v695, %v690
  %v906 = vpack.c.b16 %v696, %v691
  %v907 = vpack.c.b16 %v697, %v692
  %v908 = vpack.c.b16 %v703, %v698
  %v909 = vpack.c.b16 %v704, %v699
  %v910 = vpack.c.b16 %v705, %v700
  %v911 = vpack.c.b16 %v706, %v701
  %v912 = vpack.c.b16 %v707, %v702
  %v913 = vpack.c.b16 %v713, %v708
  %v914 = vpack.c.b16 %v714, %v709
  %v915 = vpack.c.b16 %v715, %v710
  %v916 = vpack.c.b16 %v716, %v711
  %v917 = vpack.c.b16 %v717, %v712
  %v918 = vpack.c.b16 %v723, %v718
  %v919 = vpack.c.b16 %v724, %v719
  %v920 = vpack.c.b16 %v725, %v720
  %v921 = vpack.c.b16 %v726, %v721
  %v922 = vpack.c.b16 %v727, %v722
  %v923 = vpack.c.b16 %v733, %v728
  %v924 = vpack.c.b16 %v734, %v729
  %v925 = vpack.c.b16 %v735, %v730
  %v926 = vpack.c.b16 %v736, %v731
  %v927 = vpack.c.b16 %v737, %v732
  %v928 = vpack.c.b16 %v743, %v738
  %v929 = vpack.c.b16 %v744, %v739
  %v930 = vpack.c.b16 %v745, %v740
  %v931 = vpack.c.b16 %v746, %v741
  %v932 = vpack.c.b16 %v747, %v742
  %v933 = vpack.c.b16 %v753, %v748
  %v934 = vpack.c.b16 %v754, %v749
  %v935 = vpack.c.b16 %v755, %v750
  %v936 = vpack.c.b16 %v756, %v751
  %v937 = vpack.c.b16 %v757, %v752
  %v938 = vpack.c.b16 %v763, %v758
  %v939 = vpack.c.b16 %v764, %v759
  %v940 = vpack.c.b16 %v765, %v760
  %v941 = vpack.c.b16 %v766, %v761
  %v942 = vpack.c.b16 %v767, %v762
  %v943 = vpack.c.b16 %v773, %v768
  %v944 = vpack.c.b16 %v774, %v769
  %v945 = vpack.c.b16 %v775, %v770
  %v946 = vpack.c.b16 %v776, %v771
  %v947 = vpack.c.b16 %v777, %v772
  %v948 = vpack.c.b16 %v783, %v778
  %v949 = vpack.c.b16 %v784, %v779
  %v950 = vpack.c.b16 %v785, %v780
  %v951 = vpack.c.b16 %v786, %v781
  %v952 = vpack.c.b16 %v787, %v782
  %v953 = vpack.c.b16 %v793, %v788
  %v954 = vpack.c.b16 %v794, %v789
  %v955 = vpack.c.b16 %v795, %v790
  %v956 = vpack.c.b16 %v796, %v791
  %v957 = vpack.c.b16 %v797, %v792
  %v1158 = vunpack.c.l.b16 %v207
  %v1159 = vunpack.c.l.b16 %v208
  %v1160 = vunpack.c.l.b16 %v209
  %v1161 = vunpack.c.l.b16 %v210
  %v1162 = vunpack.c.l.b16 %v211
  %v1163 = vunpack.c.l.b16 %v212
  %v1164 = vunpack.c.l.b16 %v213
  %v1165 = vunpack.c.l.b16 %v214
  %v1166 = vunpack.c.l.b16 %v215
  %v1167 = vunpack.c.l.b16 %v216
  %v1168 = vunpack.c.l.b16 %v217
  %v1169 = vunpack.c.l.b16 %v218
  %v1170 = vunpack.c.l.b16 %v219
  %v1171 = vunpack.c.l.b16 %v220
  %v1172 = vunpack.c.l.b16 %v221
  %v1173 = vunpack.c.l.b16 %v222
  %v1174 = vunpack.c.l.b16 %v223
  %v1175 = vunpack.c.l.b16 %v224
  %v1176 = vunpack.c.l.b16 %v225
  %v1177 = vunpack.c.l.b16 %v226
  %v1178 = vunpack.c.l.b16 %v227
  %v1179 = vunpack.c.l.b16 %v228
  %v1180 = vunpack.c.l.b16 %v229
  %v1181 = vunpack.c.l.b16 %v230
  %v1182 = vunpack.c.l.b16 %v231
  %v1183 = vunpack.c.l.b16 %v232
  %v1184 = vunpack.c.l.b16 %v233
  %v1185 = vunpack.c.l.b16 %v234
  %v1186 = vunpack.c.l.b16 %v235
  %v1187 = vunpack.c.l.b16 %v236
  %v1188 = vunpack.c.l.b16 %v237
  %v1189 = vunpack.c.l.b16 %v238
  %v1190 = vunpack.c.l.b16 %v239
  %v1191 = vunpack.c.l.b16 %v240
  %v1192 = vunpack.c.l.b16 %v241
  %v1193 = vunpack.c.l.b16 %v242
  %v1194 = vunpack.c.l.b16 %v243
  %v1195 = vunpack.c.l.b16 %v244
  %v1196 = vunpack.c.l.b16 %v245
  %v1197 = vunpack.c.l.b16 %v246
  %v1198 = vunpack.c.l.b16 %v247
  %v1199 = vunpack.c.l.b16 %v248
  %v1200 = vunpack.c.l.b16 %v249
  %v1201 = vunpack.c.l.b16 %v250
  %v1202 = vunpack.c.l.b16 %v251
  %v1203 = vunpack.c.l.b16 %v252
  %v1204 = vunpack.c.l.b16 %v253
  %v1205 = vunpack.c.l.b16 %v254
  %v1206 = vunpack.c.l.b16 %v255
  %v1207 = vunpack.c.l.b16 %v256
  %v1208 = vunpack.c.l.b16 %v257
  %v1209 = vunpack.c.l.b16 %v258
  %v1210 = vunpack.c.l.b16 %v259
  %v1211 = vunpack.c.l.b16 %v260
  %v1212 = vunpack.c.l.b16 %v261
  %v1213 = vunpack.c.l.b16 %v262
  %v1214 = vunpack.c.l.b16 %v263
  %v1215 = vunpack.c.l.b16 %v264
  %v1216 = vunpack.c.l.b16 %v265
  %v1217 = vunpack.c.l.b16 %v266
  %v1218 = vunpack.c.l.b16 %v267
  %v1219 = vunpack.c.l.b16 %v268
  %v1220 = vunpack.c.l.b16 %v269
  %v1221 = vunpack.c.l.b16 %v270
  %v1222 = vunpack.c.l.b16 %v271
  %v1223 = vunpack.c.l.b16 %v272
  %v1224 = vunpack.c.l.b16 %v273
  %v1225 = vunpack.c.l.b16 %v274
  %v1226 = vunpack.c.l.b16 %v275
  %v1227 = vunpack.c.l.b16 %v276
  %v1228 = vunpack.c.l.b16 %v277
  %v1229 = vunpack.c.l.b16 %v278
  %v1230 = vpack.c.b16 %v1159, %v1158
  %v1231 = vpack.c.b16 %v1161, %v1160
  %v1232 = vpack.c.b16 %v1163, %v1162
  %v1233 = vpack.c.b16 %v1165, %v1164
  %v1234 = vpack.c.b16 %v1167, %v1166
  %v1235 = vpack.c.b16 %v1169, %v1168
  %v1236 = vpack.c.b16 %v1171, %v1170
  %v1237 = vpack.c.b16 %v1173, %v1172
  %v1238 = vpack.c.b16 %v1175, %v1174
  %v1239 = vpack.c.b16 %v1177, %v1176
  %v1240 = vpack.c.b16 %v1179, %v1178
  %v1241 = vpack.c.b16 %v1181, %v1180
  %v1242 = vpack.c.b16 %v1183, %v1182
  %v1243 = vpack.c.b16 %v1185, %v1184
  %v1244 = vpack.c.b16 %v1187, %v1186
  %v1245 = vpack.c.b16 %v1189, %v1188
  %v1246 = vpack.c.b16 %v1191, %v1190
  %v1247 = vpack.c.b16 %v1193, %v1192
  %v1248 = vpack.c.b16 %v1195, %v1194
  %v1249 = vpack.c.b16 %v1197, %v1196
  %v1250 = vpack.c.b16 %v1199, %v1198
  %v1251 = vpack.c.b16 %v1201, %v1200
  %v1252 = vpack.c.b16 %v1203, %v1202
  %v1253 = vpack.c.b16 %v1205, %v1204
  %v1254 = vpack.c.b16 %v1207, %v1206
  %v1255 = vpack.c.b16 %v1209, %v1208
  %v1256 = vpack.c.b16 %v1211, %v1210
  %v1257 = vpack.c.b16 %v1213, %v1212
  %v1258 = vpack.c.b16 %v1215, %v1214
  %v1259 = vpack.c.b16 %v1217, %v1216
  %v1260 = vpack.c.b16 %v1219, %v1218
  %v1261 = vpack.c.b16 %v1221, %v1220
  %v1262 = vpack.c.b16 %v1223, %v1222
  %v1263 = vpack.c.b16 %v1225, %v1224
  %v1264 = vpack.c.b16 %v1227, %v1226
  %v1265 = vpack.c.b16 %v1229, %v1228
  %vm1302 = vcmask 523264
  %v1304 = vsel %vm1302, %v802, 0
  %v1307 = vsel %vm1302, %v807, 0
  %v1310 = vsel %vm1302, %v812, 0
  %v1313 = vsel %vm1302, %v817, 0
  %v1316 = vsel %vm1302, %v822, 0
  %v1319 = vsel %vm1302, %v827, 0
  %v1322 = vsel %vm1302, %v832, 0
  %v1325 = vsel %vm1302, %v837, 0
  %v1328 = vsel %vm1302, %v842, 0
  %v1331 = vsel %vm1302, %v847, 0
  %v1334 = vsel %vm1302, %v852, 0
  %v1337 = vsel %vm1302, %v857, 0
  %v1340 = vsel %vm1302, %v862, 0
  %v1343 = vsel %vm1302, %v867, 0
  %v1346 = vsel %vm1302, %v872, 0
  %v1349 = vsel %vm1302, %v877, 0
  %v1352 = vsel %vm1302, %v882, 0
  %v1355 = vsel %vm1302, %v887, 0
  %v1358 = vsel %vm1302, %v892, 0
  %v1361 = vsel %vm1302, %v897, 0
  %v1364 = vsel %vm1302, %v902, 0
  %v1367 = vsel %vm1302, %v907, 0
  %v1370 = vsel %vm1302, %v912, 0
  %v1373 = vsel %vm1302, %v917, 0
  %v1376 = vsel %vm1302, %v922, 0
  %v1379 = vsel %vm1302, %v927, 0
  %v1382 = vsel %vm1302, %v932, 0
  %v1385 = vsel %vm1302, %v937, 0
  %v1388 = vsel %vm1302, %v942, 0
  %v1391 = vsel %vm1302, %v947, 0
  %v1394 = vsel %vm1302, %v952, 0
  %v1397 = vsel %vm1302, %v957, 0
  %1399 = vmatprep.subr.bf16.mxu0 0
  %1400 = vmatpush1.bf16.msra.mxu0 %v1237
  %1401 = vmatprep.subr.bf16.mxu0 0
  %1402 = vmatpush1.bf16.msra.mxu0 %v1236
  %1403 = vmatprep.subr.bf16.mxu0 0
  %1404 = vmatpush1.bf16.msra.mxu0 %v1235
  %1405 = vmatprep.subr.bf16.mxu0 0
  %1406 = vmatpush1.bf16.msra.mxu0 %v1234
  %1407 = vmatprep.subr.bf16.mxu0 0
  %1408 = vmatpush1.bf16.msra.mxu0 %v1233
  %1409 = vmatprep.subr.bf16.mxu0 0
  %1410 = vmatpush1.bf16.msra.mxu0 %v1232
  %1411 = vmatprep.subr.bf16.mxu0 0
  %1412 = vmatpush1.bf16.msra.mxu0 %v1231
  %1413 = vmatprep.subr.bf16.mxu0 0
  %1414 = vmatpush1.bf16.msra.mxu0 %v1230
  %1415 = vmatprep.subr.bf16.mxu0 0
  %1416 = vmatpush2.bf16.msra.mxu0 %v1245
  %1417 = vmatprep.subr.bf16.mxu0 0
  %1418 = vmatpush2.bf16.msra.mxu0 %v1244
  %1419 = vmatprep.subr.bf16.mxu0 0
  %1420 = vmatpush2.bf16.msra.mxu0 %v1243
  %1421 = vmatprep.subr.bf16.mxu0 0
  %1422 = vmatpush2.bf16.msra.mxu0 %v1242
  %1423 = vmatprep.subr.bf16.mxu0 0
  %1424 = vmatpush2.bf16.msra.mxu0 %v1241
  %1425 = vmatprep.subr.bf16.mxu0 0
  %1426 = vmatpush2.bf16.msra.mxu0 %v1240
  %1427 = vmatprep.subr.bf16.mxu0 0
  %1428 = vmatpush2.bf16.msra.mxu0 %v1239
  %1429 = vmatprep.subr.bf16.mxu0 0
  %1430 = vmatpush2.bf16.msra.mxu0 %v1238
  %1431 = vmatprep.mubr.bf16.mxu0 %v799
  %1432 = vmatmul.mubr.bf16.gmra.mxu0 %v798
  %v1433 = vpop.f32.mrf.mxu0
  %v1434 = vadd.f32 %v284, %v1433
  %v1435 = vpop.f32.mrf.mxu0
  %v1436 = vpop.f32.mrf.mxu0
  %v1437 = vadd.f32 %v284, %v1436
  %v1438 = vpop.f32.mrf.mxu0
  %1439 = vmatprep.mubr.bf16.mxu0 %v804
  %1440 = vmatmul.mubr.bf16.gmra.mxu0 %v803
  %v1441 = vpop.f32.mrf.mxu0
  %v1442 = vadd.f32 %v284, %v1441
  %v1443 = vpop.f32.mrf.mxu0
  %v1444 = vpop.f32.mrf.mxu0
  %v1445 = vadd.f32 %v284, %v1444
  %v1446 = vpop.f32.mrf.mxu0
  %1447 = vmatprep.mubr.bf16.mxu0 %v809
  %1448 = vmatmul.mubr.bf16.gmra.mxu0 %v808
  %v1449 = vpop.f32.mrf.mxu0
  %v1450 = vadd.f32 %v284, %v1449
  %v1451 = vpop.f32.mrf.mxu0
  %v1452 = vpop.f32.mrf.mxu0
  %v1453 = vadd.f32 %v284, %v1452
  %v1454 = vpop.f32.mrf.mxu0
  %1455 = vmatprep.mubr.bf16.mxu0 %v814
  %1456 = vmatmul.mubr.bf16.gmra.mxu0 %v813
  %v1457 = vpop.f32.mrf.mxu0
  %v1458 = vadd.f32 %v284, %v1457
  %v1459 = vpop.f32.mrf.mxu0
  %v1460 = vpop.f32.mrf.mxu0
  %v1461 = vadd.f32 %v284, %v1460
  %v1462 = vpop.f32.mrf.mxu0
  %1463 = vmatprep.mubr.bf16.mxu0 %v819
  %1464 = vmatmul.mubr.bf16.gmra.mxu0 %v818
  %v1465 = vpop.f32.mrf.mxu0
  %v1466 = vadd.f32 %v284, %v1465
  %v1467 = vpop.f32.mrf.mxu0
  %v1468 = vpop.f32.mrf.mxu0
  %v1469 = vadd.f32 %v284, %v1468
  %v1470 = vpop.f32.mrf.mxu0
  %1471 = vmatprep.mubr.bf16.mxu0 %v824
  %1472 = vmatmul.mubr.bf16.gmra.mxu0 %v823
  %v1473 = vpop.f32.mrf.mxu0
  %v1474 = vadd.f32 %v284, %v1473
  %v1475 = vpop.f32.mrf.mxu0
  %v1476 = vpop.f32.mrf.mxu0
  %v1477 = vadd.f32 %v284, %v1476
  %v1478 = vpop.f32.mrf.mxu0
  %1479 = vmatprep.mubr.bf16.mxu0 %v829
  %1480 = vmatmul.mubr.bf16.gmra.mxu0 %v828
  %v1481 = vpop.f32.mrf.mxu0
  %v1482 = vadd.f32 %v284, %v1481
  %v1483 = vpop.f32.mrf.mxu0
  %v1484 = vpop.f32.mrf.mxu0
  %v1485 = vadd.f32 %v284, %v1484
  %v1486 = vpop.f32.mrf.mxu0
  %1487 = vmatprep.mubr.bf16.mxu0 %v834
  %1488 = vmatmul.mubr.bf16.gmra.mxu0 %v833
  %v1489 = vpop.f32.mrf.mxu0
  %v1490 = vadd.f32 %v284, %v1489
  %v1491 = vpop.f32.mrf.mxu0
  %v1492 = vpop.f32.mrf.mxu0
  %v1493 = vadd.f32 %v284, %v1492
  %v1494 = vpop.f32.mrf.mxu0
  %1495 = vmatprep.mubr.bf16.mxu0 %v839
  %1496 = vmatmul.mubr.bf16.gmra.mxu0 %v838
  %v1497 = vpop.f32.mrf.mxu0
  %v1498 = vadd.f32 %v284, %v1497
  %v1499 = vpop.f32.mrf.mxu0
  %v1500 = vpop.f32.mrf.mxu0
  %v1501 = vadd.f32 %v284, %v1500
  %v1502 = vpop.f32.mrf.mxu0
  %1503 = vmatprep.mubr.bf16.mxu0 %v844
  %1504 = vmatmul.mubr.bf16.gmra.mxu0 %v843
  %v1505 = vpop.f32.mrf.mxu0
  %v1506 = vadd.f32 %v284, %v1505
  %v1507 = vpop.f32.mrf.mxu0
  %v1508 = vpop.f32.mrf.mxu0
  %v1509 = vadd.f32 %v284, %v1508
  %v1510 = vpop.f32.mrf.mxu0
  %1511 = vmatprep.mubr.bf16.mxu0 %v849
  %1512 = vmatmul.mubr.bf16.gmra.mxu0 %v848
  %v1513 = vpop.f32.mrf.mxu0
  %v1514 = vadd.f32 %v284, %v1513
  %v1515 = vpop.f32.mrf.mxu0
  %v1516 = vpop.f32.mrf.mxu0
  %v1517 = vadd.f32 %v284, %v1516
  %v1518 = vpop.f32.mrf.mxu0
  %1519 = vmatprep.mubr.bf16.mxu0 %v854
  %1520 = vmatmul.mubr.bf16.gmra.mxu0 %v853
  %v1521 = vpop.f32.mrf.mxu0
  %v1522 = vadd.f32 %v284, %v1521
  %v1523 = vpop.f32.mrf.mxu0
  %v1524 = vpop.f32.mrf.mxu0
  %v1525 = vadd.f32 %v284, %v1524
  %v1526 = vpop.f32.mrf.mxu0
  %1527 = vmatprep.mubr.bf16.mxu0 %v859
  %1528 = vmatmul.mubr.bf16.gmra.mxu0 %v858
  %v1529 = vpop.f32.mrf.mxu0
  %v1530 = vadd.f32 %v284, %v1529
  %v1531 = vpop.f32.mrf.mxu0
  %v1532 = vpop.f32.mrf.mxu0
  %v1533 = vadd.f32 %v284, %v1532
  %v1534 = vpop.f32.mrf.mxu0
  %1535 = vmatprep.mubr.bf16.mxu0 %v864
  %1536 = vmatmul.mubr.bf16.gmra.mxu0 %v863
  %v1537 = vpop.f32.mrf.mxu0
  %v1538 = vadd.f32 %v284, %v1537
  %v1539 = vpop.f32.mrf.mxu0
  %v1540 = vpop.f32.mrf.mxu0
  %v1541 = vadd.f32 %v284, %v1540
  %v1542 = vpop.f32.mrf.mxu0
  %1543 = vmatprep.mubr.bf16.mxu0 %v869
  %1544 = vmatmul.mubr.bf16.gmra.mxu0 %v868
  %v1545 = vpop.f32.mrf.mxu0
  %v1546 = vadd.f32 %v284, %v1545
  %v1547 = vpop.f32.mrf.mxu0
  %v1548 = vpop.f32.mrf.mxu0
  %v1549 = vadd.f32 %v284, %v1548
  %v1550 = vpop.f32.mrf.mxu0
  %1551 = vmatprep.mubr.bf16.mxu0 %v874
  %1552 = vmatmul.mubr.bf16.gmra.mxu0 %v873
  %v1553 = vpop.f32.mrf.mxu0
  %v1554 = vadd.f32 %v284, %v1553
  %v1555 = vpop.f32.mrf.mxu0
  %v1556 = vpop.f32.mrf.mxu0
  %v1557 = vadd.f32 %v284, %v1556
  %v1558 = vpop.f32.mrf.mxu0
  %1559 = vmatprep.mubr.bf16.mxu0 %v879
  %1560 = vmatmul.mubr.bf16.gmra.mxu0 %v878
  %v1561 = vpop.f32.mrf.mxu0
  %v1562 = vadd.f32 %v284, %v1561
  %v1563 = vpop.f32.mrf.mxu0
  %v1564 = vpop.f32.mrf.mxu0
  %v1565 = vadd.f32 %v284, %v1564
  %v1566 = vpop.f32.mrf.mxu0
  %1567 = vmatprep.mubr.bf16.mxu0 %v884
  %1568 = vmatmul.mubr.bf16.gmra.mxu0 %v883
  %v1569 = vpop.f32.mrf.mxu0
  %v1570 = vadd.f32 %v284, %v1569
  %v1571 = vpop.f32.mrf.mxu0
  %v1572 = vpop.f32.mrf.mxu0
  %v1573 = vadd.f32 %v284, %v1572
  %v1574 = vpop.f32.mrf.mxu0
  %1575 = vmatprep.mubr.bf16.mxu0 %v889
  %1576 = vmatmul.mubr.bf16.gmra.mxu0 %v888
  %v1577 = vpop.f32.mrf.mxu0
  %v1578 = vadd.f32 %v284, %v1577
  %v1579 = vpop.f32.mrf.mxu0
  %v1580 = vpop.f32.mrf.mxu0
  %v1581 = vadd.f32 %v284, %v1580
  %v1582 = vpop.f32.mrf.mxu0
  %1583 = vmatprep.mubr.bf16.mxu0 %v894
  %1584 = vmatmul.mubr.bf16.gmra.mxu0 %v893
  %v1585 = vpop.f32.mrf.mxu0
  %v1586 = vadd.f32 %v284, %v1585
  %v1587 = vpop.f32.mrf.mxu0
  %v1588 = vpop.f32.mrf.mxu0
  %v1589 = vadd.f32 %v284, %v1588
  %v1590 = vpop.f32.mrf.mxu0
  %1591 = vmatprep.mubr.bf16.mxu0 %v899
  %1592 = vmatmul.mubr.bf16.gmra.mxu0 %v898
  %v1593 = vpop.f32.mrf.mxu0
  %v1594 = vadd.f32 %v284, %v1593
  %v1595 = vpop.f32.mrf.mxu0
  %v1596 = vpop.f32.mrf.mxu0
  %v1597 = vadd.f32 %v284, %v1596
  %v1598 = vpop.f32.mrf.mxu0
  %1599 = vmatprep.mubr.bf16.mxu0 %v904
  %1600 = vmatmul.mubr.bf16.gmra.mxu0 %v903
  %v1601 = vpop.f32.mrf.mxu0
  %v1602 = vadd.f32 %v284, %v1601
  %v1603 = vpop.f32.mrf.mxu0
  %v1604 = vpop.f32.mrf.mxu0
  %v1605 = vadd.f32 %v284, %v1604
  %v1606 = vpop.f32.mrf.mxu0
  %1607 = vmatprep.mubr.bf16.mxu0 %v909
  %1608 = vmatmul.mubr.bf16.gmra.mxu0 %v908
  %v1609 = vpop.f32.mrf.mxu0
  %v1610 = vadd.f32 %v284, %v1609
  %v1611 = vpop.f32.mrf.mxu0
  %v1612 = vpop.f32.mrf.mxu0
  %v1613 = vadd.f32 %v284, %v1612
  %v1614 = vpop.f32.mrf.mxu0
  %1615 = vmatprep.mubr.bf16.mxu0 %v914
  %1616 = vmatmul.mubr.bf16.gmra.mxu0 %v913
  %v1617 = vpop.f32.mrf.mxu0
  %v1618 = vadd.f32 %v284, %v1617
  %v1619 = vpop.f32.mrf.mxu0
  %v1620 = vpop.f32.mrf.mxu0
  %v1621 = vadd.f32 %v284, %v1620
  %v1622 = vpop.f32.mrf.mxu0
  %1623 = vmatprep.mubr.bf16.mxu0 %v919
  %1624 = vmatmul.mubr.bf16.gmra.mxu0 %v918
  %v1625 = vpop.f32.mrf.mxu0
  %v1626 = vadd.f32 %v284, %v1625
  %v1627 = vpop.f32.mrf.mxu0
  %v1628 = vpop.f32.mrf.mxu0
  %v1629 = vadd.f32 %v284, %v1628
  %v1630 = vpop.f32.mrf.mxu0
  %1631 = vmatprep.mubr.bf16.mxu0 %v924
  %1632 = vmatmul.mubr.bf16.gmra.mxu0 %v923
  %v1633 = vpop.f32.mrf.mxu0
  %v1634 = vadd.f32 %v284, %v1633
  %v1635 = vpop.f32.mrf.mxu0
  %v1636 = vpop.f32.mrf.mxu0
  %v1637 = vadd.f32 %v284, %v1636
  %v1638 = vpop.f32.mrf.mxu0
  %1639 = vmatprep.mubr.bf16.mxu0 %v929
  %1640 = vmatmul.mubr.bf16.gmra.mxu0 %v928
  %v1641 = vpop.f32.mrf.mxu0
  %v1642 = vadd.f32 %v284, %v1641
  %v1643 = vpop.f32.mrf.mxu0
  %v1644 = vpop.f32.mrf.mxu0
  %v1645 = vadd.f32 %v284, %v1644
  %v1646 = vpop.f32.mrf.mxu0
  %1647 = vmatprep.mubr.bf16.mxu0 %v934
  %1648 = vmatmul.mubr.bf16.gmra.mxu0 %v933
  %v1649 = vpop.f32.mrf.mxu0
  %v1650 = vadd.f32 %v284, %v1649
  %v1651 = vpop.f32.mrf.mxu0
  %v1652 = vpop.f32.mrf.mxu0
  %v1653 = vadd.f32 %v284, %v1652
  %v1654 = vpop.f32.mrf.mxu0
  %1655 = vmatprep.mubr.bf16.mxu0 %v939
  %1656 = vmatmul.mubr.bf16.gmra.mxu0 %v938
  %v1657 = vpop.f32.mrf.mxu0
  %v1658 = vadd.f32 %v284, %v1657
  %v1659 = vpop.f32.mrf.mxu0
  %v1660 = vpop.f32.mrf.mxu0
  %v1661 = vadd.f32 %v284, %v1660
  %v1662 = vpop.f32.mrf.mxu0
  %1663 = vmatprep.mubr.bf16.mxu0 %v944
  %1664 = vmatmul.mubr.bf16.gmra.mxu0 %v943
  %v1665 = vpop.f32.mrf.mxu0
  %v1666 = vadd.f32 %v284, %v1665
  %v1667 = vpop.f32.mrf.mxu0
  %v1668 = vpop.f32.mrf.mxu0
  %v1669 = vadd.f32 %v284, %v1668
  %v1670 = vpop.f32.mrf.mxu0
  %1671 = vmatprep.mubr.bf16.mxu0 %v949
  %1672 = vmatmul.mubr.bf16.gmra.mxu0 %v948
  %v1673 = vpop.f32.mrf.mxu0
  %v1674 = vadd.f32 %v284, %v1673
  %v1675 = vpop.f32.mrf.mxu0
  %v1676 = vpop.f32.mrf.mxu0
  %v1677 = vadd.f32 %v284, %v1676
  %v1678 = vpop.f32.mrf.mxu0
  %1679 = vmatprep.mubr.bf16.mxu0 %v954
  %1680 = vmatmul.mubr.bf16.gmra.mxu0 %v953
  %v1681 = vpop.f32.mrf.mxu0
  %v1682 = vadd.f32 %v284, %v1681
  %v1683 = vpop.f32.mrf.mxu0
  %v1684 = vpop.f32.mrf.mxu0
  %v1685 = vadd.f32 %v284, %v1684
  %v1686 = vpop.f32.mrf.mxu0
  %1687 = vdwg.mxu0
  %1688 = vmatprep.subr.bf16.mxu0 0
  %1689 = vmatpush1.bf16.msra.mxu0 %v1253
  %1690 = vmatprep.subr.bf16.mxu0 0
  %1691 = vmatpush1.bf16.msra.mxu0 %v1252
  %1692 = vmatprep.subr.bf16.mxu0 0
  %1693 = vmatpush1.bf16.msra.mxu0 %v1251
  %1694 = vmatprep.subr.bf16.mxu0 0
  %1695 = vmatpush1.bf16.msra.mxu0 %v1250
  %1696 = vmatprep.subr.bf16.mxu0 0
  %1697 = vmatpush1.bf16.msra.mxu0 %v1249
  %1698 = vmatprep.subr.bf16.mxu0 0
  %1699 = vmatpush1.bf16.msra.mxu0 %v1248
  %1700 = vmatprep.subr.bf16.mxu0 0
  %1701 = vmatpush1.bf16.msra.mxu0 %v1247
  %1702 = vmatprep.subr.bf16.mxu0 0
  %1703 = vmatpush1.bf16.msra.mxu0 %v1246
  %1704 = vmatprep.subr.bf16.mxu0 0
  %1705 = vmatpush2.bf16.msra.mxu0 %v1261
  %1706 = vmatprep.subr.bf16.mxu0 0
  %1707 = vmatpush2.bf16.msra.mxu0 %v1260
  %1708 = vmatprep.subr.bf16.mxu0 0
  %1709 = vmatpush2.bf16.msra.mxu0 %v1259
  %1710 = vmatprep.subr.bf16.mxu0 0
  %1711 = vmatpush2.bf16.msra.mxu0 %v1258
  %1712 = vmatprep.subr.bf16.mxu0 0
  %1713 = vmatpush2.bf16.msra.mxu0 %v1257
  %1714 = vmatprep.subr.bf16.mxu0 0
  %1715 = vmatpush2.bf16.msra.mxu0 %v1256
  %1716 = vmatprep.subr.bf16.mxu0 0
  %1717 = vmatpush2.bf16.msra.mxu0 %v1255
  %1718 = vmatprep.subr.bf16.mxu0 0
  %1719 = vmatpush2.bf16.msra.mxu0 %v1254
  %1720 = vmatprep.mubr.bf16.mxu0 %v801
  %1721 = vmatmul.mubr.bf16.gmra.mxu0 %v800
  %v1722 = vpop.f32.mrf.mxu0
  %v1723 = vadd.f32 %v1434, %v1722
  %v1724 = vpop.f32.mrf.mxu0
  %v1725 = vpop.f32.mrf.mxu0
  %v1726 = vadd.f32 %v1437, %v1725
  %v1727 = vpop.f32.mrf.mxu0
  %1728 = vmatprep.mubr.bf16.mxu0 %v806
  %1729 = vmatmul.mubr.bf16.gmra.mxu0 %v805
  %v1730 = vpop.f32.mrf.mxu0
  %v1731 = vadd.f32 %v1442, %v1730
  %v1732 = vpop.f32.mrf.mxu0
  %v1733 = vpop.f32.mrf.mxu0
  %v1734 = vadd.f32 %v1445, %v1733
  %v1735 = vpop.f32.mrf.mxu0
  %1736 = vmatprep.mubr.bf16.mxu0 %v811
  %1737 = vmatmul.mubr.bf16.gmra.mxu0 %v810
  %v1738 = vpop.f32.mrf.mxu0
  %v1739 = vadd.f32 %v1450, %v1738
  %v1740 = vpop.f32.mrf.mxu0
  %v1741 = vpop.f32.mrf.mxu0
  %v1742 = vadd.f32 %v1453, %v1741
  %v1743 = vpop.f32.mrf.mxu0
  %1744 = vmatprep.mubr.bf16.mxu0 %v816
  %1745 = vmatmul.mubr.bf16.gmra.mxu0 %v815
  %v1746 = vpop.f32.mrf.mxu0
  %v1747 = vadd.f32 %v1458, %v1746
  %v1748 = vpop.f32.mrf.mxu0
  %v1749 = vpop.f32.mrf.mxu0
  %v1750 = vadd.f32 %v1461, %v1749
  %v1751 = vpop.f32.mrf.mxu0
  %1752 = vmatprep.mubr.bf16.mxu0 %v821
  %1753 = vmatmul.mubr.bf16.gmra.mxu0 %v820
  %v1754 = vpop.f32.mrf.mxu0
  %v1755 = vadd.f32 %v1466, %v1754
  %v1756 = vpop.f32.mrf.mxu0
  %v1757 = vpop.f32.mrf.mxu0
  %v1758 = vadd.f32 %v1469, %v1757
  %v1759 = vpop.f32.mrf.mxu0
  %1760 = vmatprep.mubr.bf16.mxu0 %v826
  %1761 = vmatmul.mubr.bf16.gmra.mxu0 %v825
  %v1762 = vpop.f32.mrf.mxu0
  %v1763 = vadd.f32 %v1474, %v1762
  %v1764 = vpop.f32.mrf.mxu0
  %v1765 = vpop.f32.mrf.mxu0
  %v1766 = vadd.f32 %v1477, %v1765
  %v1767 = vpop.f32.mrf.mxu0
  %1768 = vmatprep.mubr.bf16.mxu0 %v831
  %1769 = vmatmul.mubr.bf16.gmra.mxu0 %v830
  %v1770 = vpop.f32.mrf.mxu0
  %v1771 = vadd.f32 %v1482, %v1770
  %v1772 = vpop.f32.mrf.mxu0
  %v1773 = vpop.f32.mrf.mxu0
  %v1774 = vadd.f32 %v1485, %v1773
  %v1775 = vpop.f32.mrf.mxu0
  %1776 = vmatprep.mubr.bf16.mxu0 %v836
  %1777 = vmatmul.mubr.bf16.gmra.mxu0 %v835
  %v1778 = vpop.f32.mrf.mxu0
  %v1779 = vadd.f32 %v1490, %v1778
  %v1780 = vpop.f32.mrf.mxu0
  %v1781 = vpop.f32.mrf.mxu0
  %v1782 = vadd.f32 %v1493, %v1781
  %v1783 = vpop.f32.mrf.mxu0
  %1784 = vmatprep.mubr.bf16.mxu0 %v841
  %1785 = vmatmul.mubr.bf16.gmra.mxu0 %v840
  %v1786 = vpop.f32.mrf.mxu0
  %v1787 = vadd.f32 %v1498, %v1786
  %v1788 = vpop.f32.mrf.mxu0
  %v1789 = vpop.f32.mrf.mxu0
  %v1790 = vadd.f32 %v1501, %v1789
  %v1791 = vpop.f32.mrf.mxu0
  %1792 = vmatprep.mubr.bf16.mxu0 %v846
  %1793 = vmatmul.mubr.bf16.gmra.mxu0 %v845
  %v1794 = vpop.f32.mrf.mxu0
  %v1795 = vadd.f32 %v1506, %v1794
  %v1796 = vpop.f32.mrf.mxu0
  %v1797 = vpop.f32.mrf.mxu0
  %v1798 = vadd.f32 %v1509, %v1797
  %v1799 = vpop.f32.mrf.mxu0
  %1800 = vmatprep.mubr.bf16.mxu0 %v851
  %1801 = vmatmul.mubr.bf16.gmra.mxu0 %v850
  %v1802 = vpop.f32.mrf.mxu0
  %v1803 = vadd.f32 %v1514, %v1802
  %v1804 = vpop.f32.mrf.mxu0
  %v1805 = vpop.f32.mrf.mxu0
  %v1806 = vadd.f32 %v1517, %v1805
  %v1807 = vpop.f32.mrf.mxu0
  %1808 = vmatprep.mubr.bf16.mxu0 %v856
  %1809 = vmatmul.mubr.bf16.gmra.mxu0 %v855
  %v1810 = vpop.f32.mrf.mxu0
  %v1811 = vadd.f32 %v1522, %v1810
  %v1812 = vpop.f32.mrf.mxu0
  %v1813 = vpop.f32.mrf.mxu0
  %v1814 = vadd.f32 %v1525, %v1813
  %v1815 = vpop.f32.mrf.mxu0
  %1816 = vmatprep.mubr.bf16.mxu0 %v861
  %1817 = vmatmul.mubr.bf16.gmra.mxu0 %v860
  %v1818 = vpop.f32.mrf.mxu0
  %v1819 = vadd.f32 %v1530, %v1818
  %v1820 = vpop.f32.mrf.mxu0
  %v1821 = vpop.f32.mrf.mxu0
  %v1822 = vadd.f32 %v1533, %v1821
  %v1823 = vpop.f32.mrf.mxu0
  %1824 = vmatprep.mubr.bf16.mxu0 %v866
  %1825 = vmatmul.mubr.bf16.gmra.mxu0 %v865
  %v1826 = vpop.f32.mrf.mxu0
  %v1827 = vadd.f32 %v1538, %v1826
  %v1828 = vpop.f32.mrf.mxu0
  %v1829 = vpop.f32.mrf.mxu0
  %v1830 = vadd.f32 %v1541, %v1829
  %v1831 = vpop.f32.mrf.mxu0
  %1832 = vmatprep.mubr.bf16.mxu0 %v871
  %1833 = vmatmul.mubr.bf16.gmra.mxu0 %v870
  %v1834 = vpop.f32.mrf.mxu0
  %v1835 = vadd.f32 %v1546, %v1834
  %v1836 = vpop.f32.mrf.mxu0
  %v1837 = vpop.f32.mrf.mxu0
  %v1838 = vadd.f32 %v1549, %v1837
  %v1839 = vpop.f32.mrf.mxu0
  %1840 = vmatprep.mubr.bf16.mxu0 %v876
  %1841 = vmatmul.mubr.bf16.gmra.mxu0 %v875
  %v1842 = vpop.f32.mrf.mxu0
  %v1843 = vadd.f32 %v1554, %v1842
  %v1844 = vpop.f32.mrf.mxu0
  %v1845 = vpop.f32.mrf.mxu0
  %v1846 = vadd.f32 %v1557, %v1845
  %v1847 = vpop.f32.mrf.mxu0
  %1848 = vmatprep.mubr.bf16.mxu0 %v881
  %1849 = vmatmul.mubr.bf16.gmra.mxu0 %v880
  %v1850 = vpop.f32.mrf.mxu0
  %v1851 = vadd.f32 %v1562, %v1850
  %v1852 = vpop.f32.mrf.mxu0
  %v1853 = vpop.f32.mrf.mxu0
  %v1854 = vadd.f32 %v1565, %v1853
  %v1855 = vpop.f32.mrf.mxu0
  %1856 = vmatprep.mubr.bf16.mxu0 %v886
  %1857 = vmatmul.mubr.bf16.gmra.mxu0 %v885
  %v1858 = vpop.f32.mrf.mxu0
  %v1859 = vadd.f32 %v1570, %v1858
  %v1860 = vpop.f32.mrf.mxu0
  %v1861 = vpop.f32.mrf.mxu0
  %v1862 = vadd.f32 %v1573, %v1861
  %v1863 = vpop.f32.mrf.mxu0
  %1864 = vmatprep.mubr.bf16.mxu0 %v891
  %1865 = vmatmul.mubr.bf16.gmra.mxu0 %v890
  %v1866 = vpop.f32.mrf.mxu0
  %v1867 = vadd.f32 %v1578, %v1866
  %v1868 = vpop.f32.mrf.mxu0
  %v1869 = vpop.f32.mrf.mxu0
  %v1870 = vadd.f32 %v1581, %v1869
  %v1871 = vpop.f32.mrf.mxu0
  %1872 = vmatprep.mubr.bf16.mxu0 %v896
  %1873 = vmatmul.mubr.bf16.gmra.mxu0 %v895
  %v1874 = vpop.f32.mrf.mxu0
  %v1875 = vadd.f32 %v1586, %v1874
  %v1876 = vpop.f32.mrf.mxu0
  %v1877 = vpop.f32.mrf.mxu0
  %v1878 = vadd.f32 %v1589, %v1877
  %v1879 = vpop.f32.mrf.mxu0
  %1880 = vmatprep.mubr.bf16.mxu0 %v901
  %1881 = vmatmul.mubr.bf16.gmra.mxu0 %v900
  %v1882 = vpop.f32.mrf.mxu0
  %v1883 = vadd.f32 %v1594, %v1882
  %v1884 = vpop.f32.mrf.mxu0
  %v1885 = vpop.f32.mrf.mxu0
  %v1886 = vadd.f32 %v1597, %v1885
  %v1887 = vpop.f32.mrf.mxu0
  %1888 = vmatprep.mubr.bf16.mxu0 %v906
  %1889 = vmatmul.mubr.bf16.gmra.mxu0 %v905
  %v1890 = vpop.f32.mrf.mxu0
  %v1891 = vadd.f32 %v1602, %v1890
  %v1892 = vpop.f32.mrf.mxu0
  %v1893 = vpop.f32.mrf.mxu0
  %v1894 = vadd.f32 %v1605, %v1893
  %v1895 = vpop.f32.mrf.mxu0
  %1896 = vmatprep.mubr.bf16.mxu0 %v911
  %1897 = vmatmul.mubr.bf16.gmra.mxu0 %v910
  %v1898 = vpop.f32.mrf.mxu0
  %v1899 = vadd.f32 %v1610, %v1898
  %v1900 = vpop.f32.mrf.mxu0
  %v1901 = vpop.f32.mrf.mxu0
  %v1902 = vadd.f32 %v1613, %v1901
  %v1903 = vpop.f32.mrf.mxu0
  %1904 = vmatprep.mubr.bf16.mxu0 %v916
  %1905 = vmatmul.mubr.bf16.gmra.mxu0 %v915
  %v1906 = vpop.f32.mrf.mxu0
  %v1907 = vadd.f32 %v1618, %v1906
  %v1908 = vpop.f32.mrf.mxu0
  %v1909 = vpop.f32.mrf.mxu0
  %v1910 = vadd.f32 %v1621, %v1909
  %v1911 = vpop.f32.mrf.mxu0
  %1912 = vmatprep.mubr.bf16.mxu0 %v921
  %1913 = vmatmul.mubr.bf16.gmra.mxu0 %v920
  %v1914 = vpop.f32.mrf.mxu0
  %v1915 = vadd.f32 %v1626, %v1914
  %v1916 = vpop.f32.mrf.mxu0
  %v1917 = vpop.f32.mrf.mxu0
  %v1918 = vadd.f32 %v1629, %v1917
  %v1919 = vpop.f32.mrf.mxu0
  %1920 = vmatprep.mubr.bf16.mxu0 %v926
  %1921 = vmatmul.mubr.bf16.gmra.mxu0 %v925
  %v1922 = vpop.f32.mrf.mxu0
  %v1923 = vadd.f32 %v1634, %v1922
  %v1924 = vpop.f32.mrf.mxu0
  %v1925 = vpop.f32.mrf.mxu0
  %v1926 = vadd.f32 %v1637, %v1925
  %v1927 = vpop.f32.mrf.mxu0
  %1928 = vmatprep.mubr.bf16.mxu0 %v931
  %1929 = vmatmul.mubr.bf16.gmra.mxu0 %v930
  %v1930 = vpop.f32.mrf.mxu0
  %v1931 = vadd.f32 %v1642, %v1930
  %v1932 = vpop.f32.mrf.mxu0
  %v1933 = vpop.f32.mrf.mxu0
  %v1934 = vadd.f32 %v1645, %v1933
  %v1935 = vpop.f32.mrf.mxu0
  %1936 = vmatprep.mubr.bf16.mxu0 %v936
  %1937 = vmatmul.mubr.bf16.gmra.mxu0 %v935
  %v1938 = vpop.f32.mrf.mxu0
  %v1939 = vadd.f32 %v1650, %v1938
  %v1940 = vpop.f32.mrf.mxu0
  %v1941 = vpop.f32.mrf.mxu0
  %v1942 = vadd.f32 %v1653, %v1941
  %v1943 = vpop.f32.mrf.mxu0
  %1944 = vmatprep.mubr.bf16.mxu0 %v941
  %1945 = vmatmul.mubr.bf16.gmra.mxu0 %v940
  %v1946 = vpop.f32.mrf.mxu0
  %v1947 = vadd.f32 %v1658, %v1946
  %v1948 = vpop.f32.mrf.mxu0
  %v1949 = vpop.f32.mrf.mxu0
  %v1950 = vadd.f32 %v1661, %v1949
  %v1951 = vpop.f32.mrf.mxu0
  %1952 = vmatprep.mubr.bf16.mxu0 %v946
  %1953 = vmatmul.mubr.bf16.gmra.mxu0 %v945
  %v1954 = vpop.f32.mrf.mxu0
  %v1955 = vadd.f32 %v1666, %v1954
  %v1956 = vpop.f32.mrf.mxu0
  %v1957 = vpop.f32.mrf.mxu0
  %v1958 = vadd.f32 %v1669, %v1957
  %v1959 = vpop.f32.mrf.mxu0
  %1960 = vmatprep.mubr.bf16.mxu0 %v951
  %1961 = vmatmul.mubr.bf16.gmra.mxu0 %v950
  %v1962 = vpop.f32.mrf.mxu0
  %v1963 = vadd.f32 %v1674, %v1962
  %v1964 = vpop.f32.mrf.mxu0
  %v1965 = vpop.f32.mrf.mxu0
  %v1966 = vadd.f32 %v1677, %v1965
  %v1967 = vpop.f32.mrf.mxu0
  %1968 = vmatprep.mubr.bf16.mxu0 %v956
  %1969 = vmatmul.mubr.bf16.gmra.mxu0 %v955
  %v1970 = vpop.f32.mrf.mxu0
  %v1971 = vadd.f32 %v1682, %v1970
  %v1972 = vpop.f32.mrf.mxu0
  %v1973 = vpop.f32.mrf.mxu0
  %v1974 = vadd.f32 %v1685, %v1973
  %v1975 = vpop.f32.mrf.mxu0
  %1976 = vdwg.mxu0
  %1977 = vmatprep.subr.bf16.mxu0 0
  %1978 = vmatpush1.bf16.msra.mxu0 0
  %1979 = vmatprep.subr.bf16.mxu0 0
  %1980 = vmatpush1.bf16.msra.mxu0 0
  %1981 = vmatprep.subr.bf16.mxu0 0
  %1982 = vmatpush1.bf16.msra.mxu0 0
  %1983 = vmatprep.subr.bf16.mxu0 0
  %1984 = vmatpush1.bf16.msra.mxu0 0
  %1985 = vmatprep.subr.bf16.mxu0 0
  %1986 = vmatpush1.bf16.msra.mxu0 %v1265
  %1987 = vmatprep.subr.bf16.mxu0 0
  %1988 = vmatpush1.bf16.msra.mxu0 %v1264
  %1989 = vmatprep.subr.bf16.mxu0 0
  %1990 = vmatpush1.bf16.msra.mxu0 %v1263
  %1991 = vmatprep.subr.bf16.mxu0 0
  %1992 = vmatpush1.bf16.msra.mxu0 %v1262
  %1993 = vmatprep.subr.bf16.mxu0 0
  %1994 = vmatpush2.bf16.msra.mxu0 0
  %1995 = vmatprep.subr.bf16.mxu0 0
  %1996 = vmatpush2.bf16.msra.mxu0 0
  %1997 = vmatprep.subr.bf16.mxu0 0
  %1998 = vmatpush2.bf16.msra.mxu0 0
  %1999 = vmatprep.subr.bf16.mxu0 0
  %2000 = vmatpush2.bf16.msra.mxu0 0
  %2001 = vmatprep.subr.bf16.mxu0 0
  %2002 = vmatpush2.bf16.msra.mxu0 0
  %2003 = vmatprep.subr.bf16.mxu0 0
  %2004 = vmatpush2.bf16.msra.mxu0 0
  %2005 = vmatprep.subr.bf16.mxu0 0
  %2006 = vmatpush2.bf16.msra.mxu0 0
  %2007 = vmatprep.subr.bf16.mxu0 0
  %2008 = vmatpush2.bf16.msra.mxu0 0
  %2009 = vmatprep.mubr.bf16.mxu0 0
  %2010 = vmatmul.mubr.bf16.gmra.mxu0 %v1304
  %v2011 = vpop.f32.mrf.mxu0
  %v2012 = vadd.f32 %v1723, %v2011
  %v2013 = vpop.f32.mrf.mxu0
  %v2014 = vpop.f32.mrf.mxu0
  %v2015 = vadd.f32 %v1726, %v2014
  %v2016 = vpop.f32.mrf.mxu0
  %2017 = vmatprep.mubr.bf16.mxu0 0
  %2018 = vmatmul.mubr.bf16.gmra.mxu0 %v1307
  %v2019 = vpop.f32.mrf.mxu0
  %v2020 = vadd.f32 %v1731, %v2019
  %v2021 = vpop.f32.mrf.mxu0
  %v2022 = vpop.f32.mrf.mxu0
  %v2023 = vadd.f32 %v1734, %v2022
  %v2024 = vpop.f32.mrf.mxu0
  %2025 = vmatprep.mubr.bf16.mxu0 0
  %2026 = vmatmul.mubr.bf16.gmra.mxu0 %v1310
  %v2027 = vpop.f32.mrf.mxu0
  %v2028 = vadd.f32 %v1739, %v2027
  %v2029 = vpop.f32.mrf.mxu0
  %v2030 = vpop.f32.mrf.mxu0
  %v2031 = vadd.f32 %v1742, %v2030
  %v2032 = vpop.f32.mrf.mxu0
  %2033 = vmatprep.mubr.bf16.mxu0 0
  %2034 = vmatmul.mubr.bf16.gmra.mxu0 %v1313
  %v2035 = vpop.f32.mrf.mxu0
  %v2036 = vadd.f32 %v1747, %v2035
  %v2037 = vpop.f32.mrf.mxu0
  %v2038 = vpop.f32.mrf.mxu0
  %v2039 = vadd.f32 %v1750, %v2038
  %v2040 = vpop.f32.mrf.mxu0
  %2041 = vmatprep.mubr.bf16.mxu0 0
  %2042 = vmatmul.mubr.bf16.gmra.mxu0 %v1316
  %v2043 = vpop.f32.mrf.mxu0
  %v2044 = vadd.f32 %v1755, %v2043
  %v2045 = vpop.f32.mrf.mxu0
  %v2046 = vpop.f32.mrf.mxu0
  %v2047 = vadd.f32 %v1758, %v2046
  %v2048 = vpop.f32.mrf.mxu0
  %2049 = vmatprep.mubr.bf16.mxu0 0
  %2050 = vmatmul.mubr.bf16.gmra.mxu0 %v1319
  %v2051 = vpop.f32.mrf.mxu0
  %v2052 = vadd.f32 %v1763, %v2051
  %v2053 = vpop.f32.mrf.mxu0
  %v2054 = vpop.f32.mrf.mxu0
  %v2055 = vadd.f32 %v1766, %v2054
  %v2056 = vpop.f32.mrf.mxu0
  %2057 = vmatprep.mubr.bf16.mxu0 0
  %2058 = vmatmul.mubr.bf16.gmra.mxu0 %v1322
  %v2059 = vpop.f32.mrf.mxu0
  %v2060 = vadd.f32 %v1771, %v2059
  %v2061 = vpop.f32.mrf.mxu0
  %v2062 = vpop.f32.mrf.mxu0
  %v2063 = vadd.f32 %v1774, %v2062
  %v2064 = vpop.f32.mrf.mxu0
  %2065 = vmatprep.mubr.bf16.mxu0 0
  %2066 = vmatmul.mubr.bf16.gmra.mxu0 %v1325
  %v2067 = vpop.f32.mrf.mxu0
  %v2068 = vadd.f32 %v1779, %v2067
  %v2069 = vpop.f32.mrf.mxu0
  %v2070 = vpop.f32.mrf.mxu0
  %v2071 = vadd.f32 %v1782, %v2070
  %v2072 = vpop.f32.mrf.mxu0
  %2073 = vmatprep.mubr.bf16.mxu0 0
  %2074 = vmatmul.mubr.bf16.gmra.mxu0 %v1328
  %v2075 = vpop.f32.mrf.mxu0
  %v2076 = vadd.f32 %v1787, %v2075
  %v2077 = vpop.f32.mrf.mxu0
  %v2078 = vpop.f32.mrf.mxu0
  %v2079 = vadd.f32 %v1790, %v2078
  %v2080 = vpop.f32.mrf.mxu0
  %2081 = vmatprep.mubr.bf16.mxu0 0
  %2082 = vmatmul.mubr.bf16.gmra.mxu0 %v1331
  %v2083 = vpop.f32.mrf.mxu0
  %v2084 = vadd.f32 %v1795, %v2083
  %v2085 = vpop.f32.mrf.mxu0
  %v2086 = vpop.f32.mrf.mxu0
  %v2087 = vadd.f32 %v1798, %v2086
  %v2088 = vpop.f32.mrf.mxu0
  %2089 = vmatprep.mubr.bf16.mxu0 0
  %2090 = vmatmul.mubr.bf16.gmra.mxu0 %v1334
  %v2091 = vpop.f32.mrf.mxu0
  %v2092 = vadd.f32 %v1803, %v2091
  %v2093 = vpop.f32.mrf.mxu0
  %v2094 = vpop.f32.mrf.mxu0
  %v2095 = vadd.f32 %v1806, %v2094
  %v2096 = vpop.f32.mrf.mxu0
  %2097 = vmatprep.mubr.bf16.mxu0 0
  %2098 = vmatmul.mubr.bf16.gmra.mxu0 %v1337
  %v2099 = vpop.f32.mrf.mxu0
  %v2100 = vadd.f32 %v1811, %v2099
  %v2101 = vpop.f32.mrf.mxu0
  %v2102 = vpop.f32.mrf.mxu0
  %v2103 = vadd.f32 %v1814, %v2102
  %v2104 = vpop.f32.mrf.mxu0
  %2105 = vmatprep.mubr.bf16.mxu0 0
  %2106 = vmatmul.mubr.bf16.gmra.mxu0 %v1340
  %v2107 = vpop.f32.mrf.mxu0
  %v2108 = vadd.f32 %v1819, %v2107
  %v2109 = vpop.f32.mrf.mxu0
  %v2110 = vpop.f32.mrf.mxu0
  %v2111 = vadd.f32 %v1822, %v2110
  %v2112 = vpop.f32.mrf.mxu0
  %2113 = vmatprep.mubr.bf16.mxu0 0
  %2114 = vmatmul.mubr.bf16.gmra.mxu0 %v1343
  %v2115 = vpop.f32.mrf.mxu0
  %v2116 = vadd.f32 %v1827, %v2115
  %v2117 = vpop.f32.mrf.mxu0
  %v2118 = vpop.f32.mrf.mxu0
  %v2119 = vadd.f32 %v1830, %v2118
  %v2120 = vpop.f32.mrf.mxu0
  %2121 = vmatprep.mubr.bf16.mxu0 0
  %2122 = vmatmul.mubr.bf16.gmra.mxu0 %v1346
  %v2123 = vpop.f32.mrf.mxu0
  %v2124 = vadd.f32 %v1835, %v2123
  %v2125 = vpop.f32.mrf.mxu0
  %v2126 = vpop.f32.mrf.mxu0
  %v2127 = vadd.f32 %v1838, %v2126
  %v2128 = vpop.f32.mrf.mxu0
  %2129 = vmatprep.mubr.bf16.mxu0 0
  %2130 = vmatmul.mubr.bf16.gmra.mxu0 %v1349
  %v2131 = vpop.f32.mrf.mxu0
  %v2132 = vadd.f32 %v1843, %v2131
  %v2133 = vpop.f32.mrf.mxu0
  %v2134 = vpop.f32.mrf.mxu0
  %v2135 = vadd.f32 %v1846, %v2134
  %v2136 = vpop.f32.mrf.mxu0
  %2137 = vmatprep.mubr.bf16.mxu0 0
  %2138 = vmatmul.mubr.bf16.gmra.mxu0 %v1352
  %v2139 = vpop.f32.mrf.mxu0
  %v2140 = vadd.f32 %v1851, %v2139
  %v2141 = vpop.f32.mrf.mxu0
  %v2142 = vpop.f32.mrf.mxu0
  %v2143 = vadd.f32 %v1854, %v2142
  %v2144 = vpop.f32.mrf.mxu0
  %2145 = vmatprep.mubr.bf16.mxu0 0
  %2146 = vmatmul.mubr.bf16.gmra.mxu0 %v1355
  %v2147 = vpop.f32.mrf.mxu0
  %v2148 = vadd.f32 %v1859, %v2147
  %v2149 = vpop.f32.mrf.mxu0
  %v2150 = vpop.f32.mrf.mxu0
  %v2151 = vadd.f32 %v1862, %v2150
  %v2152 = vpop.f32.mrf.mxu0
  %2153 = vmatprep.mubr.bf16.mxu0 0
  %2154 = vmatmul.mubr.bf16.gmra.mxu0 %v1358
  %v2155 = vpop.f32.mrf.mxu0
  %v2156 = vadd.f32 %v1867, %v2155
  %v2157 = vpop.f32.mrf.mxu0
  %v2158 = vpop.f32.mrf.mxu0
  %v2159 = vadd.f32 %v1870, %v2158
  %v2160 = vpop.f32.mrf.mxu0
  %2161 = vmatprep.mubr.bf16.mxu0 0
  %2162 = vmatmul.mubr.bf16.gmra.mxu0 %v1361
  %v2163 = vpop.f32.mrf.mxu0
  %v2164 = vadd.f32 %v1875, %v2163
  %v2165 = vpop.f32.mrf.mxu0
  %v2166 = vpop.f32.mrf.mxu0
  %v2167 = vadd.f32 %v1878, %v2166
  %v2168 = vpop.f32.mrf.mxu0
  %2169 = vmatprep.mubr.bf16.mxu0 0
  %2170 = vmatmul.mubr.bf16.gmra.mxu0 %v1364
  %v2171 = vpop.f32.mrf.mxu0
  %v2172 = vadd.f32 %v1883, %v2171
  %v2173 = vpop.f32.mrf.mxu0
  %v2174 = vpop.f32.mrf.mxu0
  %v2175 = vadd.f32 %v1886, %v2174
  %v2176 = vpop.f32.mrf.mxu0
  %2177 = vmatprep.mubr.bf16.mxu0 0
  %2178 = vmatmul.mubr.bf16.gmra.mxu0 %v1367
  %v2179 = vpop.f32.mrf.mxu0
  %v2180 = vadd.f32 %v1891, %v2179
  %v2181 = vpop.f32.mrf.mxu0
  %v2182 = vpop.f32.mrf.mxu0
  %v2183 = vadd.f32 %v1894, %v2182
  %v2184 = vpop.f32.mrf.mxu0
  %2185 = vmatprep.mubr.bf16.mxu0 0
  %2186 = vmatmul.mubr.bf16.gmra.mxu0 %v1370
  %v2187 = vpop.f32.mrf.mxu0
  %v2188 = vadd.f32 %v1899, %v2187
  %v2189 = vpop.f32.mrf.mxu0
  %v2190 = vpop.f32.mrf.mxu0
  %v2191 = vadd.f32 %v1902, %v2190
  %v2192 = vpop.f32.mrf.mxu0
  %2193 = vmatprep.mubr.bf16.mxu0 0
  %2194 = vmatmul.mubr.bf16.gmra.mxu0 %v1373
  %v2195 = vpop.f32.mrf.mxu0
  %v2196 = vadd.f32 %v1907, %v2195
  %v2197 = vpop.f32.mrf.mxu0
  %v2198 = vpop.f32.mrf.mxu0
  %v2199 = vadd.f32 %v1910, %v2198
  %v2200 = vpop.f32.mrf.mxu0
  %2201 = vmatprep.mubr.bf16.mxu0 0
  %2202 = vmatmul.mubr.bf16.gmra.mxu0 %v1376
  %v2203 = vpop.f32.mrf.mxu0
  %v2204 = vadd.f32 %v1915, %v2203
  %v2205 = vpop.f32.mrf.mxu0
  %v2206 = vpop.f32.mrf.mxu0
  %v2207 = vadd.f32 %v1918, %v2206
  %v2208 = vpop.f32.mrf.mxu0
  %2209 = vmatprep.mubr.bf16.mxu0 0
  %2210 = vmatmul.mubr.bf16.gmra.mxu0 %v1379
  %v2211 = vpop.f32.mrf.mxu0
  %v2212 = vadd.f32 %v1923, %v2211
  %v2213 = vpop.f32.mrf.mxu0
  %v2214 = vpop.f32.mrf.mxu0
  %v2215 = vadd.f32 %v1926, %v2214
  %v2216 = vpop.f32.mrf.mxu0
  %2217 = vmatprep.mubr.bf16.mxu0 0
  %2218 = vmatmul.mubr.bf16.gmra.mxu0 %v1382
  %v2219 = vpop.f32.mrf.mxu0
  %v2220 = vadd.f32 %v1931, %v2219
  %v2221 = vpop.f32.mrf.mxu0
  %v2222 = vpop.f32.mrf.mxu0
  %v2223 = vadd.f32 %v1934, %v2222
  %v2224 = vpop.f32.mrf.mxu0
  %2225 = vmatprep.mubr.bf16.mxu0 0
  %2226 = vmatmul.mubr.bf16.gmra.mxu0 %v1385
  %v2227 = vpop.f32.mrf.mxu0
  %v2228 = vadd.f32 %v1939, %v2227
  %v2229 = vpop.f32.mrf.mxu0
  %v2230 = vpop.f32.mrf.mxu0
  %v2231 = vadd.f32 %v1942, %v2230
  %v2232 = vpop.f32.mrf.mxu0
  %2233 = vmatprep.mubr.bf16.mxu0 0
  %2234 = vmatmul.mubr.bf16.gmra.mxu0 %v1388
  %v2235 = vpop.f32.mrf.mxu0
  %v2236 = vadd.f32 %v1947, %v2235
  %v2237 = vpop.f32.mrf.mxu0
  %v2238 = vpop.f32.mrf.mxu0
  %v2239 = vadd.f32 %v1950, %v2238
  %v2240 = vpop.f32.mrf.mxu0
  %2241 = vmatprep.mubr.bf16.mxu0 0
  %2242 = vmatmul.mubr.bf16.gmra.mxu0 %v1391
  %v2243 = vpop.f32.mrf.mxu0
  %v2244 = vadd.f32 %v1955, %v2243
  %v2245 = vpop.f32.mrf.mxu0
  %v2246 = vpop.f32.mrf.mxu0
  %v2247 = vadd.f32 %v1958, %v2246
  %v2248 = vpop.f32.mrf.mxu0
  %2249 = vmatprep.mubr.bf16.mxu0 0
  %2250 = vmatmul.mubr.bf16.gmra.mxu0 %v1394
  %v2251 = vpop.f32.mrf.mxu0
  %v2252 = vadd.f32 %v1963, %v2251
  %v2253 = vpop.f32.mrf.mxu0
  %v2254 = vpop.f32.mrf.mxu0
  %v2255 = vadd.f32 %v1966, %v2254
  %v2256 = vpop.f32.mrf.mxu0
  %2257 = vmatprep.mubr.bf16.mxu0 0
  %2258 = vmatmul.mubr.bf16.gmra.mxu0 %v1397
  %v2259 = vpop.f32.mrf.mxu0
  %v2260 = vadd.f32 %v1971, %v2259
  %v2261 = vpop.f32.mrf.mxu0
  %v2262 = vpop.f32.mrf.mxu0
  %v2263 = vadd.f32 %v1974, %v2262
  %v2264 = vpop.f32.mrf.mxu0
  %2265 = vdwg.mxu0
  %v2266 = vxor.u32 %v2012, 2147483648
  %v2267 = vxor.u32 %v2015, 2147483648
  %v2268 = vxor.u32 %v2020, 2147483648
  %v2269 = vxor.u32 %v2023, 2147483648
  %v2270 = vxor.u32 %v2028, 2147483648
  %v2271 = vxor.u32 %v2031, 2147483648
  %v2272 = vxor.u32 %v2036, 2147483648
  %v2273 = vxor.u32 %v2039, 2147483648
  %v2274 = vxor.u32 %v2044, 2147483648
  %v2275 = vxor.u32 %v2047, 2147483648
  %v2276 = vxor.u32 %v2052, 2147483648
  %v2277 = vxor.u32 %v2055, 2147483648
  %v2278 = vxor.u32 %v2060, 2147483648
  %v2279 = vxor.u32 %v2063, 2147483648
  %v2280 = vxor.u32 %v2068, 2147483648
  %v2281 = vxor.u32 %v2071, 2147483648
  %v2282 = vxor.u32 %v2076, 2147483648
  %v2283 = vxor.u32 %v2079, 2147483648
  %v2284 = vxor.u32 %v2084, 2147483648
  %v2285 = vxor.u32 %v2087, 2147483648
  %v2286 = vxor.u32 %v2092, 2147483648
  %v2287 = vxor.u32 %v2095, 2147483648
  %v2288 = vxor.u32 %v2100, 2147483648
  %v2289 = vxor.u32 %v2103, 2147483648
  %v2290 = vxor.u32 %v2108, 2147483648
  %v2291 = vxor.u32 %v2111, 2147483648
  %v2292 = vxor.u32 %v2116, 2147483648
  %v2293 = vxor.u32 %v2119, 2147483648
  %v2294 = vxor.u32 %v2124, 2147483648
  %v2295 = vxor.u32 %v2127, 2147483648
  %v2296 = vxor.u32 %v2132, 2147483648
  %v2297 = vxor.u32 %v2135, 2147483648
  %v2298 = vxor.u32 %v2140, 2147483648
  %v2299 = vxor.u32 %v2143, 2147483648
  %v2300 = vxor.u32 %v2148, 2147483648
  %v2301 = vxor.u32 %v2151, 2147483648
  %v2302 = vxor.u32 %v2156, 2147483648
  %v2303 = vxor.u32 %v2159, 2147483648
  %v2304 = vxor.u32 %v2164, 2147483648
  %v2305 = vxor.u32 %v2167, 2147483648
  %v2306 = vxor.u32 %v2172, 2147483648
  %v2307 = vxor.u32 %v2175, 2147483648
  %v2308 = vxor.u32 %v2180, 2147483648
  %v2309 = vxor.u32 %v2183, 2147483648
  %v2310 = vxor.u32 %v2188, 2147483648
  %v2311 = vxor.u32 %v2191, 2147483648
  %v2312 = vxor.u32 %v2196, 2147483648
  %v2313 = vxor.u32 %v2199, 2147483648
  %v2314 = vxor.u32 %v2204, 2147483648
  %v2315 = vxor.u32 %v2207, 2147483648
  %v2316 = vxor.u32 %v2212, 2147483648
  %v2317 = vxor.u32 %v2215, 2147483648
  %v2318 = vxor.u32 %v2220, 2147483648
  %v2319 = vxor.u32 %v2223, 2147483648
  %v2320 = vxor.u32 %v2228, 2147483648
  %v2321 = vxor.u32 %v2231, 2147483648
  %v2322 = vxor.u32 %v2236, 2147483648
  %v2323 = vxor.u32 %v2239, 2147483648
  %v2324 = vxor.u32 %v2244, 2147483648
  %v2325 = vxor.u32 %v2247, 2147483648
  %v2326 = vxor.u32 %v2252, 2147483648
  %v2327 = vxor.u32 %v2255, 2147483648
  %v2328 = vxor.u32 %v2260, 2147483648
  %v2329 = vxor.u32 %v2263, 2147483648
  %v2330 = vmul.f32 %v2266, 1.442695
  %v2331 = vpow.pop %v2330
  %v2332 = vmul.f32 %v2267, 1.442695
  %v2333 = vpow.pop %v2332
  %v2334 = vmul.f32 %v2268, 1.442695
  %v2335 = vpow.pop %v2334
  %v2336 = vmul.f32 %v2269, 1.442695
  %v2337 = vpow.pop %v2336
  %v2338 = vmul.f32 %v2270, 1.442695
  %v2339 = vpow.pop %v2338
  %v2340 = vmul.f32 %v2271, 1.442695
  %v2341 = vpow.pop %v2340
  %v2342 = vmul.f32 %v2272, 1.442695
  %v2343 = vpow.pop %v2342
  %v2344 = vmul.f32 %v2273, 1.442695
  %v2345 = vpow.pop %v2344
  %v2346 = vmul.f32 %v2274, 1.442695
  %v2347 = vpow.pop %v2346
  %v2348 = vmul.f32 %v2275, 1.442695
  %v2349 = vpow.pop %v2348
  %v2350 = vmul.f32 %v2276, 1.442695
  %v2351 = vpow.pop %v2350
  %v2352 = vmul.f32 %v2277, 1.442695
  %v2353 = vpow.pop %v2352
  %v2354 = vmul.f32 %v2278, 1.442695
  %v2355 = vpow.pop %v2354
  %v2356 = vmul.f32 %v2279, 1.442695
  %v2357 = vpow.pop %v2356
  %v2358 = vmul.f32 %v2280, 1.442695
  %v2359 = vpow.pop %v2358
  %v2360 = vmul.f32 %v2281, 1.442695
  %v2361 = vpow.pop %v2360
  %v2362 = vmul.f32 %v2282, 1.442695
  %v2363 = vpow.pop %v2362
  %v2364 = vmul.f32 %v2283, 1.442695
  %v2365 = vpow.pop %v2364
  %v2366 = vmul.f32 %v2284, 1.442695
  %v2367 = vpow.pop %v2366
  %v2368 = vmul.f32 %v2285, 1.442695
  %v2369 = vpow.pop %v2368
  %v2370 = vmul.f32 %v2286, 1.442695
  %v2371 = vpow.pop %v2370
  %v2372 = vmul.f32 %v2287, 1.442695
  %v2373 = vpow.pop %v2372
  %v2374 = vmul.f32 %v2288, 1.442695
  %v2375 = vpow.pop %v2374
  %v2376 = vmul.f32 %v2289, 1.442695
  %v2377 = vpow.pop %v2376
  %v2378 = vmul.f32 %v2290, 1.442695
  %v2379 = vpow.pop %v2378
  %v2380 = vmul.f32 %v2291, 1.442695
  %v2381 = vpow.pop %v2380
  %v2382 = vmul.f32 %v2292, 1.442695
  %v2383 = vpow.pop %v2382
  %v2384 = vmul.f32 %v2293, 1.442695
  %v2385 = vpow.pop %v2384
  %v2386 = vmul.f32 %v2294, 1.442695
  %v2387 = vpow.pop %v2386
  %v2388 = vmul.f32 %v2295, 1.442695
  %v2389 = vpow.pop %v2388
  %v2390 = vmul.f32 %v2296, 1.442695
  %v2391 = vpow.pop %v2390
  %v2392 = vmul.f32 %v2297, 1.442695
  %v2393 = vpow.pop %v2392
  %v2394 = vmul.f32 %v2298, 1.442695
  %v2395 = vpow.pop %v2394
  %v2396 = vmul.f32 %v2299, 1.442695
  %v2397 = vpow.pop %v2396
  %v2398 = vmul.f32 %v2300, 1.442695
  %v2399 = vpow.pop %v2398
  %v2400 = vmul.f32 %v2301, 1.442695
  %v2401 = vpow.pop %v2400
  %v2402 = vmul.f32 %v2302, 1.442695
  %v2403 = vpow.pop %v2402
  %v2404 = vmul.f32 %v2303, 1.442695
  %v2405 = vpow.pop %v2404
  %v2406 = vmul.f32 %v2304, 1.442695
  %v2407 = vpow.pop %v2406
  %v2408 = vmul.f32 %v2305, 1.442695
  %v2409 = vpow.pop %v2408
  %v2410 = vmul.f32 %v2306, 1.442695
  %v2411 = vpow.pop %v2410
  %v2412 = vmul.f32 %v2307, 1.442695
  %v2413 = vpow.pop %v2412
  %v2414 = vmul.f32 %v2308, 1.442695
  %v2415 = vpow.pop %v2414
  %v2416 = vmul.f32 %v2309, 1.442695
  %v2417 = vpow.pop %v2416
  %v2418 = vmul.f32 %v2310, 1.442695
  %v2419 = vpow.pop %v2418
  %v2420 = vmul.f32 %v2311, 1.442695
  %v2421 = vpow.pop %v2420
  %v2422 = vmul.f32 %v2312, 1.442695
  %v2423 = vpow.pop %v2422
  %v2424 = vmul.f32 %v2313, 1.442695
  %v2425 = vpow.pop %v2424
  %v2426 = vmul.f32 %v2314, 1.442695
  %v2427 = vpow.pop %v2426
  %v2428 = vmul.f32 %v2315, 1.442695
  %v2429 = vpow.pop %v2428
  %v2430 = vmul.f32 %v2316, 1.442695
  %v2431 = vpow.pop %v2430
  %v2432 = vmul.f32 %v2317, 1.442695
  %v2433 = vpow.pop %v2432
  %v2434 = vmul.f32 %v2318, 1.442695
  %v2435 = vpow.pop %v2434
  %v2436 = vmul.f32 %v2319, 1.442695
  %v2437 = vpow.pop %v2436
  %v2438 = vmul.f32 %v2320, 1.442695
  %v2439 = vpow.pop %v2438
  %v2440 = vmul.f32 %v2321, 1.442695
  %v2441 = vpow.pop %v2440
  %v2442 = vmul.f32 %v2322, 1.442695
  %v2443 = vpow.pop %v2442
  %v2444 = vmul.f32 %v2323, 1.442695
  %v2445 = vpow.pop %v2444
  %v2446 = vmul.f32 %v2324, 1.442695
  %v2447 = vpow.pop %v2446
  %v2448 = vmul.f32 %v2325, 1.442695
  %v2449 = vpow.pop %v2448
  %v2450 = vmul.f32 %v2326, 1.442695
  %v2451 = vpow.pop %v2450
  %v2452 = vmul.f32 %v2327, 1.442695
  %v2453 = vpow.pop %v2452
  %v2454 = vmul.f32 %v2328, 1.442695
  %v2455 = vpow.pop %v2454
  %v2456 = vmul.f32 %v2329, 1.442695
  %v2457 = vpow.pop %v2456
  %v2458 = vadd.f32 %v2331, 1.0
  %v2459 = vadd.f32 %v2333, 1.0
  %v2460 = vadd.f32 %v2335, 1.0
  %v2461 = vadd.f32 %v2337, 1.0
  %v2462 = vadd.f32 %v2339, 1.0
  %v2463 = vadd.f32 %v2341, 1.0
  %v2464 = vadd.f32 %v2343, 1.0
  %v2465 = vadd.f32 %v2345, 1.0
  %v2466 = vadd.f32 %v2347, 1.0
  %v2467 = vadd.f32 %v2349, 1.0
  %v2468 = vadd.f32 %v2351, 1.0
  %v2469 = vadd.f32 %v2353, 1.0
  %v2470 = vadd.f32 %v2355, 1.0
  %v2471 = vadd.f32 %v2357, 1.0
  %v2472 = vadd.f32 %v2359, 1.0
  %v2473 = vadd.f32 %v2361, 1.0
  %v2474 = vadd.f32 %v2363, 1.0
  %v2475 = vadd.f32 %v2365, 1.0
  %v2476 = vadd.f32 %v2367, 1.0
  %v2477 = vadd.f32 %v2369, 1.0
  %v2478 = vadd.f32 %v2371, 1.0
  %v2479 = vadd.f32 %v2373, 1.0
  %v2480 = vadd.f32 %v2375, 1.0
  %v2481 = vadd.f32 %v2377, 1.0
  %v2482 = vadd.f32 %v2379, 1.0
  %v2483 = vadd.f32 %v2381, 1.0
  %v2484 = vadd.f32 %v2383, 1.0
  %v2485 = vadd.f32 %v2385, 1.0
  %v2486 = vadd.f32 %v2387, 1.0
  %v2487 = vadd.f32 %v2389, 1.0
  %v2488 = vadd.f32 %v2391, 1.0
  %v2489 = vadd.f32 %v2393, 1.0
  %v2490 = vadd.f32 %v2395, 1.0
  %v2491 = vadd.f32 %v2397, 1.0
  %v2492 = vadd.f32 %v2399, 1.0
  %v2493 = vadd.f32 %v2401, 1.0
  %v2494 = vadd.f32 %v2403, 1.0
  %v2495 = vadd.f32 %v2405, 1.0
  %v2496 = vadd.f32 %v2407, 1.0
  %v2497 = vadd.f32 %v2409, 1.0
  %v2498 = vadd.f32 %v2411, 1.0
  %v2499 = vadd.f32 %v2413, 1.0
  %v2500 = vadd.f32 %v2415, 1.0
  %v2501 = vadd.f32 %v2417, 1.0
  %v2502 = vadd.f32 %v2419, 1.0
  %v2503 = vadd.f32 %v2421, 1.0
  %v2504 = vadd.f32 %v2423, 1.0
  %v2505 = vadd.f32 %v2425, 1.0
  %v2506 = vadd.f32 %v2427, 1.0
  %v2507 = vadd.f32 %v2429, 1.0
  %v2508 = vadd.f32 %v2431, 1.0
  %v2509 = vadd.f32 %v2433, 1.0
  %v2510 = vadd.f32 %v2435, 1.0
  %v2511 = vadd.f32 %v2437, 1.0
  %v2512 = vadd.f32 %v2439, 1.0
  %v2513 = vadd.f32 %v2441, 1.0
  %v2514 = vadd.f32 %v2443, 1.0
  %v2515 = vadd.f32 %v2445, 1.0
  %v2516 = vadd.f32 %v2447, 1.0
  %v2517 = vadd.f32 %v2449, 1.0
  %v2518 = vadd.f32 %v2451, 1.0
  %v2519 = vadd.f32 %v2453, 1.0
  %v2520 = vadd.f32 %v2455, 1.0
  %v2521 = vadd.f32 %v2457, 1.0
  %v2522 = vrcp.pop %v2458
  %v2523 = vmul.f32 1.0, %v2522
  %v2524 = vrcp.pop %v2459
  %v2525 = vmul.f32 1.0, %v2524
  %v2526 = vrcp.pop %v2460
  %v2527 = vmul.f32 1.0, %v2526
  %v2528 = vrcp.pop %v2461
  %v2529 = vmul.f32 1.0, %v2528
  %v2530 = vrcp.pop %v2462
  %v2531 = vmul.f32 1.0, %v2530
  %v2532 = vrcp.pop %v2463
  %v2533 = vmul.f32 1.0, %v2532
  %v2534 = vrcp.pop %v2464
  %v2535 = vmul.f32 1.0, %v2534
  %v2536 = vrcp.pop %v2465
  %v2537 = vmul.f32 1.0, %v2536
  %v2538 = vrcp.pop %v2466
  %v2539 = vmul.f32 1.0, %v2538
  %v2540 = vrcp.pop %v2467
  %v2541 = vmul.f32 1.0, %v2540
  %v2542 = vrcp.pop %v2468
  %v2543 = vmul.f32 1.0, %v2542
  %v2544 = vrcp.pop %v2469
  %v2545 = vmul.f32 1.0, %v2544
  %v2546 = vrcp.pop %v2470
  %v2547 = vmul.f32 1.0, %v2546
  %v2548 = vrcp.pop %v2471
  %v2549 = vmul.f32 1.0, %v2548
  %v2550 = vrcp.pop %v2472
  %v2551 = vmul.f32 1.0, %v2550
  %v2552 = vrcp.pop %v2473
  %v2553 = vmul.f32 1.0, %v2552
  %v2554 = vrcp.pop %v2474
  %v2555 = vmul.f32 1.0, %v2554
  %v2556 = vrcp.pop %v2475
  %v2557 = vmul.f32 1.0, %v2556
  %v2558 = vrcp.pop %v2476
  %v2559 = vmul.f32 1.0, %v2558
  %v2560 = vrcp.pop %v2477
  %v2561 = vmul.f32 1.0, %v2560
  %v2562 = vrcp.pop %v2478
  %v2563 = vmul.f32 1.0, %v2562
  %v2564 = vrcp.pop %v2479
  %v2565 = vmul.f32 1.0, %v2564
  %v2566 = vrcp.pop %v2480
  %v2567 = vmul.f32 1.0, %v2566
  %v2568 = vrcp.pop %v2481
  %v2569 = vmul.f32 1.0, %v2568
  %v2570 = vrcp.pop %v2482
  %v2571 = vmul.f32 1.0, %v2570
  %v2572 = vrcp.pop %v2483
  %v2573 = vmul.f32 1.0, %v2572
  %v2574 = vrcp.pop %v2484
  %v2575 = vmul.f32 1.0, %v2574
  %v2576 = vrcp.pop %v2485
  %v2577 = vmul.f32 1.0, %v2576
  %v2578 = vrcp.pop %v2486
  %v2579 = vmul.f32 1.0, %v2578
  %v2580 = vrcp.pop %v2487
  %v2581 = vmul.f32 1.0, %v2580
  %v2582 = vrcp.pop %v2488
  %v2583 = vmul.f32 1.0, %v2582
  %v2584 = vrcp.pop %v2489
  %v2585 = vmul.f32 1.0, %v2584
  %v2586 = vrcp.pop %v2490
  %v2587 = vmul.f32 1.0, %v2586
  %v2588 = vrcp.pop %v2491
  %v2589 = vmul.f32 1.0, %v2588
  %v2590 = vrcp.pop %v2492
  %v2591 = vmul.f32 1.0, %v2590
  %v2592 = vrcp.pop %v2493
  %v2593 = vmul.f32 1.0, %v2592
  %v2594 = vrcp.pop %v2494
  %v2595 = vmul.f32 1.0, %v2594
  %v2596 = vrcp.pop %v2495
  %v2597 = vmul.f32 1.0, %v2596
  %v2598 = vrcp.pop %v2496
  %v2599 = vmul.f32 1.0, %v2598
  %v2600 = vrcp.pop %v2497
  %v2601 = vmul.f32 1.0, %v2600
  %v2602 = vrcp.pop %v2498
  %v2603 = vmul.f32 1.0, %v2602
  %v2604 = vrcp.pop %v2499
  %v2605 = vmul.f32 1.0, %v2604
  %v2606 = vrcp.pop %v2500
  %v2607 = vmul.f32 1.0, %v2606
  %v2608 = vrcp.pop %v2501
  %v2609 = vmul.f32 1.0, %v2608
  %v2610 = vrcp.pop %v2502
  %v2611 = vmul.f32 1.0, %v2610
  %v2612 = vrcp.pop %v2503
  %v2613 = vmul.f32 1.0, %v2612
  %v2614 = vrcp.pop %v2504
  %v2615 = vmul.f32 1.0, %v2614
  %v2616 = vrcp.pop %v2505
  %v2617 = vmul.f32 1.0, %v2616
  %v2618 = vrcp.pop %v2506
  %v2619 = vmul.f32 1.0, %v2618
  %v2620 = vrcp.pop %v2507
  %v2621 = vmul.f32 1.0, %v2620
  %v2622 = vrcp.pop %v2508
  %v2623 = vmul.f32 1.0, %v2622
  %v2624 = vrcp.pop %v2509
  %v2625 = vmul.f32 1.0, %v2624
  %v2626 = vrcp.pop %v2510
  %v2627 = vmul.f32 1.0, %v2626
  %v2628 = vrcp.pop %v2511
  %v2629 = vmul.f32 1.0, %v2628
  %v2630 = vrcp.pop %v2512
  %v2631 = vmul.f32 1.0, %v2630
  %v2632 = vrcp.pop %v2513
  %v2633 = vmul.f32 1.0, %v2632
  %v2634 = vrcp.pop %v2514
  %v2635 = vmul.f32 1.0, %v2634
  %v2636 = vrcp.pop %v2515
  %v2637 = vmul.f32 1.0, %v2636
  %v2638 = vrcp.pop %v2516
  %v2639 = vmul.f32 1.0, %v2638
  %v2640 = vrcp.pop %v2517
  %v2641 = vmul.f32 1.0, %v2640
  %v2642 = vrcp.pop %v2518
  %v2643 = vmul.f32 1.0, %v2642
  %v2644 = vrcp.pop %v2519
  %v2645 = vmul.f32 1.0, %v2644
  %v2646 = vrcp.pop %v2520
  %v2647 = vmul.f32 1.0, %v2646
  %v2648 = vrcp.pop %v2521
  %v2649 = vmul.f32 1.0, %v2648
  %2650 = vst [vmem:[%s3] sm:$0xff] %v2523
  %2651 = vst [vmem:[%s3 + $0x8] sm:$0xff] %v2525
  %2652 = vst [vmem:[%s3 + $0x10] sm:$0xff] %v2527
  %2653 = vst [vmem:[%s3 + $0x18] sm:$0xff] %v2529
  %2654 = vst [vmem:[%s3 + $0x20] sm:$0xff] %v2531
  %2655 = vst [vmem:[%s3 + $0x28] sm:$0xff] %v2533
  %2656 = vst [vmem:[%s3 + $0x30] sm:$0xff] %v2535
  %2657 = vst [vmem:[%s3 + $0x38] sm:$0xff] %v2537
  %2658 = vst [vmem:[%s3 + $0x40] sm:$0xff] %v2539
  %2659 = vst [vmem:[%s3 + $0x48] sm:$0xff] %v2541
  %2660 = vst [vmem:[%s3 + $0x50] sm:$0xff] %v2543
  %2661 = vst [vmem:[%s3 + $0x58] sm:$0xff] %v2545
  %2662 = vst [vmem:[%s3 + $0x60] sm:$0xff] %v2547
  %2663 = vst [vmem:[%s3 + $0x68] sm:$0xff] %v2549
  %2664 = vst [vmem:[%s3 + $0x70] sm:$0xff] %v2551
  %2665 = vst [vmem:[%s3 + $0x78] sm:$0xff] %v2553
  %2666 = vst [vmem:[%s3 + $0x80] sm:$0xff] %v2555
  %2667 = vst [vmem:[%s3 + $0x88] sm:$0xff] %v2557
  %2668 = vst [vmem:[%s3 + $0x90] sm:$0xff] %v2559
  %2669 = vst [vmem:[%s3 + $0x98] sm:$0xff] %v2561
  %2670 = vst [vmem:[%s3 + $0xa0] sm:$0xff] %v2563
  %2671 = vst [vmem:[%s3 + $0xa8] sm:$0xff] %v2565
  %2672 = vst [vmem:[%s3 + $0xb0] sm:$0xff] %v2567
  %2673 = vst [vmem:[%s3 + $0xb8] sm:$0xff] %v2569
  %2674 = vst [vmem:[%s3 + $0xc0] sm:$0xff] %v2571
  %2675 = vst [vmem:[%s3 + $0xc8] sm:$0xff] %v2573
  %2676 = vst [vmem:[%s3 + $0xd0] sm:$0xff] %v2575
  %2677 = vst [vmem:[%s3 + $0xd8] sm:$0xff] %v2577
  %2678 = vst [vmem:[%s3 + $0xe0] sm:$0xff] %v2579
  %2679 = vst [vmem:[%s3 + $0xe8] sm:$0xff] %v2581
  %2680 = vst [vmem:[%s3 + $0xf0] sm:$0xff] %v2583
  %2681 = vst [vmem:[%s3 + $0xf8] sm:$0xff] %v2585
  %2682 = vst [vmem:[%s3 + $0x100] sm:$0xff] %v2587
  %2683 = vst [vmem:[%s3 + $0x108] sm:$0xff] %v2589
  %2684 = vst [vmem:[%s3 + $0x110] sm:$0xff] %v2591
  %2685 = vst [vmem:[%s3 + $0x118] sm:$0xff] %v2593
  %2686 = vst [vmem:[%s3 + $0x120] sm:$0xff] %v2595
  %2687 = vst [vmem:[%s3 + $0x128] sm:$0xff] %v2597
  %2688 = vst [vmem:[%s3 + $0x130] sm:$0xff] %v2599
  %2689 = vst [vmem:[%s3 + $0x138] sm:$0xff] %v2601
  %2690 = vst [vmem:[%s3 + $0x140] sm:$0xff] %v2603
  %2691 = vst [vmem:[%s3 + $0x148] sm:$0xff] %v2605
  %2692 = vst [vmem:[%s3 + $0x150] sm:$0xff] %v2607
  %2693 = vst [vmem:[%s3 + $0x158] sm:$0xff] %v2609
  %2694 = vst [vmem:[%s3 + $0x160] sm:$0xff] %v2611
  %2695 = vst [vmem:[%s3 + $0x168] sm:$0xff] %v2613
  %2696 = vst [vmem:[%s3 + $0x170] sm:$0xff] %v2615
  %2697 = vst [vmem:[%s3 + $0x178] sm:$0xff] %v2617
  %2698 = vst [vmem:[%s3 + $0x180] sm:$0xff] %v2619
  %2699 = vst [vmem:[%s3 + $0x188] sm:$0xff] %v2621
  %2700 = vst [vmem:[%s3 + $0x190] sm:$0xff] %v2623
  %2701 = vst [vmem:[%s3 + $0x198] sm:$0xff] %v2625
  %2702 = vst [vmem:[%s3 + $0x1a0] sm:$0xff] %v2627
  %2703 = vst [vmem:[%s3 + $0x1a8] sm:$0xff] %v2629
  %2704 = vst [vmem:[%s3 + $0x1b0] sm:$0xff] %v2631
  %2705 = vst [vmem:[%s3 + $0x1b8] sm:$0xff] %v2633
  %2706 = vst [vmem:[%s3 + $0x1c0] sm:$0xff] %v2635
  %2707 = vst [vmem:[%s3 + $0x1c8] sm:$0xff] %v2637
  %2708 = vst [vmem:[%s3 + $0x1d0] sm:$0xff] %v2639
  %2709 = vst [vmem:[%s3 + $0x1d8] sm:$0xff] %v2641
  %2710 = vst [vmem:[%s3 + $0x1e0] sm:$0xff] %v2643
  %2711 = vst [vmem:[%s3 + $0x1e8] sm:$0xff] %v2645
  %2712 = vst [vmem:[%s3 + $0x1f0] sm:$0xff] %v2647
  %2713 = vst [vmem:[%s3 + $0x1f8] sm:$0xff] %v2649
  // Predicated region
  $region14: #{video_frame_transformer.7} parent=0 // pred_check
    _
  $region15: #{video_frame_transformer.7} parent=0 // pred_check_branch
    %2715 = sbr.rel (0) target = $region17
  $region16: #{video_frame_transformer.7} parent=0 // pred_region
    _
  $region17: #{video_frame_transformer.7} parent=0 // pred_fallthru
    _
  // Predicated region
  $region18: #{video_frame_transformer.7} parent=0 // pred_check
    _
  $region19: #{video_frame_transformer.7} parent=0 // pred_check_branch
    %2717 = sbr.rel (0) target = $region21
  $region20: #{video_frame_transformer.7} parent=0 // pred_region
    _
  $region21: #{video_frame_transformer.7} parent=0 // pred_fallthru
    _

</llo_original>
